<compile_context>
chip_gen: v5e
topology: v5e:2x2
jax: 0.10.0
libtpu: 0.0.40
codegen_flags: <defaults>
</compile_context>

<pallas_src>
import functools

import jax
import jax.numpy as jnp
import numpy as np
from jax import lax
from jax.experimental import pallas as pl
from jax.experimental.pallas import tpu as pltpu


def head_kernel(x_ref, mask_ref, w1_ref, b1_ref, w2_ref, b2_ref, yoh_ref,
                probs_ref, loss_ref, *, num_labels):
    # x_ref:    [B, 3072] bf16   CLS slice of cat(last-4 hidden states)
    # mask_ref: [B, 1]    f32    mask column for the CLS token
    # w1_ref:   [3072, 512] bf16 pre_classifier weight (unsplit)
    # b1_ref:   [1, 512]  f32
    # w2_ref:   [512, Lp] bf16   classifier weight, lane-padded to Lp (>=128)
    # b2_ref:   [1, Lp]   f32    classifier bias, lane-padded with zeros
    # yoh_ref:  [B, Lp]   f32    one-hot labels, lane-padded with zeros
    # probs_ref:[B, Lp]   f32    Softmax(dim=0) output (lane-dense)
    # loss_ref: [1, 1]    f32    CrossEntropy(probs, Y)
    B = x_ref.shape[0]
    Lp = w2_ref.shape[1]

    # torch.mul(outputs, bert_mask)[:, 0, :] == CLS slab * mask[:, 0]
    cls = (x_ref[...] * mask_ref[...]).astype(jnp.bfloat16)        # [B, 3072]

    # pre_classifier: single fused [B,3072] @ [3072,512], bf16 MXU, f32 acc
    acc = jnp.dot(cls, w1_ref[...], preferred_element_type=jnp.float32)
    pre = jnp.maximum(acc + b1_ref[...], 0.0)                      # ReLU (f32)
    # dropout(0.1): eval-mode identity

    # classifier: [B,512] @ [512,Lp], bf16 MXU, f32 acc (+ f32 bias)
    logits = jnp.dot(pre.astype(jnp.bfloat16), w2_ref[...],
                     preferred_element_type=jnp.float32) + b2_ref[...]  # [B, Lp]

    # nn.Softmax(dim=0) -- softmax over the BATCH axis, per label column.
    m0 = jnp.max(logits, axis=0, keepdims=True)
    e0 = jnp.exp(logits - m0)
    inv = pl.reciprocal(jnp.sum(e0, axis=0, keepdims=True), approx=True)
    probs = e0 * inv                                               # [B, Lp]
    probs_ref[...] = probs                                         # lane-dense store

    # criterion = CrossEntropyLoss applied to `probs` (as the module does):
    # log_softmax over the REAL classes (lanes < num_labels), then mean NLL.
    valid = lax.broadcasted_iota(jnp.int32, (B, Lp), 1) < num_labels
    neg_big = jnp.float32(-1e30)
    cmax = jnp.max(jnp.where(valid, probs, neg_big), axis=1, keepdims=True)
    esum = jnp.sum(jnp.where(valid, jnp.exp(probs - cmax), 0.0),
                   axis=1, keepdims=True)
    lse = jnp.log(esum) + cmax
    logsm = probs - lse                                            # [B, Lp]
    nll = -jnp.sum(jnp.where(valid, yoh_ref[...] * logsm, 0.0),
                   axis=1, keepdims=True)                          # [B, 1]
    loss_ref[...] = jnp.sum(nll, axis=0, keepdims=True) * (1.0 / B)


def bert_sentence_features_head(h, mask, w1, b1, w2, b2, y_onehot):
    """h: [4,B,S,H] last-4 BERT hidden states (order -1,-2,-3,-4), mask: [B,S],
       w1: [3072,512], b1: [1,512], w2: [512,L], b2: [1,L], y_onehot: [B,L]
       -> (loss, probs[B,L])."""
    nh, B, S, H = h.shape
    K = nh * H
    D1 = w1.shape[1]
    L = w2.shape[1]
    Lp = max(128, ((L + 127) // 128) * 128)   # lane-dense classifier width

    # --- free XLA glue (outside the kernel) -------------------------------
    # Only the CLS token is used downstream: slice it (and its mask column)
    # before the pallas_call so the kernel never DMAs the [4,B,S,H] tensor.
    cls = jnp.transpose(h[:, :, 0, :], (1, 0, 2)).reshape(B, K)    # [B, 3072]
    x = cls.astype(jnp.bfloat16)
    mask_cls = mask[:, 0:1].astype(jnp.float32)                    # [B, 1]

    w1b = w1.astype(jnp.bfloat16)                                  # [3072, 512]
    b1f = b1.astype(jnp.float32)                                   # [1, 512]
    w2p = jnp.zeros((D1, Lp), jnp.bfloat16).at[:, :L].set(w2.astype(jnp.bfloat16))
    b2p = jnp.zeros((1, Lp), jnp.float32).at[:, :L].set(b2.astype(jnp.float32))
    yohp = jnp.zeros((B, Lp), jnp.float32).at[:, :L].set(y_onehot.astype(jnp.float32))

    vmem = pl.BlockSpec(memory_space=pltpu.MemorySpace.VMEM)
    probs_p, loss = pl.pallas_call(
        functools.partial(head_kernel, num_labels=L),
        out_shape=(jax.ShapeDtypeStruct((B, Lp), jnp.float32),
                   jax.ShapeDtypeStruct((1, 1), jnp.float32)),
        in_specs=[vmem] * 7,
        out_specs=(vmem, vmem),
    )(x, mask_cls, w1b, b1f, w2p, b2p, yohp)
    return loss[0, 0], probs_p[:, :L]


def reference(h, mask, w1, b1, w2, b2, y_onehot):
    """Plain-JAX f32 reference mirroring the PyTorch forward."""
    cat = jnp.concatenate([h[0], h[1], h[2], h[3]], axis=-1)       # [B,S,3072]
    cat = cat * mask[:, :, None]
    cls = cat[:, 0, :]
    pre = jax.nn.relu(cls @ w1 + b1[0])
    logits = pre @ w2 + b2[0]
    probs = jax.nn.softmax(logits, axis=0)                         # Softmax(dim=0)
    logsm = jax.nn.log_softmax(probs, axis=1)                      # CE on probs
    loss = -jnp.mean(jnp.sum(y_onehot * logsm, axis=1))
    return loss, probs


if __name__ == "__main__":
    B, S, H, NH, D1, L = 2, 8, 768, 4, 512, 8          # 4*H = 3072, as in __init__
    key = jax.random.PRNGKey(0)
    ks = jax.random.split(key, 8)

    # Synthetic stand-ins for the last four BERT hidden states (order -1..-4).
    h = jax.random.normal(ks[0], (NH, B, S, H), dtype=jnp.float32) * 0.1
    mask = jnp.ones((B, S), dtype=jnp.float32).at[1, 5:].set(0.0)

    # Deterministic parameter init (shapes from the module's __init__).
    w1 = jax.random.normal(ks[1], (NH * H, D1), dtype=jnp.float32) / np.sqrt(NH * H)
    b1 = jax.random.normal(ks[2], (1, D1), dtype=jnp.float32) * 0.01
    w2 = jax.random.normal(ks[3], (D1, L), dtype=jnp.float32) / np.sqrt(D1)
    b2 = jax.random.normal(ks[4], (1, L), dtype=jnp.float32) * 0.01

    y = jax.random.randint(ks[5], (B,), 0, L)
    y_onehot = jax.nn.one_hot(y, L, dtype=jnp.float32)

    loss, probs = bert_sentence_features_head(h, mask, w1, b1, w2, b2, y_onehot)
    loss = jax.block_until_ready(loss)
    probs = jax.block_until_ready(probs)

    ref_loss, ref_probs = reference(h, mask, w1, b1, w2, b2, y_onehot)
    # Tolerances account for bf16 MXU inputs (f32 accumulation) vs f32 reference.
    np.testing.assert_allclose(np.asarray(probs), np.asarray(ref_probs),
                               rtol=2e-2, atol=5e-3)
    np.testing.assert_allclose(float(loss), float(ref_loss),
                               rtol=2e-2, atol=5e-3)
    print("KERNEL_OK")
</pallas_src>

<mosaic_0001>
module attributes {stable_mosaic.version = 11 : i64} {
  func.func @head_kernel(%arg0: memref<2x3072xbf16, #tpu.memory_space<vmem>>, %arg1: memref<2x1xf32, #tpu.memory_space<vmem>>, %arg2: memref<3072x512xbf16, #tpu.memory_space<vmem>>, %arg3: memref<1x512xf32, #tpu.memory_space<vmem>>, %arg4: memref<512x128xbf16, #tpu.memory_space<vmem>>, %arg5: memref<1x128xf32, #tpu.memory_space<vmem>>, %arg6: memref<2x128xf32, #tpu.memory_space<vmem>>, %arg7: memref<2x128xf32, #tpu.memory_space<vmem>>, %arg8: memref<1x1xf32, #tpu.memory_space<vmem>>) attributes {dimension_semantics = [], scalar_prefetch = 0 : i64, scratch_operands = 0 : i64, tpu.core_type = #tpu.core_type<tc>} {
    %c0 = arith.constant 0 : index
    %c0_0 = arith.constant 0 : index
    %0 = vector.load %arg0[%c0, %c0_0] : memref<2x3072xbf16, #tpu.memory_space<vmem>>, vector<2x3072xbf16>
    %c0_1 = arith.constant 0 : index
    %c0_2 = arith.constant 0 : index
    %1 = vector.load %arg1[%c0_1, %c0_2] : memref<2x1xf32, #tpu.memory_space<vmem>>, vector<2x1xf32>
    %2 = arith.extf %0 : vector<2x3072xbf16> to vector<2x3072xf32>
    %3 = vector.broadcast %1 : vector<2x1xf32> to vector<2x3072xf32>
    %4 = arith.mulf %2, %3 : vector<2x3072xf32>
    %5 = arith.truncf %4 : vector<2x3072xf32> to vector<2x3072xbf16>
    %c0_3 = arith.constant 0 : index
    %c0_4 = arith.constant 0 : index
    %6 = vector.load %arg2[%c0_3, %c0_4] : memref<3072x512xbf16, #tpu.memory_space<vmem>>, vector<3072x512xbf16>
    %cst = arith.constant dense<0.000000e+00> : vector<2x512xf32>
    %7 = tpu.matmul %5, %6, %cst {dimension_numbers = #tpu.dot_dimension_numbers<[1], [0], [0], [1], [0, 0, 1, 1], [], []>} : vector<2x3072xbf16>, vector<3072x512xbf16>, vector<2x512xf32> -> vector<2x512xf32>
    %c0_5 = arith.constant 0 : index
    %c0_6 = arith.constant 0 : index
    %8 = vector.load %arg3[%c0_5, %c0_6] : memref<1x512xf32, #tpu.memory_space<vmem>>, vector<1x512xf32>
    %9 = vector.broadcast %8 : vector<1x512xf32> to vector<2x512xf32>
    %10 = arith.addf %7, %9 : vector<2x512xf32>
    %cst_7 = arith.constant 0.000000e+00 : f32
    %11 = vector.broadcast %cst_7 : f32 to vector<2x512xf32>
    %12 = arith.maximumf %10, %11 : vector<2x512xf32>
    %13 = arith.truncf %12 : vector<2x512xf32> to vector<2x512xbf16>
    %c0_8 = arith.constant 0 : index
    %c0_9 = arith.constant 0 : index
    %14 = vector.load %arg4[%c0_8, %c0_9] : memref<512x128xbf16, #tpu.memory_space<vmem>>, vector<512x128xbf16>
    %cst_10 = arith.constant dense<0.000000e+00> : vector<2x128xf32>
    %15 = tpu.matmul %13, %14, %cst_10 {dimension_numbers = #tpu.dot_dimension_numbers<[1], [0], [0], [1], [0, 0, 1, 1], [], []>} : vector<2x512xbf16>, vector<512x128xbf16>, vector<2x128xf32> -> vector<2x128xf32>
    %c0_11 = arith.constant 0 : index
    %c0_12 = arith.constant 0 : index
    %16 = vector.load %arg5[%c0_11, %c0_12] : memref<1x128xf32, #tpu.memory_space<vmem>>, vector<1x128xf32>
    %17 = vector.broadcast %16 : vector<1x128xf32> to vector<2x128xf32>
    %18 = arith.addf %15, %17 : vector<2x128xf32>
    %cst_13 = arith.constant dense<0xFF800000> : vector<128xf32>
    %19 = vector.multi_reduction <maximumf>, %18, %cst_13 [0] : vector<2x128xf32> to vector<128xf32>
    %20 = vector.shape_cast %19 : vector<128xf32> to vector<1x128xf32>
    %21 = vector.broadcast %20 : vector<1x128xf32> to vector<2x128xf32>
    %22 = arith.subf %18, %21 : vector<2x128xf32>
    %23 = math.exp %22 : vector<2x128xf32>
    %cst_14 = arith.constant dense<0.000000e+00> : vector<128xf32>
    %24 = vector.multi_reduction <add>, %23, %cst_14 [0] : vector<2x128xf32> to vector<128xf32>
    %25 = vector.shape_cast %24 : vector<128xf32> to vector<1x128xf32>
    %26 = tpu.reciprocal %25 {approx = true} : vector<1x128xf32> -> vector<1x128xf32>
    %27 = vector.broadcast %26 : vector<1x128xf32> to vector<2x128xf32>
    %28 = arith.mulf %23, %27 : vector<2x128xf32>
    %c0_15 = arith.constant 0 : index
    %c0_16 = arith.constant 0 : index
    %29 = vector.load %arg7[%c0_15, %c0_16] : memref<2x128xf32, #tpu.memory_space<vmem>>, vector<2x128xf32>
    tpu.vector_store %arg7[%c0_15, %c0_16], %28 {strides = array<i32>} : memref<2x128xf32, #tpu.memory_space<vmem>>, vector<2x128xf32>,
    %30 = tpu.iota {dimensions = array<i32: 1>} : vector<2x128xi32>
    %c8_i32 = arith.constant 8 : i32
    %31 = vector.broadcast %c8_i32 : i32 to vector<2x128xi32>
    %32 = arith.cmpi slt, %30, %31 : vector<2x128xi32>
    %cst_17 = arith.constant -1.000000e+30 : f32
    %33 = vector.broadcast %cst_17 : f32 to vector<2x128xf32>
    %34 = arith.select %32, %28, %33 : vector<2x128xi1>, vector<2x128xf32>
    %cst_18 = arith.constant dense<0xFF800000> : vector<2xf32>
    %35 = vector.multi_reduction <maximumf>, %34, %cst_18 [1] : vector<2x128xf32> to vector<2xf32>
    %36 = vector.shape_cast %35 : vector<2xf32> to vector<2x1xf32>
    %37 = vector.broadcast %36 : vector<2x1xf32> to vector<2x128xf32>
    %38 = arith.subf %28, %37 : vector<2x128xf32>
    %39 = math.exp %38 : vector<2x128xf32>
    %cst_19 = arith.constant 0.000000e+00 : f32
    %40 = vector.broadcast %cst_19 : f32 to vector<2x128xf32>
    %41 = arith.select %32, %39, %40 : vector<2x128xi1>, vector<2x128xf32>
    %cst_20 = arith.constant dense<0.000000e+00> : vector<2xf32>
    %42 = vector.multi_reduction <add>, %41, %cst_20 [1] : vector<2x128xf32> to vector<2xf32>
    %43 = vector.shape_cast %42 : vector<2xf32> to vector<2x1xf32>
    %44 = math.log %43 : vector<2x1xf32>
    %45 = arith.addf %44, %36 : vector<2x1xf32>
    %46 = vector.broadcast %45 : vector<2x1xf32> to vector<2x128xf32>
    %47 = arith.subf %28, %46 : vector<2x128xf32>
    %c0_21 = arith.constant 0 : index
    %c0_22 = arith.constant 0 : index
    %48 = vector.load %arg6[%c0_21, %c0_22] : memref<2x128xf32, #tpu.memory_space<vmem>>, vector<2x128xf32>
    %49 = arith.mulf %48, %47 : vector<2x128xf32>
    %cst_23 = arith.constant 0.000000e+00 : f32
    %50 = vector.broadcast %cst_23 : f32 to vector<2x128xf32>
    %51 = arith.select %32, %49, %50 : vector<2x128xi1>, vector<2x128xf32>
    %cst_24 = arith.constant dense<0.000000e+00> : vector<2xf32>
    %52 = vector.multi_reduction <add>, %51, %cst_24 [1] : vector<2x128xf32> to vector<2xf32>
    %53 = vector.shape_cast %52 : vector<2xf32> to vector<2x1xf32>
    %cst_25 = arith.constant 0.000000e+00 : f32
    %54 = vector.broadcast %cst_25 : f32 to vector<2x1xf32>
    %55 = arith.subf %54, %53 : vector<2x1xf32>
    %cst_26 = arith.constant dense<0.000000e+00> : vector<1xf32>
    %56 = vector.multi_reduction <add>, %55, %cst_26 [0] : vector<2x1xf32> to vector<1xf32>
    %57 = vector.shape_cast %56 : vector<1xf32> to vector<1x1xf32>
    %cst_27 = arith.constant 5.000000e-01 : f32
    %58 = vector.broadcast %cst_27 : f32 to vector<1x1xf32>
    %59 = arith.mulf %57, %58 : vector<1x1xf32>
    %c0_28 = arith.constant 0 : index
    %c0_29 = arith.constant 0 : index
    %60 = vector.load %arg8[%c0_28, %c0_29] : memref<1x1xf32, #tpu.memory_space<vmem>>, vector<1x1xf32>
    tpu.vector_store %arg8[%c0_28, %c0_29], %59 {strides = array<i32>} : memref<1x1xf32, #tpu.memory_space<vmem>>, vector<1x1xf32>,
    return
  }
}

</mosaic_0001>

<llo_original>
// kernel: tpu_custom_call.1
$region0: #{tpu_custom_call.1}
  #allocation0 [shape = 'u32[]', space=smem, size = 0x4, offset = 0x4, fixed_abs, tag = 'smem constant byte address 0x4 - core index']
  #allocation1 [shape = 'u32[72,128]{1,0:T(1,128)}', space=vmem, size = 0x9000, scoped, tag = 'internal scratch']
  %s0 = inlined_call_operand.hbm [shape: bf16[2,3072], index: 0, kind: input, shape index: {}]
  %s1 = inlined_call_operand.vmem [shape: f32[2,1], index: 1, kind: input, shape index: {}]
  %s2 = inlined_call_operand.hbm [shape: bf16[3072,512], index: 2, kind: input, shape index: {}]
  %s3 = inlined_call_operand.hbm [shape: f32[1,512], index: 3, kind: input, shape index: {}]
  %s4 = inlined_call_operand.hbm [shape: bf16[512,128], index: 4, kind: input, shape index: {}]
  %s5 = inlined_call_operand.hbm [shape: f32[1,128], index: 5, kind: input, shape index: {}]
  %s6 = inlined_call_operand.hbm [shape: f32[2,128], index: 6, kind: input, shape index: {}]
  %s7 = inlined_call_operand.hbm [shape: f32[2,128], index: 7, kind: output, shape index: {0}]
  %s8 = inlined_call_operand.hbm [shape: f32[1,1], index: 8, kind: output, shape index: {1}]
  %9 = xla_tuple %s7, %s8
  %s10 = sld [smem:[#allocation0]]
  $region70: #{tpu_custom_call.1} parent=0
    _
  %s12 = ssub.s32 1, %s10
  %s13 = scalar_select 0, %s12, %s10
  $region1: #{tpu_custom_call.1} parent=0
    #allocation2 [shape = 'u8[12288]{0}', space=vmem, size = 0x3000, scoped, tag = 'input window, operand 0, single buffered']
    #allocation3 [shape = 's32[1]{0}', space=sflag, size = 0x4, scoped, tag = 'scoped memory for tpu_custom_call.1']
    #allocation4 [shape = 's32[1]{0}', space=sflag, size = 0x4, scoped, tag = 'scoped memory for tpu_custom_call.1']
    #allocation5 [shape = 'u8[3145728]{0}', space=vmem, size = 0x300000, scoped, tag = 'input window, operand 2, single buffered']
    #allocation6 [shape = 's32[1]{0}', space=sflag, size = 0x4, scoped, tag = 'scoped memory for tpu_custom_call.1']
    #allocation7 [shape = 'u8[2048]{0}', space=vmem, size = 0x800, scoped, tag = 'input window, operand 3, single buffered']
    #allocation8 [shape = 'u8[131072]{0}', space=vmem, size = 0x20000, scoped, tag = 'input window, operand 4, single buffered']
    #allocation9 [shape = 's32[1]{0}', space=sflag, size = 0x4, scoped, tag = 'scoped memory for tpu_custom_call.1']
    #allocation10 [shape = 'u8[512]{0}', space=vmem, size = 0x400, scoped, tag = 'input window, operand 5, single buffered']
    #allocation11 [shape = 'u8[1024]{0}', space=vmem, size = 0x400, scoped, tag = 'input window, operand 6, single buffered']
    #allocation12 [shape = 's32[1]{0}', space=sflag, size = 0x4, scoped, tag = 'scoped memory for tpu_custom_call.1']
    #allocation13 [shape = 'u8[1024]{0}', space=vmem, size = 0x400, scoped, tag = 'output window, operand 0, single buffered']
    #allocation14 [shape = 'u8[512]{0}', space=vmem, size = 0x400, scoped, tag = 'output window, operand 1, single buffered']
    #allocation15 [shape = 's32[1]{0}', space=sflag, size = 0x4, scoped, tag = 'scoped memory for tpu_custom_call.1']
    %14 = vsyncpa [#allocation3], 0
    %15 = vsyncpa [#allocation6], 0
    %16 = vsyncpa [#allocation9], 0
    %17 = vsyncpa [#allocation12], 0
    %18 = vsyncpa [#allocation4], 0
    %19 = vsyncpa [#allocation15], 0
    // Predicated region
    $region2: #{tpu_custom_call.1} parent=1 // pred_check
      _
    $region3: #{tpu_custom_call.1} parent=1 // pred_check_branch
      %21 = sbr.rel (0) target = $region5
    $region4: #{tpu_custom_call.1} parent=1 // pred_region
      %23 = vsyncadd [#allocation3], 0
      %s25 = sshll.u32 %s0, 4
      %s26 = int_to_ptr.hbm [resolvable:$true] %s25
      %s27 = sshll.u32 [#allocation2], 4
      %s28 = int_to_ptr.vmem [resolvable:$true] %s27
      %30 = dma.hbm_to_vmem [thread:$0]  %s26, 384, %s28, [#allocation3]
    $region5: #{tpu_custom_call.1} parent=1 // pred_fallthru
      _
    // Predicated region
    $region6: #{tpu_custom_call.1} parent=1 // pred_check
      _
    $region7: #{tpu_custom_call.1} parent=1 // pred_check_branch
      %32 = sbr.rel (0) target = $region9
    $region8: #{tpu_custom_call.1} parent=1 // pred_region
      _
    $region9: #{tpu_custom_call.1} parent=1 // pred_fallthru
      _
    // Predicated region
    $region10: #{tpu_custom_call.1} parent=1 // pred_check
      _
    $region11: #{tpu_custom_call.1} parent=1 // pred_check_branch
      %34 = sbr.rel (0) target = $region13
    $region12: #{tpu_custom_call.1} parent=1 // pred_region
      %36 = vsyncadd [#allocation6], 0
      %s37 = sshll.u32 %s2, 4
      %s38 = int_to_ptr.hbm [resolvable:$true] %s37
      %s39 = sshll.u32 [#allocation5], 4
      %s40 = int_to_ptr.vmem [resolvable:$true] %s39
      %45 = dma.hbm_to_vmem [thread:$0]  %s38, 98304, %s40, [#allocation6], 256, 256, 16
    $region13: #{tpu_custom_call.1} parent=1 // pred_fallthru
      _
    // Predicated region
    $region14: #{tpu_custom_call.1} parent=1 // pred_check
      _
    $region15: #{tpu_custom_call.1} parent=1 // pred_check_branch
      %47 = sbr.rel (0) target = $region17
    $region16: #{tpu_custom_call.1} parent=1 // pred_region
      %49 = vsyncadd [#allocation6], 0
      %s51 = sshll.u32 %s3, 4
      %s52 = int_to_ptr.hbm [resolvable:$true] %s51
      %s53 = sshll.u32 [#allocation7], 4
      %s54 = int_to_ptr.vmem [resolvable:$true] %s53
      %56 = dma.hbm_to_vmem [thread:$0]  %s52, 64, %s54, [#allocation6]
    $region17: #{tpu_custom_call.1} parent=1 // pred_fallthru
      _
    // Predicated region
    $region18: #{tpu_custom_call.1} parent=1 // pred_check
      _
    $region19: #{tpu_custom_call.1} parent=1 // pred_check_branch
      %58 = sbr.rel (0) target = $region21
    $region20: #{tpu_custom_call.1} parent=1 // pred_region
      %60 = vsyncadd [#allocation9], 0
      %s61 = sshll.u32 %s4, 4
      %s62 = int_to_ptr.hbm [resolvable:$true] %s61
      %s63 = sshll.u32 [#allocation8], 4
      %s64 = int_to_ptr.vmem [resolvable:$true] %s63
      %69 = dma.hbm_to_vmem [thread:$0]  %s62, 4096, %s64, [#allocation9], 64, 64, 4
    $region21: #{tpu_custom_call.1} parent=1 // pred_fallthru
      _
    // Predicated region
    $region22: #{tpu_custom_call.1} parent=1 // pred_check
      _
    $region23: #{tpu_custom_call.1} parent=1 // pred_check_branch
      %71 = sbr.rel (0) target = $region25
    $region24: #{tpu_custom_call.1} parent=1 // pred_region
      %73 = vsyncadd [#allocation9], 0
      %s75 = sshll.u32 %s5, 4
      %s76 = int_to_ptr.hbm [resolvable:$true] %s75
      %s77 = sshll.u32 [#allocation10], 4
      %s78 = int_to_ptr.vmem [resolvable:$true] %s77
      %80 = dma.hbm_to_vmem [thread:$0]  %s76, 16, %s78, [#allocation9]
    $region25: #{tpu_custom_call.1} parent=1 // pred_fallthru
      _
    // Predicated region
    $region26: #{tpu_custom_call.1} parent=1 // pred_check
      _
    $region27: #{tpu_custom_call.1} parent=1 // pred_check_branch
      %82 = sbr.rel (0) target = $region29
    $region28: #{tpu_custom_call.1} parent=1 // pred_region
      %84 = vsyncadd [#allocation12], 0
      %s86 = sshll.u32 %s6, 4
      %s87 = int_to_ptr.hbm [resolvable:$true] %s86
      %s88 = sshll.u32 [#allocation11], 4
      %s89 = int_to_ptr.vmem [resolvable:$true] %s88
      %91 = dma.hbm_to_vmem [thread:$0]  %s87, 32, %s89, [#allocation12]
    $region29: #{tpu_custom_call.1} parent=1 // pred_fallthru
      _
    // Predicated region
    $region30: #{tpu_custom_call.1} parent=1 // pred_check
      _
    $region31: #{tpu_custom_call.1} parent=1 // pred_check_branch
      %93 = sbr.rel (0) target = $region33
    $region32: #{tpu_custom_call.1} parent=1 // pred_region
      %95 = dma.done [#allocation3], 384
    $region33: #{tpu_custom_call.1} parent=1 // pred_fallthru
      _
    // Predicated region
    $region34: #{tpu_custom_call.1} parent=1 // pred_check
      _
    $region35: #{tpu_custom_call.1} parent=1 // pred_check_branch
      %97 = sbr.rel (0) target = $region37
    $region36: #{tpu_custom_call.1} parent=1 // pred_region
      %99 = dma.done [#allocation6], 98304
    $region37: #{tpu_custom_call.1} parent=1 // pred_fallthru
      _
    // Predicated region
    $region38: #{tpu_custom_call.1} parent=1 // pred_check
      _
    $region39: #{tpu_custom_call.1} parent=1 // pred_check_branch
      %101 = sbr.rel (0) target = $region41
    $region40: #{tpu_custom_call.1} parent=1 // pred_region
      %103 = dma.done [#allocation6], 64
    $region41: #{tpu_custom_call.1} parent=1 // pred_fallthru
      _
    // Predicated region
    $region42: #{tpu_custom_call.1} parent=1 // pred_check
      _
    $region43: #{tpu_custom_call.1} parent=1 // pred_check_branch
      %105 = sbr.rel (0) target = $region45
    $region44: #{tpu_custom_call.1} parent=1 // pred_region
      %107 = dma.done [#allocation9], 4096
    $region45: #{tpu_custom_call.1} parent=1 // pred_fallthru
      _
    // Predicated region
    $region46: #{tpu_custom_call.1} parent=1 // pred_check
      _
    $region47: #{tpu_custom_call.1} parent=1 // pred_check_branch
      %109 = sbr.rel (0) target = $region49
    $region48: #{tpu_custom_call.1} parent=1 // pred_region
      %111 = dma.done [#allocation9], 16
    $region49: #{tpu_custom_call.1} parent=1 // pred_fallthru
      _
    // Predicated region
    $region50: #{tpu_custom_call.1} parent=1 // pred_check
      _
    $region51: #{tpu_custom_call.1} parent=1 // pred_check_branch
      %113 = sbr.rel (0) target = $region53
    $region52: #{tpu_custom_call.1} parent=1 // pred_region
      %115 = dma.done [#allocation12], 32
    $region53: #{tpu_custom_call.1} parent=1 // pred_fallthru
      _
    %v116 = vld [vmem:[#allocation2] sm:$0xff]
    %v117 = vld [vmem:[#allocation2 + $0x8] sm:$0xff]
    %v118 = vld [vmem:[#allocation2 + $0x10] sm:$0xff]
    %v119 = vld [vmem:[%s1] sm:$0x3]
    %v120 = vunpack.c.l.bf16 %v116
    %v121 = vunpack.c.h.bf16 %v116
    %v122 = vunpack.c.l.bf16 %v117
    %v123 = vunpack.c.h.bf16 %v117
    %v124 = vunpack.c.l.bf16 %v118
    %v125 = vunpack.c.h.bf16 %v118
    %127 = vset.pattern.permute.xlu0 0
    %128 = vperm.xlu0 %127, %v119
    %v129 = vpop.permute.xlu0 %128
    %v131 = vunpack.c.l.s4 269488144
    %v132 = vunpack.c.0.s8 %v131
    %v133 = vperm.slane %v129, %v132
    %v135 = vmul.f32 %v120, %v133
    %v136 = vmul.f32 %v121, %v133
    %v137 = vmul.f32 %v122, %v133
    %v138 = vmul.f32 %v123, %v133
    %v139 = vmul.f32 %v124, %v133
    %v140 = vmul.f32 %v125, %v133
    %147 = vst [vmem:[#allocation1] ss:$4 sm:$0xff] %v135
    %s148 = scalar_lea.vmem [#allocation1], 32
    %149 = vst [vmem:[%s148] ss:$4 sm:$0xff] %v136
    %v150 = vld.sshfl [vmem:[#allocation1] sm:$0xff pattern:$0x73625140]
    %v151 = vld.sshfl [vmem:[#allocation1 + $0x8] sm:$0xff pattern:$0x73625140]
    %v152 = vld.sshfl [vmem:[#allocation1 + $0x10] sm:$0xff pattern:$0x73625140]
    %v153 = vld.sshfl [vmem:[#allocation1 + $0x18] sm:$0xff pattern:$0x73625140]
    %v154 = vld.sshfl [vmem:[#allocation1 + $0x20] sm:$0xff pattern:$0x73625140]
    %v155 = vld.sshfl [vmem:[#allocation1 + $0x28] sm:$0xff pattern:$0x73625140]
    %v156 = vld.sshfl [vmem:[#allocation1 + $0x30] sm:$0xff pattern:$0x73625140]
    %v157 = vld.sshfl [vmem:[#allocation1 + $0x38] sm:$0xff pattern:$0x73625140]
    %158 = vst [vmem:[#allocation1] ss:$4 sm:$0xff] %v137
    %159 = vst [vmem:[%s148] ss:$4 sm:$0xff] %v138
    %v160 = vld.sshfl [vmem:[#allocation1] sm:$0xff pattern:$0x73625140]
    %v161 = vld.sshfl [vmem:[#allocation1 + $0x8] sm:$0xff pattern:$0x73625140]
    %v162 = vld.sshfl [vmem:[#allocation1 + $0x10] sm:$0xff pattern:$0x73625140]
    %v163 = vld.sshfl [vmem:[#allocation1 + $0x18] sm:$0xff pattern:$0x73625140]
    %v164 = vld.sshfl [vmem:[#allocation1 + $0x20] sm:$0xff pattern:$0x73625140]
    %v165 = vld.sshfl [vmem:[#allocation1 + $0x28] sm:$0xff pattern:$0x73625140]
    %v166 = vld.sshfl [vmem:[#allocation1 + $0x30] sm:$0xff pattern:$0x73625140]
    %v167 = vld.sshfl [vmem:[#allocation1 + $0x38] sm:$0xff pattern:$0x73625140]
    %168 = vst [vmem:[#allocation1] ss:$4 sm:$0xff] %v139
    %169 = vst [vmem:[%s148] ss:$4 sm:$0xff] %v140
    %v170 = vld.sshfl [vmem:[#allocation1] sm:$0xff pattern:$0x73625140]
    %v171 = vld.sshfl [vmem:[#allocation1 + $0x8] sm:$0xff pattern:$0x73625140]
    %v172 = vld.sshfl [vmem:[#allocation1 + $0x10] sm:$0xff pattern:$0x73625140]
    %v173 = vld.sshfl [vmem:[#allocation1 + $0x18] sm:$0xff pattern:$0x73625140]
    %v174 = vld.sshfl [vmem:[#allocation1 + $0x20] sm:$0xff pattern:$0x73625140]
    %v175 = vld.sshfl [vmem:[#allocation1 + $0x28] sm:$0xff pattern:$0x73625140]
    %v176 = vld.sshfl [vmem:[#allocation1 + $0x30] sm:$0xff pattern:$0x73625140]
    %v177 = vld.sshfl [vmem:[#allocation1 + $0x38] sm:$0xff pattern:$0x73625140]
    %v202 = vpack.c.bf16 %v150, %v150
    %v203 = vpack.c.bf16 %v151, %v151
    %v204 = vpack.c.bf16 %v152, %v152
    %v205 = vpack.c.bf16 %v153, %v153
    %v206 = vpack.c.bf16 %v154, %v154
    %v207 = vpack.c.bf16 %v155, %v155
    %v208 = vpack.c.bf16 %v156, %v156
    %v209 = vpack.c.bf16 %v157, %v157
    %v210 = vpack.c.bf16 %v160, %v160
    %v211 = vpack.c.bf16 %v161, %v161
    %v212 = vpack.c.bf16 %v162, %v162
    %v213 = vpack.c.bf16 %v163, %v163
    %v214 = vpack.c.bf16 %v164, %v164
    %v215 = vpack.c.bf16 %v165, %v165
    %v216 = vpack.c.bf16 %v166, %v166
    %v217 = vpack.c.bf16 %v167, %v167
    %v218 = vpack.c.bf16 %v170, %v170
    %v219 = vpack.c.bf16 %v171, %v171
    %v220 = vpack.c.bf16 %v172, %v172
    %v221 = vpack.c.bf16 %v173, %v173
    %v222 = vpack.c.bf16 %v174, %v174
    %v223 = vpack.c.bf16 %v175, %v175
    %v224 = vpack.c.bf16 %v176, %v176
    %v225 = vpack.c.bf16 %v177, %v177
    %v226 = vld [vmem:[#allocation5] sm:$0xff]
    %v227 = vld [vmem:[#allocation5 + $0x8] sm:$0xff]
    %v228 = vld [vmem:[#allocation5 + $0x10] sm:$0xff]
    %v229 = vld [vmem:[#allocation5 + $0x18] sm:$0xff]
    %v230 = vld [vmem:[#allocation5 + $0x20] sm:$0xff]
    %v231 = vld [vmem:[#allocation5 + $0x28] sm:$0xff]
    %v232 = vld [vmem:[#allocation5 + $0x30] sm:$0xff]
    %v233 = vld [vmem:[#allocation5 + $0x38] sm:$0xff]
    %v234 = vld [vmem:[#allocation5 + $0x40] sm:$0xff]
    %v235 = vld [vmem:[#allocation5 + $0x48] sm:$0xff]
    %v236 = vld [vmem:[#allocation5 + $0x50] sm:$0xff]
    %v237 = vld [vmem:[#allocation5 + $0x58] sm:$0xff]
    %v238 = vld [vmem:[#allocation5 + $0x60] sm:$0xff]
    %v239 = vld [vmem:[#allocation5 + $0x68] sm:$0xff]
    %v240 = vld [vmem:[#allocation5 + $0x70] sm:$0xff]
    %v241 = vld [vmem:[#allocation5 + $0x78] sm:$0xff]
    %v242 = vld [vmem:[#allocation5 + $0x80] sm:$0xff]
    %v243 = vld [vmem:[#allocation5 + $0x88] sm:$0xff]
    %v244 = vld [vmem:[#allocation5 + $0x90] sm:$0xff]
    %v245 = vld [vmem:[#allocation5 + $0x98] sm:$0xff]
    %v246 = vld [vmem:[#allocation5 + $0xa0] sm:$0xff]
    %v247 = vld [vmem:[#allocation5 + $0xa8] sm:$0xff]
    %v248 = vld [vmem:[#allocation5 + $0xb0] sm:$0xff]
    %v249 = vld [vmem:[#allocation5 + $0xb8] sm:$0xff]
    %v250 = vld [vmem:[#allocation5 + $0xc0] sm:$0xff]
    %v251 = vld [vmem:[#allocation5 + $0xc8] sm:$0xff]
    %v252 = vld [vmem:[#allocation5 + $0xd0] sm:$0xff]
    %v253 = vld [vmem:[#allocation5 + $0xd8] sm:$0xff]
    %v254 = vld [vmem:[#allocation5 + $0xe0] sm:$0xff]
    %v255 = vld [vmem:[#allocation5 + $0xe8] sm:$0xff]
    %v256 = vld [vmem:[#allocation5 + $0xf0] sm:$0xff]
    %v257 = vld [vmem:[#allocation5 + $0xf8] sm:$0xff]
    %v258 = vld [vmem:[#allocation5 + $0x100] sm:$0xff]
    %v259 = vld [vmem:[#allocation5 + $0x108] sm:$0xff]
    %v260 = vld [vmem:[#allocation5 + $0x110] sm:$0xff]
    %v261 = vld [vmem:[#allocation5 + $0x118] sm:$0xff]
    %v262 = vld [vmem:[#allocation5 + $0x120] sm:$0xff]
    %v263 = vld [vmem:[#allocation5 + $0x128] sm:$0xff]
    %v264 = vld [vmem:[#allocation5 + $0x130] sm:$0xff]
    %v265 = vld [vmem:[#allocation5 + $0x138] sm:$0xff]
    %v266 = vld [vmem:[#allocation5 + $0x140] sm:$0xff]
    %v267 = vld [vmem:[#allocation5 + $0x148] sm:$0xff]
    %v268 = vld [vmem:[#allocation5 + $0x150] sm:$0xff]
    %v269 = vld [vmem:[#allocation5 + $0x158] sm:$0xff]
    %v270 = vld [vmem:[#allocation5 + $0x160] sm:$0xff]
    %v271 = vld [vmem:[#allocation5 + $0x168] sm:$0xff]
    %v272 = vld [vmem:[#allocation5 + $0x170] sm:$0xff]
    %v273 = vld [vmem:[#allocation5 + $0x178] sm:$0xff]
    %v274 = vld [vmem:[#allocation5 + $0x180] sm:$0xff]
    %v275 = vld [vmem:[#allocation5 + $0x188] sm:$0xff]
    %v276 = vld [vmem:[#allocation5 + $0x190] sm:$0xff]
    %v277 = vld [vmem:[#allocation5 + $0x198] sm:$0xff]
    %v278 = vld [vmem:[#allocation5 + $0x1a0] sm:$0xff]
    %v279 = vld [vmem:[#allocation5 + $0x1a8] sm:$0xff]
    %v280 = vld [vmem:[#allocation5 + $0x1b0] sm:$0xff]
    %v281 = vld [vmem:[#allocation5 + $0x1b8] sm:$0xff]
    %v282 = vld [vmem:[#allocation5 + $0x1c0] sm:$0xff]
    %v283 = vld [vmem:[#allocation5 + $0x1c8] sm:$0xff]
    %v284 = vld [vmem:[#allocation5 + $0x1d0] sm:$0xff]
    %v285 = vld [vmem:[#allocation5 + $0x1d8] sm:$0xff]
    %v286 = vld [vmem:[#allocation5 + $0x1e0] sm:$0xff]
    %v287 = vld [vmem:[#allocation5 + $0x1e8] sm:$0xff]
    %v288 = vld [vmem:[#allocation5 + $0x1f0] sm:$0xff]
    %v289 = vld [vmem:[#allocation5 + $0x1f8] sm:$0xff]
    %v290 = vld [vmem:[#allocation5 + $0x200] sm:$0xff]
    %v291 = vld [vmem:[#allocation5 + $0x208] sm:$0xff]
    %v292 = vld [vmem:[#allocation5 + $0x210] sm:$0xff]
    %v293 = vld [vmem:[#allocation5 + $0x218] sm:$0xff]
    %v294 = vld [vmem:[#allocation5 + $0x220] sm:$0xff]
    %v295 = vld [vmem:[#allocation5 + $0x228] sm:$0xff]
    %v296 = vld [vmem:[#allocation5 + $0x230] sm:$0xff]
    %v297 = vld [vmem:[#allocation5 + $0x238] sm:$0xff]
    %v298 = vld [vmem:[#allocation5 + $0x240] sm:$0xff]
    %v299 = vld [vmem:[#allocation5 + $0x248] sm:$0xff]
    %v300 = vld [vmem:[#allocation5 + $0x250] sm:$0xff]
    %v301 = vld [vmem:[#allocation5 + $0x258] sm:$0xff]
    %v302 = vld [vmem:[#allocation5 + $0x260] sm:$0xff]
    %v303 = vld [vmem:[#allocation5 + $0x268] sm:$0xff]
    %v304 = vld [vmem:[#allocation5 + $0x270] sm:$0xff]
    %v305 = vld [vmem:[#allocation5 + $0x278] sm:$0xff]
    %v306 = vld [vmem:[#allocation5 + $0x280] sm:$0xff]
    %v307 = vld [vmem:[#allocation5 + $0x288] sm:$0xff]
    %v308 = vld [vmem:[#allocation5 + $0x290] sm:$0xff]
    %v309 = vld [vmem:[#allocation5 + $0x298] sm:$0xff]
    %v310 = vld [vmem:[#allocation5 + $0x2a0] sm:$0xff]
    %v311 = vld [vmem:[#allocation5 + $0x2a8] sm:$0xff]
    %v312 = vld [vmem:[#allocation5 + $0x2b0] sm:$0xff]
    %v313 = vld [vmem:[#allocation5 + $0x2b8] sm:$0xff]
    %v314 = vld [vmem:[#allocation5 + $0x2c0] sm:$0xff]
    %v315 = vld [vmem:[#allocation5 + $0x2c8] sm:$0xff]
    %v316 = vld [vmem:[#allocation5 + $0x2d0] sm:$0xff]
    %v317 = vld [vmem:[#allocation5 + $0x2d8] sm:$0xff]
    %v318 = vld [vmem:[#allocation5 + $0x2e0] sm:$0xff]
    %v319 = vld [vmem:[#allocation5 + $0x2e8] sm:$0xff]
    %v320 = vld [vmem:[#allocation5 + $0x2f0] sm:$0xff]
    %v321 = vld [vmem:[#allocation5 + $0x2f8] sm:$0xff]
    %v322 = vld [vmem:[#allocation5 + $0x300] sm:$0xff]
    %v323 = vld [vmem:[#allocation5 + $0x308] sm:$0xff]
    %v324 = vld [vmem:[#allocation5 + $0x310] sm:$0xff]
    %v325 = vld [vmem:[#allocation5 + $0x318] sm:$0xff]
    %v326 = vld [vmem:[#allocation5 + $0x320] sm:$0xff]
    %v327 = vld [vmem:[#allocation5 + $0x328] sm:$0xff]
    %v328 = vld [vmem:[#allocation5 + $0x330] sm:$0xff]
    %v329 = vld [vmem:[#allocation5 + $0x338] sm:$0xff]
    %v330 = vld [vmem:[#allocation5 + $0x340] sm:$0xff]
    %v331 = vld [vmem:[#allocation5 + $0x348] sm:$0xff]
    %v332 = vld [vmem:[#allocation5 + $0x350] sm:$0xff]
    %v333 = vld [vmem:[#allocation5 + $0x358] sm:$0xff]
    %v334 = vld [vmem:[#allocation5 + $0x360] sm:$0xff]
    %v335 = vld [vmem:[#allocation5 + $0x368] sm:$0xff]
    %v336 = vld [vmem:[#allocation5 + $0x370] sm:$0xff]
    %v337 = vld [vmem:[#allocation5 + $0x378] sm:$0xff]
    %v338 = vld [vmem:[#allocation5 + $0x380] sm:$0xff]
    %v339 = vld [vmem:[#allocation5 + $0x388] sm:$0xff]
    %v340 = vld [vmem:[#allocation5 + $0x390] sm:$0xff]
    %v341 = vld [vmem:[#allocation5 + $0x398] sm:$0xff]
    %v342 = vld [vmem:[#allocation5 + $0x3a0] sm:$0xff]
    %v343 = vld [vmem:[#allocation5 + $0x3a8] sm:$0xff]
    %v344 = vld [vmem:[#allocation5 + $0x3b0] sm:$0xff]
    %v345 = vld [vmem:[#allocation5 + $0x3b8] sm:$0xff]
    %v346 = vld [vmem:[#allocation5 + $0x3c0] sm:$0xff]
    %v347 = vld [vmem:[#allocation5 + $0x3c8] sm:$0xff]
    %v348 = vld [vmem:[#allocation5 + $0x3d0] sm:$0xff]
    %v349 = vld [vmem:[#allocation5 + $0x3d8] sm:$0xff]
    %v350 = vld [vmem:[#allocation5 + $0x3e0] sm:$0xff]
    %v351 = vld [vmem:[#allocation5 + $0x3e8] sm:$0xff]
    %v352 = vld [vmem:[#allocation5 + $0x3f0] sm:$0xff]
    %v353 = vld [vmem:[#allocation5 + $0x3f8] sm:$0xff]
    %v354 = vld [vmem:[#allocation5 + $0x400] sm:$0xff]
    %v355 = vld [vmem:[#allocation5 + $0x408] sm:$0xff]
    %v356 = vld [vmem:[#allocation5 + $0x410] sm:$0xff]
    %v357 = vld [vmem:[#allocation5 + $0x418] sm:$0xff]
    %v358 = vld [vmem:[#allocation5 + $0x420] sm:$0xff]
    %v359 = vld [vmem:[#allocation5 + $0x428] sm:$0xff]
    %v360 = vld [vmem:[#allocation5 + $0x430] sm:$0xff]
    %v361 = vld [vmem:[#allocation5 + $0x438] sm:$0xff]
    %v362 = vld [vmem:[#allocation5 + $0x440] sm:$0xff]
    %v363 = vld [vmem:[#allocation5 + $0x448] sm:$0xff]
    %v364 = vld [vmem:[#allocation5 + $0x450] sm:$0xff]
    %v365 = vld [vmem:[#allocation5 + $0x458] sm:$0xff]
    %v366 = vld [vmem:[#allocation5 + $0x460] sm:$0xff]
    %v367 = vld [vmem:[#allocation5 + $0x468] sm:$0xff]
    %v368 = vld [vmem:[#allocation5 + $0x470] sm:$0xff]
    %v369 = vld [vmem:[#allocation5 + $0x478] sm:$0xff]
    %v370 = vld [vmem:[#allocation5 + $0x480] sm:$0xff]
    %v371 = vld [vmem:[#allocation5 + $0x488] sm:$0xff]
    %v372 = vld [vmem:[#allocation5 + $0x490] sm:$0xff]
    %v373 = vld [vmem:[#allocation5 + $0x498] sm:$0xff]
    %v374 = vld [vmem:[#allocation5 + $0x4a0] sm:$0xff]
    %v375 = vld [vmem:[#allocation5 + $0x4a8] sm:$0xff]
    %v376 = vld [vmem:[#allocation5 + $0x4b0] sm:$0xff]
    %v377 = vld [vmem:[#allocation5 + $0x4b8] sm:$0xff]
    %v378 = vld [vmem:[#allocation5 + $0x4c0] sm:$0xff]
    %v379 = vld [vmem:[#allocation5 + $0x4c8] sm:$0xff]
    %v380 = vld [vmem:[#allocation5 + $0x4d0] sm:$0xff]
    %v381 = vld [vmem:[#allocation5 + $0x4d8] sm:$0xff]
    %v382 = vld [vmem:[#allocation5 + $0x4e0] sm:$0xff]
    %v383 = vld [vmem:[#allocation5 + $0x4e8] sm:$0xff]
    %v384 = vld [vmem:[#allocation5 + $0x4f0] sm:$0xff]
    %v385 = vld [vmem:[#allocation5 + $0x4f8] sm:$0xff]
    %v386 = vld [vmem:[#allocation5 + $0x500] sm:$0xff]
    %v387 = vld [vmem:[#allocation5 + $0x508] sm:$0xff]
    %v388 = vld [vmem:[#allocation5 + $0x510] sm:$0xff]
    %v389 = vld [vmem:[#allocation5 + $0x518] sm:$0xff]
    %v390 = vld [vmem:[#allocation5 + $0x520] sm:$0xff]
    %v391 = vld [vmem:[#allocation5 + $0x528] sm:$0xff]
    %v392 = vld [vmem:[#allocation5 + $0x530] sm:$0xff]
    %v393 = vld [vmem:[#allocation5 + $0x538] sm:$0xff]
    %v394 = vld [vmem:[#allocation5 + $0x540] sm:$0xff]
    %v395 = vld [vmem:[#allocation5 + $0x548] sm:$0xff]
    %v396 = vld [vmem:[#allocation5 + $0x550] sm:$0xff]
    %v397 = vld [vmem:[#allocation5 + $0x558] sm:$0xff]
    %v398 = vld [vmem:[#allocation5 + $0x560] sm:$0xff]
    %v399 = vld [vmem:[#allocation5 + $0x568] sm:$0xff]
    %v400 = vld [vmem:[#allocation5 + $0x570] sm:$0xff]
    %v401 = vld [vmem:[#allocation5 + $0x578] sm:$0xff]
    %v402 = vld [vmem:[#allocation5 + $0x580] sm:$0xff]
    %v403 = vld [vmem:[#allocation5 + $0x588] sm:$0xff]
    %v404 = vld [vmem:[#allocation5 + $0x590] sm:$0xff]
    %v405 = vld [vmem:[#allocation5 + $0x598] sm:$0xff]
    %v406 = vld [vmem:[#allocation5 + $0x5a0] sm:$0xff]
    %v407 = vld [vmem:[#allocation5 + $0x5a8] sm:$0xff]
    %v408 = vld [vmem:[#allocation5 + $0x5b0] sm:$0xff]
    %v409 = vld [vmem:[#allocation5 + $0x5b8] sm:$0xff]
    %v410 = vld [vmem:[#allocation5 + $0x5c0] sm:$0xff]
    %v411 = vld [vmem:[#allocation5 + $0x5c8] sm:$0xff]
    %v412 = vld [vmem:[#allocation5 + $0x5d0] sm:$0xff]
    %v413 = vld [vmem:[#allocation5 + $0x5d8] sm:$0xff]
    %v414 = vld [vmem:[#allocation5 + $0x5e0] sm:$0xff]
    %v415 = vld [vmem:[#allocation5 + $0x5e8] sm:$0xff]
    %v416 = vld [vmem:[#allocation5 + $0x5f0] sm:$0xff]
    %v417 = vld [vmem:[#allocation5 + $0x5f8] sm:$0xff]
    %v418 = vld [vmem:[#allocation5 + $0x600] sm:$0xff]
    %v419 = vld [vmem:[#allocation5 + $0x608] sm:$0xff]
    %v420 = vld [vmem:[#allocation5 + $0x610] sm:$0xff]
    %v421 = vld [vmem:[#allocation5 + $0x618] sm:$0xff]
    %v422 = vld [vmem:[#allocation5 + $0x620] sm:$0xff]
    %v423 = vld [vmem:[#allocation5 + $0x628] sm:$0xff]
    %v424 = vld [vmem:[#allocation5 + $0x630] sm:$0xff]
    %v425 = vld [vmem:[#allocation5 + $0x638] sm:$0xff]
    %v426 = vld [vmem:[#allocation5 + $0x640] sm:$0xff]
    %v427 = vld [vmem:[#allocation5 + $0x648] sm:$0xff]
    %v428 = vld [vmem:[#allocation5 + $0x650] sm:$0xff]
    %v429 = vld [vmem:[#allocation5 + $0x658] sm:$0xff]
    %v430 = vld [vmem:[#allocation5 + $0x660] sm:$0xff]
    %v431 = vld [vmem:[#allocation5 + $0x668] sm:$0xff]
    %v432 = vld [vmem:[#allocation5 + $0x670] sm:$0xff]
    %v433 = vld [vmem:[#allocation5 + $0x678] sm:$0xff]
    %v434 = vld [vmem:[#allocation5 + $0x680] sm:$0xff]
    %v435 = vld [vmem:[#allocation5 + $0x688] sm:$0xff]
    %v436 = vld [vmem:[#allocation5 + $0x690] sm:$0xff]
    %v437 = vld [vmem:[#allocation5 + $0x698] sm:$0xff]
    %v438 = vld [vmem:[#allocation5 + $0x6a0] sm:$0xff]
    %v439 = vld [vmem:[#allocation5 + $0x6a8] sm:$0xff]
    %v440 = vld [vmem:[#allocation5 + $0x6b0] sm:$0xff]
    %v441 = vld [vmem:[#allocation5 + $0x6b8] sm:$0xff]
    %v442 = vld [vmem:[#allocation5 + $0x6c0] sm:$0xff]
    %v443 = vld [vmem:[#allocation5 + $0x6c8] sm:$0xff]
    %v444 = vld [vmem:[#allocation5 + $0x6d0] sm:$0xff]
    %v445 = vld [vmem:[#allocation5 + $0x6d8] sm:$0xff]
    %v446 = vld [vmem:[#allocation5 + $0x6e0] sm:$0xff]
    %v447 = vld [vmem:[#allocation5 + $0x6e8] sm:$0xff]
    %v448 = vld [vmem:[#allocation5 + $0x6f0] sm:$0xff]
    %v449 = vld [vmem:[#allocation5 + $0x6f8] sm:$0xff]
    %v450 = vld [vmem:[#allocation5 + $0x700] sm:$0xff]
    %v451 = vld [vmem:[#allocation5 + $0x708] sm:$0xff]
    %v452 = vld [vmem:[#allocation5 + $0x710] sm:$0xff]
    %v453 = vld [vmem:[#allocation5 + $0x718] sm:$0xff]
    %v454 = vld [vmem:[#allocation5 + $0x720] sm:$0xff]
    %v455 = vld [vmem:[#allocation5 + $0x728] sm:$0xff]
    %v456 = vld [vmem:[#allocation5 + $0x730] sm:$0xff]
    %v457 = vld [vmem:[#allocation5 + $0x738] sm:$0xff]
    %v458 = vld [vmem:[#allocation5 + $0x740] sm:$0xff]
    %v459 = vld [vmem:[#allocation5 + $0x748] sm:$0xff]
    %v460 = vld [vmem:[#allocation5 + $0x750] sm:$0xff]
    %v461 = vld [vmem:[#allocation5 + $0x758] sm:$0xff]
    %v462 = vld [vmem:[#allocation5 + $0x760] sm:$0xff]
    %v463 = vld [vmem:[#allocation5 + $0x768] sm:$0xff]
    %v464 = vld [vmem:[#allocation5 + $0x770] sm:$0xff]
    %v465 = vld [vmem:[#allocation5 + $0x778] sm:$0xff]
    %v466 = vld [vmem:[#allocation5 + $0x780] sm:$0xff]
    %v467 = vld [vmem:[#allocation5 + $0x788] sm:$0xff]
    %v468 = vld [vmem:[#allocation5 + $0x790] sm:$0xff]
    %v469 = vld [vmem:[#allocation5 + $0x798] sm:$0xff]
    %v470 = vld [vmem:[#allocation5 + $0x7a0] sm:$0xff]
    %v471 = vld [vmem:[#allocation5 + $0x7a8] sm:$0xff]
    %v472 = vld [vmem:[#allocation5 + $0x7b0] sm:$0xff]
    %v473 = vld [vmem:[#allocation5 + $0x7b8] sm:$0xff]
    %v474 = vld [vmem:[#allocation5 + $0x7c0] sm:$0xff]
    %v475 = vld [vmem:[#allocation5 + $0x7c8] sm:$0xff]
    %v476 = vld [vmem:[#allocation5 + $0x7d0] sm:$0xff]
    %v477 = vld [vmem:[#allocation5 + $0x7d8] sm:$0xff]
    %v478 = vld [vmem:[#allocation5 + $0x7e0] sm:$0xff]
    %v479 = vld [vmem:[#allocation5 + $0x7e8] sm:$0xff]
    %v480 = vld [vmem:[#allocation5 + $0x7f0] sm:$0xff]
    %v481 = vld [vmem:[#allocation5 + $0x7f8] sm:$0xff]
    %v482 = vld [vmem:[#allocation5 + $0x800] sm:$0xff]
    %v483 = vld [vmem:[#allocation5 + $0x808] sm:$0xff]
    %v484 = vld [vmem:[#allocation5 + $0x810] sm:$0xff]
    %v485 = vld [vmem:[#allocation5 + $0x818] sm:$0xff]
    %v486 = vld [vmem:[#allocation5 + $0x820] sm:$0xff]
    %v487 = vld [vmem:[#allocation5 + $0x828] sm:$0xff]
    %v488 = vld [vmem:[#allocation5 + $0x830] sm:$0xff]
    %v489 = vld [vmem:[#allocation5 + $0x838] sm:$0xff]
    %v490 = vld [vmem:[#allocation5 + $0x840] sm:$0xff]
    %v491 = vld [vmem:[#allocation5 + $0x848] sm:$0xff]
    %v492 = vld [vmem:[#allocation5 + $0x850] sm:$0xff]
    %v493 = vld [vmem:[#allocation5 + $0x858] sm:$0xff]
    %v494 = vld [vmem:[#allocation5 + $0x860] sm:$0xff]
    %v495 = vld [vmem:[#allocation5 + $0x868] sm:$0xff]
    %v496 = vld [vmem:[#allocation5 + $0x870] sm:$0xff]
    %v497 = vld [vmem:[#allocation5 + $0x878] sm:$0xff]
    %v498 = vld [vmem:[#allocation5 + $0x880] sm:$0xff]
    %v499 = vld [vmem:[#allocation5 + $0x888] sm:$0xff]
    %v500 = vld [vmem:[#allocation5 + $0x890] sm:$0xff]
    %v501 = vld [vmem:[#allocation5 + $0x898] sm:$0xff]
    %v502 = vld [vmem:[#allocation5 + $0x8a0] sm:$0xff]
    %v503 = vld [vmem:[#allocation5 + $0x8a8] sm:$0xff]
    %v504 = vld [vmem:[#allocation5 + $0x8b0] sm:$0xff]
    %v505 = vld [vmem:[#allocation5 + $0x8b8] sm:$0xff]
    %v506 = vld [vmem:[#allocation5 + $0x8c0] sm:$0xff]
    %v507 = vld [vmem:[#allocation5 + $0x8c8] sm:$0xff]
    %v508 = vld [vmem:[#allocation5 + $0x8d0] sm:$0xff]
    %v509 = vld [vmem:[#allocation5 + $0x8d8] sm:$0xff]
    %v510 = vld [vmem:[#allocation5 + $0x8e0] sm:$0xff]
    %v511 = vld [vmem:[#allocation5 + $0x8e8] sm:$0xff]
    %v512 = vld [vmem:[#allocation5 + $0x8f0] sm:$0xff]
    %v513 = vld [vmem:[#allocation5 + $0x8f8] sm:$0xff]
    %v514 = vld [vmem:[#allocation5 + $0x900] sm:$0xff]
    %v515 = vld [vmem:[#allocation5 + $0x908] sm:$0xff]
    %v516 = vld [vmem:[#allocation5 + $0x910] sm:$0xff]
    %v517 = vld [vmem:[#allocation5 + $0x918] sm:$0xff]
    %v518 = vld [vmem:[#allocation5 + $0x920] sm:$0xff]
    %v519 = vld [vmem:[#allocation5 + $0x928] sm:$0xff]
    %v520 = vld [vmem:[#allocation5 + $0x930] sm:$0xff]
    %v521 = vld [vmem:[#allocation5 + $0x938] sm:$0xff]
    %v522 = vld [vmem:[#allocation5 + $0x940] sm:$0xff]
    %v523 = vld [vmem:[#allocation5 + $0x948] sm:$0xff]
    %v524 = vld [vmem:[#allocation5 + $0x950] sm:$0xff]
    %v525 = vld [vmem:[#allocation5 + $0x958] sm:$0xff]
    %v526 = vld [vmem:[#allocation5 + $0x960] sm:$0xff]
    %v527 = vld [vmem:[#allocation5 + $0x968] sm:$0xff]
    %v528 = vld [vmem:[#allocation5 + $0x970] sm:$0xff]
    %v529 = vld [vmem:[#allocation5 + $0x978] sm:$0xff]
    %v530 = vld [vmem:[#allocation5 + $0x980] sm:$0xff]
    %v531 = vld [vmem:[#allocation5 + $0x988] sm:$0xff]
    %v532 = vld [vmem:[#allocation5 + $0x990] sm:$0xff]
    %v533 = vld [vmem:[#allocation5 + $0x998] sm:$0xff]
    %v534 = vld [vmem:[#allocation5 + $0x9a0] sm:$0xff]
    %v535 = vld [vmem:[#allocation5 + $0x9a8] sm:$0xff]
    %v536 = vld [vmem:[#allocation5 + $0x9b0] sm:$0xff]
    %v537 = vld [vmem:[#allocation5 + $0x9b8] sm:$0xff]
    %v538 = vld [vmem:[#allocation5 + $0x9c0] sm:$0xff]
    %v539 = vld [vmem:[#allocation5 + $0x9c8] sm:$0xff]
    %v540 = vld [vmem:[#allocation5 + $0x9d0] sm:$0xff]
    %v541 = vld [vmem:[#allocation5 + $0x9d8] sm:$0xff]
    %v542 = vld [vmem:[#allocation5 + $0x9e0] sm:$0xff]
    %v543 = vld [vmem:[#allocation5 + $0x9e8] sm:$0xff]
    %v544 = vld [vmem:[#allocation5 + $0x9f0] sm:$0xff]
    %v545 = vld [vmem:[#allocation5 + $0x9f8] sm:$0xff]
    %v546 = vld [vmem:[#allocation5 + $0xa00] sm:$0xff]
    %v547 = vld [vmem:[#allocation5 + $0xa08] sm:$0xff]
    %v548 = vld [vmem:[#allocation5 + $0xa10] sm:$0xff]
    %v549 = vld [vmem:[#allocation5 + $0xa18] sm:$0xff]
    %v550 = vld [vmem:[#allocation5 + $0xa20] sm:$0xff]
    %v551 = vld [vmem:[#allocation5 + $0xa28] sm:$0xff]
    %v552 = vld [vmem:[#allocation5 + $0xa30] sm:$0xff]
    %v553 = vld [vmem:[#allocation5 + $0xa38] sm:$0xff]
    %v554 = vld [vmem:[#allocation5 + $0xa40] sm:$0xff]
    %v555 = vld [vmem:[#allocation5 + $0xa48] sm:$0xff]
    %v556 = vld [vmem:[#allocation5 + $0xa50] sm:$0xff]
    %v557 = vld [vmem:[#allocation5 + $0xa58] sm:$0xff]
    %v558 = vld [vmem:[#allocation5 + $0xa60] sm:$0xff]
    %v559 = vld [vmem:[#allocation5 + $0xa68] sm:$0xff]
    %v560 = vld [vmem:[#allocation5 + $0xa70] sm:$0xff]
    %v561 = vld [vmem:[#allocation5 + $0xa78] sm:$0xff]
    %v562 = vld [vmem:[#allocation5 + $0xa80] sm:$0xff]
    %v563 = vld [vmem:[#allocation5 + $0xa88] sm:$0xff]
    %v564 = vld [vmem:[#allocation5 + $0xa90] sm:$0xff]
    %v565 = vld [vmem:[#allocation5 + $0xa98] sm:$0xff]
    %v566 = vld [vmem:[#allocation5 + $0xaa0] sm:$0xff]
    %v567 = vld [vmem:[#allocation5 + $0xaa8] sm:$0xff]
    %v568 = vld [vmem:[#allocation5 + $0xab0] sm:$0xff]
    %v569 = vld [vmem:[#allocation5 + $0xab8] sm:$0xff]
    %v570 = vld [vmem:[#allocation5 + $0xac0] sm:$0xff]
    %v571 = vld [vmem:[#allocation5 + $0xac8] sm:$0xff]
    %v572 = vld [vmem:[#allocation5 + $0xad0] sm:$0xff]
    %v573 = vld [vmem:[#allocation5 + $0xad8] sm:$0xff]
    %v574 = vld [vmem:[#allocation5 + $0xae0] sm:$0xff]
    %v575 = vld [vmem:[#allocation5 + $0xae8] sm:$0xff]
    %v576 = vld [vmem:[#allocation5 + $0xaf0] sm:$0xff]
    %v577 = vld [vmem:[#allocation5 + $0xaf8] sm:$0xff]
    %v578 = vld [vmem:[#allocation5 + $0xb00] sm:$0xff]
    %v579 = vld [vmem:[#allocation5 + $0xb08] sm:$0xff]
    %v580 = vld [vmem:[#allocation5 + $0xb10] sm:$0xff]
    %v581 = vld [vmem:[#allocation5 + $0xb18] sm:$0xff]
    %v582 = vld [vmem:[#allocation5 + $0xb20] sm:$0xff]
    %v583 = vld [vmem:[#allocation5 + $0xb28] sm:$0xff]
    %v584 = vld [vmem:[#allocation5 + $0xb30] sm:$0xff]
    %v585 = vld [vmem:[#allocation5 + $0xb38] sm:$0xff]
    %v586 = vld [vmem:[#allocation5 + $0xb40] sm:$0xff]
    %v587 = vld [vmem:[#allocation5 + $0xb48] sm:$0xff]
    %v588 = vld [vmem:[#allocation5 + $0xb50] sm:$0xff]
    %v589 = vld [vmem:[#allocation5 + $0xb58] sm:$0xff]
    %v590 = vld [vmem:[#allocation5 + $0xb60] sm:$0xff]
    %v591 = vld [vmem:[#allocation5 + $0xb68] sm:$0xff]
    %v592 = vld [vmem:[#allocation5 + $0xb70] sm:$0xff]
    %v593 = vld [vmem:[#allocation5 + $0xb78] sm:$0xff]
    %v594 = vld [vmem:[#allocation5 + $0xb80] sm:$0xff]
    %v595 = vld [vmem:[#allocation5 + $0xb88] sm:$0xff]
    %v596 = vld [vmem:[#allocation5 + $0xb90] sm:$0xff]
    %v597 = vld [vmem:[#allocation5 + $0xb98] sm:$0xff]
    %v598 = vld [vmem:[#allocation5 + $0xba0] sm:$0xff]
    %v599 = vld [vmem:[#allocation5 + $0xba8] sm:$0xff]
    %v600 = vld [vmem:[#allocation5 + $0xbb0] sm:$0xff]
    %v601 = vld [vmem:[#allocation5 + $0xbb8] sm:$0xff]
    %v602 = vld [vmem:[#allocation5 + $0xbc0] sm:$0xff]
    %v603 = vld [vmem:[#allocation5 + $0xbc8] sm:$0xff]
    %v604 = vld [vmem:[#allocation5 + $0xbd0] sm:$0xff]
    %v605 = vld [vmem:[#allocation5 + $0xbd8] sm:$0xff]
    %v606 = vld [vmem:[#allocation5 + $0xbe0] sm:$0xff]
    %v607 = vld [vmem:[#allocation5 + $0xbe8] sm:$0xff]
    %v608 = vld [vmem:[#allocation5 + $0xbf0] sm:$0xff]
    %v609 = vld [vmem:[#allocation5 + $0xbf8] sm:$0xff]
    %v610 = vld [vmem:[#allocation5 + $0xc00] sm:$0xff]
    %v611 = vld [vmem:[#allocation5 + $0xc08] sm:$0xff]
    %v612 = vld [vmem:[#allocation5 + $0xc10] sm:$0xff]
    %v613 = vld [vmem:[#allocation5 + $0xc18] sm:$0xff]
    %v614 = vld [vmem:[#allocation5 + $0xc20] sm:$0xff]
    %v615 = vld [vmem:[#allocation5 + $0xc28] sm:$0xff]
    %v616 = vld [vmem:[#allocation5 + $0xc30] sm:$0xff]
    %v617 = vld [vmem:[#allocation5 + $0xc38] sm:$0xff]
    %v618 = vld [vmem:[#allocation5 + $0xc40] sm:$0xff]
    %v619 = vld [vmem:[#allocation5 + $0xc48] sm:$0xff]
    %v620 = vld [vmem:[#allocation5 + $0xc50] sm:$0xff]
    %v621 = vld [vmem:[#allocation5 + $0xc58] sm:$0xff]
    %v622 = vld [vmem:[#allocation5 + $0xc60] sm:$0xff]
    %v623 = vld [vmem:[#allocation5 + $0xc68] sm:$0xff]
    %v624 = vld [vmem:[#allocation5 + $0xc70] sm:$0xff]
    %v625 = vld [vmem:[#allocation5 + $0xc78] sm:$0xff]
    %v626 = vld [vmem:[#allocation5 + $0xc80] sm:$0xff]
    %v627 = vld [vmem:[#allocation5 + $0xc88] sm:$0xff]
    %v628 = vld [vmem:[#allocation5 + $0xc90] sm:$0xff]
    %v629 = vld [vmem:[#allocation5 + $0xc98] sm:$0xff]
    %v630 = vld [vmem:[#allocation5 + $0xca0] sm:$0xff]
    %v631 = vld [vmem:[#allocation5 + $0xca8] sm:$0xff]
    %v632 = vld [vmem:[#allocation5 + $0xcb0] sm:$0xff]
    %v633 = vld [vmem:[#allocation5 + $0xcb8] sm:$0xff]
    %v634 = vld [vmem:[#allocation5 + $0xcc0] sm:$0xff]
    %v635 = vld [vmem:[#allocation5 + $0xcc8] sm:$0xff]
    %v636 = vld [vmem:[#allocation5 + $0xcd0] sm:$0xff]
    %v637 = vld [vmem:[#allocation5 + $0xcd8] sm:$0xff]
    %v638 = vld [vmem:[#allocation5 + $0xce0] sm:$0xff]
    %v639 = vld [vmem:[#allocation5 + $0xce8] sm:$0xff]
    %v640 = vld [vmem:[#allocation5 + $0xcf0] sm:$0xff]
    %v641 = vld [vmem:[#allocation5 + $0xcf8] sm:$0xff]
    %v642 = vld [vmem:[#allocation5 + $0xd00] sm:$0xff]
    %v643 = vld [vmem:[#allocation5 + $0xd08] sm:$0xff]
    %v644 = vld [vmem:[#allocation5 + $0xd10] sm:$0xff]
    %v645 = vld [vmem:[#allocation5 + $0xd18] sm:$0xff]
    %v646 = vld [vmem:[#allocation5 + $0xd20] sm:$0xff]
    %v647 = vld [vmem:[#allocation5 + $0xd28] sm:$0xff]
    %v648 = vld [vmem:[#allocation5 + $0xd30] sm:$0xff]
    %v649 = vld [vmem:[#allocation5 + $0xd38] sm:$0xff]
    %v650 = vld [vmem:[#allocation5 + $0xd40] sm:$0xff]
    %v651 = vld [vmem:[#allocation5 + $0xd48] sm:$0xff]
    %v652 = vld [vmem:[#allocation5 + $0xd50] sm:$0xff]
    %v653 = vld [vmem:[#allocation5 + $0xd58] sm:$0xff]
    %v654 = vld [vmem:[#allocation5 + $0xd60] sm:$0xff]
    %v655 = vld [vmem:[#allocation5 + $0xd68] sm:$0xff]
    %v656 = vld [vmem:[#allocation5 + $0xd70] sm:$0xff]
    %v657 = vld [vmem:[#allocation5 + $0xd78] sm:$0xff]
    %v658 = vld [vmem:[#allocation5 + $0xd80] sm:$0xff]
    %v659 = vld [vmem:[#allocation5 + $0xd88] sm:$0xff]
    %v660 = vld [vmem:[#allocation5 + $0xd90] sm:$0xff]
    %v661 = vld [vmem:[#allocation5 + $0xd98] sm:$0xff]
    %v662 = vld [vmem:[#allocation5 + $0xda0] sm:$0xff]
    %v663 = vld [vmem:[#allocation5 + $0xda8] sm:$0xff]
    %v664 = vld [vmem:[#allocation5 + $0xdb0] sm:$0xff]
    %v665 = vld [vmem:[#allocation5 + $0xdb8] sm:$0xff]
    %v666 = vld [vmem:[#allocation5 + $0xdc0] sm:$0xff]
    %v667 = vld [vmem:[#allocation5 + $0xdc8] sm:$0xff]
    %v668 = vld [vmem:[#allocation5 + $0xdd0] sm:$0xff]
    %v669 = vld [vmem:[#allocation5 + $0xdd8] sm:$0xff]
    %v670 = vld [vmem:[#allocation5 + $0xde0] sm:$0xff]
    %v671 = vld [vmem:[#allocation5 + $0xde8] sm:$0xff]
    %v672 = vld [vmem:[#allocation5 + $0xdf0] sm:$0xff]
    %v673 = vld [vmem:[#allocation5 + $0xdf8] sm:$0xff]
    %v674 = vld [vmem:[#allocation5 + $0xe00] sm:$0xff]
    %v675 = vld [vmem:[#allocation5 + $0xe08] sm:$0xff]
    %v676 = vld [vmem:[#allocation5 + $0xe10] sm:$0xff]
    %v677 = vld [vmem:[#allocation5 + $0xe18] sm:$0xff]
    %v678 = vld [vmem:[#allocation5 + $0xe20] sm:$0xff]
    %v679 = vld [vmem:[#allocation5 + $0xe28] sm:$0xff]
    %v680 = vld [vmem:[#allocation5 + $0xe30] sm:$0xff]
    %v681 = vld [vmem:[#allocation5 + $0xe38] sm:$0xff]
    %v682 = vld [vmem:[#allocation5 + $0xe40] sm:$0xff]
    %v683 = vld [vmem:[#allocation5 + $0xe48] sm:$0xff]
    %v684 = vld [vmem:[#allocation5 + $0xe50] sm:$0xff]
    %v685 = vld [vmem:[#allocation5 + $0xe58] sm:$0xff]
    %v686 = vld [vmem:[#allocation5 + $0xe60] sm:$0xff]
    %v687 = vld [vmem:[#allocation5 + $0xe68] sm:$0xff]
    %v688 = vld [vmem:[#allocation5 + $0xe70] sm:$0xff]
    %v689 = vld [vmem:[#allocation5 + $0xe78] sm:$0xff]
    %v690 = vld [vmem:[#allocation5 + $0xe80] sm:$0xff]
    %v691 = vld [vmem:[#allocation5 + $0xe88] sm:$0xff]
    %v692 = vld [vmem:[#allocation5 + $0xe90] sm:$0xff]
    %v693 = vld [vmem:[#allocation5 + $0xe98] sm:$0xff]
    %v694 = vld [vmem:[#allocation5 + $0xea0] sm:$0xff]
    %v695 = vld [vmem:[#allocation5 + $0xea8] sm:$0xff]
    %v696 = vld [vmem:[#allocation5 + $0xeb0] sm:$0xff]
    %v697 = vld [vmem:[#allocation5 + $0xeb8] sm:$0xff]
    %v698 = vld [vmem:[#allocation5 + $0xec0] sm:$0xff]
    %v699 = vld [vmem:[#allocation5 + $0xec8] sm:$0xff]
    %v700 = vld [vmem:[#allocation5 + $0xed0] sm:$0xff]
    %v701 = vld [vmem:[#allocation5 + $0xed8] sm:$0xff]
    %v702 = vld [vmem:[#allocation5 + $0xee0] sm:$0xff]
    %v703 = vld [vmem:[#allocation5 + $0xee8] sm:$0xff]
    %v704 = vld [vmem:[#allocation5 + $0xef0] sm:$0xff]
    %v705 = vld [vmem:[#allocation5 + $0xef8] sm:$0xff]
    %v706 = vld [vmem:[#allocation5 + $0xf00] sm:$0xff]
    %v707 = vld [vmem:[#allocation5 + $0xf08] sm:$0xff]
    %v708 = vld [vmem:[#allocation5 + $0xf10] sm:$0xff]
    %v709 = vld [vmem:[#allocation5 + $0xf18] sm:$0xff]
    %v710 = vld [vmem:[#allocation5 + $0xf20] sm:$0xff]
    %v711 = vld [vmem:[#allocation5 + $0xf28] sm:$0xff]
    %v712 = vld [vmem:[#allocation5 + $0xf30] sm:$0xff]
    %v713 = vld [vmem:[#allocation5 + $0xf38] sm:$0xff]
    %v714 = vld [vmem:[#allocation5 + $0xf40] sm:$0xff]
    %v715 = vld [vmem:[#allocation5 + $0xf48] sm:$0xff]
    %v716 = vld [vmem:[#allocation5 + $0xf50] sm:$0xff]
    %v717 = vld [vmem:[#allocation5 + $0xf58] sm:$0xff]
    %v718 = vld [vmem:[#allocation5 + $0xf60] sm:$0xff]
    %v719 = vld [vmem:[#allocation5 + $0xf68] sm:$0xff]
    %v720 = vld [vmem:[#allocation5 + $0xf70] sm:$0xff]
    %v721 = vld [vmem:[#allocation5 + $0xf78] sm:$0xff]
    %v722 = vld [vmem:[#allocation5 + $0xf80] sm:$0xff]
    %v723 = vld [vmem:[#allocation5 + $0xf88] sm:$0xff]
    %v724 = vld [vmem:[#allocation5 + $0xf90] sm:$0xff]
    %v725 = vld [vmem:[#allocation5 + $0xf98] sm:$0xff]
    %v726 = vld [vmem:[#allocation5 + $0xfa0] sm:$0xff]
    %v727 = vld [vmem:[#allocation5 + $0xfa8] sm:$0xff]
    %v728 = vld [vmem:[#allocation5 + $0xfb0] sm:$0xff]
    %v729 = vld [vmem:[#allocation5 + $0xfb8] sm:$0xff]
    %v730 = vld [vmem:[#allocation5 + $0xfc0] sm:$0xff]
    %v731 = vld [vmem:[#allocation5 + $0xfc8] sm:$0xff]
    %v732 = vld [vmem:[#allocation5 + $0xfd0] sm:$0xff]
    %v733 = vld [vmem:[#allocation5 + $0xfd8] sm:$0xff]
    %v734 = vld [vmem:[#allocation5 + $0xfe0] sm:$0xff]
    %v735 = vld [vmem:[#allocation5 + $0xfe8] sm:$0xff]
    %v736 = vld [vmem:[#allocation5 + $0xff0] sm:$0xff]
    %v737 = vld [vmem:[#allocation5 + $0xff8] sm:$0xff]
    %v738 = vld [vmem:[#allocation5 + $0x1000] sm:$0xff]
    %v739 = vld [vmem:[#allocation5 + $0x1008] sm:$0xff]
    %v740 = vld [vmem:[#allocation5 + $0x1010] sm:$0xff]
    %v741 = vld [vmem:[#allocation5 + $0x1018] sm:$0xff]
    %v742 = vld [vmem:[#allocation5 + $0x1020] sm:$0xff]
    %v743 = vld [vmem:[#allocation5 + $0x1028] sm:$0xff]
    %v744 = vld [vmem:[#allocation5 + $0x1030] sm:$0xff]
    %v745 = vld [vmem:[#allocation5 + $0x1038] sm:$0xff]
    %v746 = vld [vmem:[#allocation5 + $0x1040] sm:$0xff]
    %v747 = vld [vmem:[#allocation5 + $0x1048] sm:$0xff]
    %v748 = vld [vmem:[#allocation5 + $0x1050] sm:$0xff]
    %v749 = vld [vmem:[#allocation5 + $0x1058] sm:$0xff]
    %v750 = vld [vmem:[#allocation5 + $0x1060] sm:$0xff]
    %v751 = vld [vmem:[#allocation5 + $0x1068] sm:$0xff]
    %v752 = vld [vmem:[#allocation5 + $0x1070] sm:$0xff]
    %v753 = vld [vmem:[#allocation5 + $0x1078] sm:$0xff]
    %v754 = vld [vmem:[#allocation5 + $0x1080] sm:$0xff]
    %v755 = vld [vmem:[#allocation5 + $0x1088] sm:$0xff]
    %v756 = vld [vmem:[#allocation5 + $0x1090] sm:$0xff]
    %v757 = vld [vmem:[#allocation5 + $0x1098] sm:$0xff]
    %v758 = vld [vmem:[#allocation5 + $0x10a0] sm:$0xff]
    %v759 = vld [vmem:[#allocation5 + $0x10a8] sm:$0xff]
    %v760 = vld [vmem:[#allocation5 + $0x10b0] sm:$0xff]
    %v761 = vld [vmem:[#allocation5 + $0x10b8] sm:$0xff]
    %v762 = vld [vmem:[#allocation5 + $0x10c0] sm:$0xff]
    %v763 = vld [vmem:[#allocation5 + $0x10c8] sm:$0xff]
    %v764 = vld [vmem:[#allocation5 + $0x10d0] sm:$0xff]
    %v765 = vld [vmem:[#allocation5 + $0x10d8] sm:$0xff]
    %v766 = vld [vmem:[#allocation5 + $0x10e0] sm:$0xff]
    %v767 = vld [vmem:[#allocation5 + $0x10e8] sm:$0xff]
    %v768 = vld [vmem:[#allocation5 + $0x10f0] sm:$0xff]
    %v769 = vld [vmem:[#allocation5 + $0x10f8] sm:$0xff]
    %v770 = vld [vmem:[#allocation5 + $0x1100] sm:$0xff]
    %v771 = vld [vmem:[#allocation5 + $0x1108] sm:$0xff]
    %v772 = vld [vmem:[#allocation5 + $0x1110] sm:$0xff]
    %v773 = vld [vmem:[#allocation5 + $0x1118] sm:$0xff]
    %v774 = vld [vmem:[#allocation5 + $0x1120] sm:$0xff]
    %v775 = vld [vmem:[#allocation5 + $0x1128] sm:$0xff]
    %v776 = vld [vmem:[#allocation5 + $0x1130] sm:$0xff]
    %v777 = vld [vmem:[#allocation5 + $0x1138] sm:$0xff]
    %v778 = vld [vmem:[#allocation5 + $0x1140] sm:$0xff]
    %v779 = vld [vmem:[#allocation5 + $0x1148] sm:$0xff]
    %v780 = vld [vmem:[#allocation5 + $0x1150] sm:$0xff]
    %v781 = vld [vmem:[#allocation5 + $0x1158] sm:$0xff]
    %v782 = vld [vmem:[#allocation5 + $0x1160] sm:$0xff]
    %v783 = vld [vmem:[#allocation5 + $0x1168] sm:$0xff]
    %v784 = vld [vmem:[#allocation5 + $0x1170] sm:$0xff]
    %v785 = vld [vmem:[#allocation5 + $0x1178] sm:$0xff]
    %v786 = vld [vmem:[#allocation5 + $0x1180] sm:$0xff]
    %v787 = vld [vmem:[#allocation5 + $0x1188] sm:$0xff]
    %v788 = vld [vmem:[#allocation5 + $0x1190] sm:$0xff]
    %v789 = vld [vmem:[#allocation5 + $0x1198] sm:$0xff]
    %v790 = vld [vmem:[#allocation5 + $0x11a0] sm:$0xff]
    %v791 = vld [vmem:[#allocation5 + $0x11a8] sm:$0xff]
    %v792 = vld [vmem:[#allocation5 + $0x11b0] sm:$0xff]
    %v793 = vld [vmem:[#allocation5 + $0x11b8] sm:$0xff]
    %v794 = vld [vmem:[#allocation5 + $0x11c0] sm:$0xff]
    %v795 = vld [vmem:[#allocation5 + $0x11c8] sm:$0xff]
    %v796 = vld [vmem:[#allocation5 + $0x11d0] sm:$0xff]
    %v797 = vld [vmem:[#allocation5 + $0x11d8] sm:$0xff]
    %v798 = vld [vmem:[#allocation5 + $0x11e0] sm:$0xff]
    %v799 = vld [vmem:[#allocation5 + $0x11e8] sm:$0xff]
    %v800 = vld [vmem:[#allocation5 + $0x11f0] sm:$0xff]
    %v801 = vld [vmem:[#allocation5 + $0x11f8] sm:$0xff]
    %v802 = vld [vmem:[#allocation5 + $0x1200] sm:$0xff]
    %v803 = vld [vmem:[#allocation5 + $0x1208] sm:$0xff]
    %v804 = vld [vmem:[#allocation5 + $0x1210] sm:$0xff]
    %v805 = vld [vmem:[#allocation5 + $0x1218] sm:$0xff]
    %v806 = vld [vmem:[#allocation5 + $0x1220] sm:$0xff]
    %v807 = vld [vmem:[#allocation5 + $0x1228] sm:$0xff]
    %v808 = vld [vmem:[#allocation5 + $0x1230] sm:$0xff]
    %v809 = vld [vmem:[#allocation5 + $0x1238] sm:$0xff]
    %v810 = vld [vmem:[#allocation5 + $0x1240] sm:$0xff]
    %v811 = vld [vmem:[#allocation5 + $0x1248] sm:$0xff]
    %v812 = vld [vmem:[#allocation5 + $0x1250] sm:$0xff]
    %v813 = vld [vmem:[#allocation5 + $0x1258] sm:$0xff]
    %v814 = vld [vmem:[#allocation5 + $0x1260] sm:$0xff]
    %v815 = vld [vmem:[#allocation5 + $0x1268] sm:$0xff]
    %v816 = vld [vmem:[#allocation5 + $0x1270] sm:$0xff]
    %v817 = vld [vmem:[#allocation5 + $0x1278] sm:$0xff]
    %v818 = vld [vmem:[#allocation5 + $0x1280] sm:$0xff]
    %v819 = vld [vmem:[#allocation5 + $0x1288] sm:$0xff]
    %v820 = vld [vmem:[#allocation5 + $0x1290] sm:$0xff]
    %v821 = vld [vmem:[#allocation5 + $0x1298] sm:$0xff]
    %v822 = vld [vmem:[#allocation5 + $0x12a0] sm:$0xff]
    %v823 = vld [vmem:[#allocation5 + $0x12a8] sm:$0xff]
    %v824 = vld [vmem:[#allocation5 + $0x12b0] sm:$0xff]
    %v825 = vld [vmem:[#allocation5 + $0x12b8] sm:$0xff]
    %v826 = vld [vmem:[#allocation5 + $0x12c0] sm:$0xff]
    %v827 = vld [vmem:[#allocation5 + $0x12c8] sm:$0xff]
    %v828 = vld [vmem:[#allocation5 + $0x12d0] sm:$0xff]
    %v829 = vld [vmem:[#allocation5 + $0x12d8] sm:$0xff]
    %v830 = vld [vmem:[#allocation5 + $0x12e0] sm:$0xff]
    %v831 = vld [vmem:[#allocation5 + $0x12e8] sm:$0xff]
    %v832 = vld [vmem:[#allocation5 + $0x12f0] sm:$0xff]
    %v833 = vld [vmem:[#allocation5 + $0x12f8] sm:$0xff]
    %v834 = vld [vmem:[#allocation5 + $0x1300] sm:$0xff]
    %v835 = vld [vmem:[#allocation5 + $0x1308] sm:$0xff]
    %v836 = vld [vmem:[#allocation5 + $0x1310] sm:$0xff]
    %v837 = vld [vmem:[#allocation5 + $0x1318] sm:$0xff]
    %v838 = vld [vmem:[#allocation5 + $0x1320] sm:$0xff]
    %v839 = vld [vmem:[#allocation5 + $0x1328] sm:$0xff]
    %v840 = vld [vmem:[#allocation5 + $0x1330] sm:$0xff]
    %v841 = vld [vmem:[#allocation5 + $0x1338] sm:$0xff]
    %v842 = vld [vmem:[#allocation5 + $0x1340] sm:$0xff]
    %v843 = vld [vmem:[#allocation5 + $0x1348] sm:$0xff]
    %v844 = vld [vmem:[#allocation5 + $0x1350] sm:$0xff]
    %v845 = vld [vmem:[#allocation5 + $0x1358] sm:$0xff]
    %v846 = vld [vmem:[#allocation5 + $0x1360] sm:$0xff]
    %v847 = vld [vmem:[#allocation5 + $0x1368] sm:$0xff]
    %v848 = vld [vmem:[#allocation5 + $0x1370] sm:$0xff]
    %v849 = vld [vmem:[#allocation5 + $0x1378] sm:$0xff]
    %v850 = vld [vmem:[#allocation5 + $0x1380] sm:$0xff]
    %v851 = vld [vmem:[#allocation5 + $0x1388] sm:$0xff]
    %v852 = vld [vmem:[#allocation5 + $0x1390] sm:$0xff]
    %v853 = vld [vmem:[#allocation5 + $0x1398] sm:$0xff]
    %v854 = vld [vmem:[#allocation5 + $0x13a0] sm:$0xff]
    %v855 = vld [vmem:[#allocation5 + $0x13a8] sm:$0xff]
    %v856 = vld [vmem:[#allocation5 + $0x13b0] sm:$0xff]
    %v857 = vld [vmem:[#allocation5 + $0x13b8] sm:$0xff]
    %v858 = vld [vmem:[#allocation5 + $0x13c0] sm:$0xff]
    %v859 = vld [vmem:[#allocation5 + $0x13c8] sm:$0xff]
    %v860 = vld [vmem:[#allocation5 + $0x13d0] sm:$0xff]
    %v861 = vld [vmem:[#allocation5 + $0x13d8] sm:$0xff]
    %v862 = vld [vmem:[#allocation5 + $0x13e0] sm:$0xff]
    %v863 = vld [vmem:[#allocation5 + $0x13e8] sm:$0xff]
    %v864 = vld [vmem:[#allocation5 + $0x13f0] sm:$0xff]
    %v865 = vld [vmem:[#allocation5 + $0x13f8] sm:$0xff]
    %v866 = vld [vmem:[#allocation5 + $0x1400] sm:$0xff]
    %v867 = vld [vmem:[#allocation5 + $0x1408] sm:$0xff]
    %v868 = vld [vmem:[#allocation5 + $0x1410] sm:$0xff]
    %v869 = vld [vmem:[#allocation5 + $0x1418] sm:$0xff]
    %v870 = vld [vmem:[#allocation5 + $0x1420] sm:$0xff]
    %v871 = vld [vmem:[#allocation5 + $0x1428] sm:$0xff]
    %v872 = vld [vmem:[#allocation5 + $0x1430] sm:$0xff]
    %v873 = vld [vmem:[#allocation5 + $0x1438] sm:$0xff]
    %v874 = vld [vmem:[#allocation5 + $0x1440] sm:$0xff]
    %v875 = vld [vmem:[#allocation5 + $0x1448] sm:$0xff]
    %v876 = vld [vmem:[#allocation5 + $0x1450] sm:$0xff]
    %v877 = vld [vmem:[#allocation5 + $0x1458] sm:$0xff]
    %v878 = vld [vmem:[#allocation5 + $0x1460] sm:$0xff]
    %v879 = vld [vmem:[#allocation5 + $0x1468] sm:$0xff]
    %v880 = vld [vmem:[#allocation5 + $0x1470] sm:$0xff]
    %v881 = vld [vmem:[#allocation5 + $0x1478] sm:$0xff]
    %v882 = vld [vmem:[#allocation5 + $0x1480] sm:$0xff]
    %v883 = vld [vmem:[#allocation5 + $0x1488] sm:$0xff]
    %v884 = vld [vmem:[#allocation5 + $0x1490] sm:$0xff]
    %v885 = vld [vmem:[#allocation5 + $0x1498] sm:$0xff]
    %v886 = vld [vmem:[#allocation5 + $0x14a0] sm:$0xff]
    %v887 = vld [vmem:[#allocation5 + $0x14a8] sm:$0xff]
    %v888 = vld [vmem:[#allocation5 + $0x14b0] sm:$0xff]
    %v889 = vld [vmem:[#allocation5 + $0x14b8] sm:$0xff]
    %v890 = vld [vmem:[#allocation5 + $0x14c0] sm:$0xff]
    %v891 = vld [vmem:[#allocation5 + $0x14c8] sm:$0xff]
    %v892 = vld [vmem:[#allocation5 + $0x14d0] sm:$0xff]
    %v893 = vld [vmem:[#allocation5 + $0x14d8] sm:$0xff]
    %v894 = vld [vmem:[#allocation5 + $0x14e0] sm:$0xff]
    %v895 = vld [vmem:[#allocation5 + $0x14e8] sm:$0xff]
    %v896 = vld [vmem:[#allocation5 + $0x14f0] sm:$0xff]
    %v897 = vld [vmem:[#allocation5 + $0x14f8] sm:$0xff]
    %v898 = vld [vmem:[#allocation5 + $0x1500] sm:$0xff]
    %v899 = vld [vmem:[#allocation5 + $0x1508] sm:$0xff]
    %v900 = vld [vmem:[#allocation5 + $0x1510] sm:$0xff]
    %v901 = vld [vmem:[#allocation5 + $0x1518] sm:$0xff]
    %v902 = vld [vmem:[#allocation5 + $0x1520] sm:$0xff]
    %v903 = vld [vmem:[#allocation5 + $0x1528] sm:$0xff]
    %v904 = vld [vmem:[#allocation5 + $0x1530] sm:$0xff]
    %v905 = vld [vmem:[#allocation5 + $0x1538] sm:$0xff]
    %v906 = vld [vmem:[#allocation5 + $0x1540] sm:$0xff]
    %v907 = vld [vmem:[#allocation5 + $0x1548] sm:$0xff]
    %v908 = vld [vmem:[#allocation5 + $0x1550] sm:$0xff]
    %v909 = vld [vmem:[#allocation5 + $0x1558] sm:$0xff]
    %v910 = vld [vmem:[#allocation5 + $0x1560] sm:$0xff]
    %v911 = vld [vmem:[#allocation5 + $0x1568] sm:$0xff]
    %v912 = vld [vmem:[#allocation5 + $0x1570] sm:$0xff]
    %v913 = vld [vmem:[#allocation5 + $0x1578] sm:$0xff]
    %v914 = vld [vmem:[#allocation5 + $0x1580] sm:$0xff]
    %v915 = vld [vmem:[#allocation5 + $0x1588] sm:$0xff]
    %v916 = vld [vmem:[#allocation5 + $0x1590] sm:$0xff]
    %v917 = vld [vmem:[#allocation5 + $0x1598] sm:$0xff]
    %v918 = vld [vmem:[#allocation5 + $0x15a0] sm:$0xff]
    %v919 = vld [vmem:[#allocation5 + $0x15a8] sm:$0xff]
    %v920 = vld [vmem:[#allocation5 + $0x15b0] sm:$0xff]
    %v921 = vld [vmem:[#allocation5 + $0x15b8] sm:$0xff]
    %v922 = vld [vmem:[#allocation5 + $0x15c0] sm:$0xff]
    %v923 = vld [vmem:[#allocation5 + $0x15c8] sm:$0xff]
    %v924 = vld [vmem:[#allocation5 + $0x15d0] sm:$0xff]
    %v925 = vld [vmem:[#allocation5 + $0x15d8] sm:$0xff]
    %v926 = vld [vmem:[#allocation5 + $0x15e0] sm:$0xff]
    %v927 = vld [vmem:[#allocation5 + $0x15e8] sm:$0xff]
    %v928 = vld [vmem:[#allocation5 + $0x15f0] sm:$0xff]
    %v929 = vld [vmem:[#allocation5 + $0x15f8] sm:$0xff]
    %v930 = vld [vmem:[#allocation5 + $0x1600] sm:$0xff]
    %v931 = vld [vmem:[#allocation5 + $0x1608] sm:$0xff]
    %v932 = vld [vmem:[#allocation5 + $0x1610] sm:$0xff]
    %v933 = vld [vmem:[#allocation5 + $0x1618] sm:$0xff]
    %v934 = vld [vmem:[#allocation5 + $0x1620] sm:$0xff]
    %v935 = vld [vmem:[#allocation5 + $0x1628] sm:$0xff]
    %v936 = vld [vmem:[#allocation5 + $0x1630] sm:$0xff]
    %v937 = vld [vmem:[#allocation5 + $0x1638] sm:$0xff]
    %v938 = vld [vmem:[#allocation5 + $0x1640] sm:$0xff]
    %v939 = vld [vmem:[#allocation5 + $0x1648] sm:$0xff]
    %v940 = vld [vmem:[#allocation5 + $0x1650] sm:$0xff]
    %v941 = vld [vmem:[#allocation5 + $0x1658] sm:$0xff]
    %v942 = vld [vmem:[#allocation5 + $0x1660] sm:$0xff]
    %v943 = vld [vmem:[#allocation5 + $0x1668] sm:$0xff]
    %v944 = vld [vmem:[#allocation5 + $0x1670] sm:$0xff]
    %v945 = vld [vmem:[#allocation5 + $0x1678] sm:$0xff]
    %v946 = vld [vmem:[#allocation5 + $0x1680] sm:$0xff]
    %v947 = vld [vmem:[#allocation5 + $0x1688] sm:$0xff]
    %v948 = vld [vmem:[#allocation5 + $0x1690] sm:$0xff]
    %v949 = vld [vmem:[#allocation5 + $0x1698] sm:$0xff]
    %v950 = vld [vmem:[#allocation5 + $0x16a0] sm:$0xff]
    %v951 = vld [vmem:[#allocation5 + $0x16a8] sm:$0xff]
    %v952 = vld [vmem:[#allocation5 + $0x16b0] sm:$0xff]
    %v953 = vld [vmem:[#allocation5 + $0x16b8] sm:$0xff]
    %v954 = vld [vmem:[#allocation5 + $0x16c0] sm:$0xff]
    %v955 = vld [vmem:[#allocation5 + $0x16c8] sm:$0xff]
    %v956 = vld [vmem:[#allocation5 + $0x16d0] sm:$0xff]
    %v957 = vld [vmem:[#allocation5 + $0x16d8] sm:$0xff]
    %v958 = vld [vmem:[#allocation5 + $0x16e0] sm:$0xff]
    %v959 = vld [vmem:[#allocation5 + $0x16e8] sm:$0xff]
    %v960 = vld [vmem:[#allocation5 + $0x16f0] sm:$0xff]
    %v961 = vld [vmem:[#allocation5 + $0x16f8] sm:$0xff]
    %v962 = vld [vmem:[#allocation5 + $0x1700] sm:$0xff]
    %v963 = vld [vmem:[#allocation5 + $0x1708] sm:$0xff]
    %v964 = vld [vmem:[#allocation5 + $0x1710] sm:$0xff]
    %v965 = vld [vmem:[#allocation5 + $0x1718] sm:$0xff]
    %v966 = vld [vmem:[#allocation5 + $0x1720] sm:$0xff]
    %v967 = vld [vmem:[#allocation5 + $0x1728] sm:$0xff]
    %v968 = vld [vmem:[#allocation5 + $0x1730] sm:$0xff]
    %v969 = vld [vmem:[#allocation5 + $0x1738] sm:$0xff]
    %v970 = vld [vmem:[#allocation5 + $0x1740] sm:$0xff]
    %v971 = vld [vmem:[#allocation5 + $0x1748] sm:$0xff]
    %v972 = vld [vmem:[#allocation5 + $0x1750] sm:$0xff]
    %v973 = vld [vmem:[#allocation5 + $0x1758] sm:$0xff]
    %v974 = vld [vmem:[#allocation5 + $0x1760] sm:$0xff]
    %v975 = vld [vmem:[#allocation5 + $0x1768] sm:$0xff]
    %v976 = vld [vmem:[#allocation5 + $0x1770] sm:$0xff]
    %v977 = vld [vmem:[#allocation5 + $0x1778] sm:$0xff]
    %v978 = vld [vmem:[#allocation5 + $0x1780] sm:$0xff]
    %v979 = vld [vmem:[#allocation5 + $0x1788] sm:$0xff]
    %v980 = vld [vmem:[#allocation5 + $0x1790] sm:$0xff]
    %v981 = vld [vmem:[#allocation5 + $0x1798] sm:$0xff]
    %v982 = vld [vmem:[#allocation5 + $0x17a0] sm:$0xff]
    %v983 = vld [vmem:[#allocation5 + $0x17a8] sm:$0xff]
    %v984 = vld [vmem:[#allocation5 + $0x17b0] sm:$0xff]
    %v985 = vld [vmem:[#allocation5 + $0x17b8] sm:$0xff]
    %v986 = vld [vmem:[#allocation5 + $0x17c0] sm:$0xff]
    %v987 = vld [vmem:[#allocation5 + $0x17c8] sm:$0xff]
    %v988 = vld [vmem:[#allocation5 + $0x17d0] sm:$0xff]
    %v989 = vld [vmem:[#allocation5 + $0x17d8] sm:$0xff]
    %v990 = vld [vmem:[#allocation5 + $0x17e0] sm:$0xff]
    %v991 = vld [vmem:[#allocation5 + $0x17e8] sm:$0xff]
    %v992 = vld [vmem:[#allocation5 + $0x17f0] sm:$0xff]
    %v993 = vld [vmem:[#allocation5 + $0x17f8] sm:$0xff]
    %v994 = vld [vmem:[#allocation7] sm:$0xf]
    %v996 = vperm.slane %v994, 0
    %v997 = vperm.slane %v994, 1
    %v998 = vperm.slane %v994, 2
    %v999 = vperm.slane %v994, 3
    %v1772 = vunpack.c.l.b16 %v226
    %v1773 = vunpack.c.h.b16 %v226
    %v1774 = vunpack.c.l.b16 %v227
    %v1775 = vunpack.c.h.b16 %v227
    %v1776 = vunpack.c.l.b16 %v228
    %v1777 = vunpack.c.h.b16 %v228
    %v1778 = vunpack.c.l.b16 %v229
    %v1779 = vunpack.c.h.b16 %v229
    %v1780 = vunpack.c.l.b16 %v230
    %v1781 = vunpack.c.h.b16 %v230
    %v1782 = vunpack.c.l.b16 %v231
    %v1783 = vunpack.c.h.b16 %v231
    %v1784 = vunpack.c.l.b16 %v232
    %v1785 = vunpack.c.h.b16 %v232
    %v1786 = vunpack.c.l.b16 %v233
    %v1787 = vunpack.c.h.b16 %v233
    %v1788 = vunpack.c.l.b16 %v234
    %v1789 = vunpack.c.h.b16 %v234
    %v1790 = vunpack.c.l.b16 %v235
    %v1791 = vunpack.c.h.b16 %v235
    %v1792 = vunpack.c.l.b16 %v236
    %v1793 = vunpack.c.h.b16 %v236
    %v1794 = vunpack.c.l.b16 %v237
    %v1795 = vunpack.c.h.b16 %v237
    %v1796 = vunpack.c.l.b16 %v238
    %v1797 = vunpack.c.h.b16 %v238
    %v1798 = vunpack.c.l.b16 %v239
    %v1799 = vunpack.c.h.b16 %v239
    %v1800 = vunpack.c.l.b16 %v240
    %v1801 = vunpack.c.h.b16 %v240
    %v1802 = vunpack.c.l.b16 %v241
    %v1803 = vunpack.c.h.b16 %v241
    %v1804 = vunpack.c.l.b16 %v242
    %v1805 = vunpack.c.h.b16 %v242
    %v1806 = vunpack.c.l.b16 %v243
    %v1807 = vunpack.c.h.b16 %v243
    %v1808 = vunpack.c.l.b16 %v244
    %v1809 = vunpack.c.h.b16 %v244
    %v1810 = vunpack.c.l.b16 %v245
    %v1811 = vunpack.c.h.b16 %v245
    %v1812 = vunpack.c.l.b16 %v246
    %v1813 = vunpack.c.h.b16 %v246
    %v1814 = vunpack.c.l.b16 %v247
    %v1815 = vunpack.c.h.b16 %v247
    %v1816 = vunpack.c.l.b16 %v248
    %v1817 = vunpack.c.h.b16 %v248
    %v1818 = vunpack.c.l.b16 %v249
    %v1819 = vunpack.c.h.b16 %v249
    %v1820 = vunpack.c.l.b16 %v250
    %v1821 = vunpack.c.h.b16 %v250
    %v1822 = vunpack.c.l.b16 %v251
    %v1823 = vunpack.c.h.b16 %v251
    %v1824 = vunpack.c.l.b16 %v252
    %v1825 = vunpack.c.h.b16 %v252
    %v1826 = vunpack.c.l.b16 %v253
    %v1827 = vunpack.c.h.b16 %v253
    %v1828 = vunpack.c.l.b16 %v254
    %v1829 = vunpack.c.h.b16 %v254
    %v1830 = vunpack.c.l.b16 %v255
    %v1831 = vunpack.c.h.b16 %v255
    %v1832 = vunpack.c.l.b16 %v256
    %v1833 = vunpack.c.h.b16 %v256
    %v1834 = vunpack.c.l.b16 %v257
    %v1835 = vunpack.c.h.b16 %v257
    %v1836 = vunpack.c.l.b16 %v258
    %v1837 = vunpack.c.h.b16 %v258
    %v1838 = vunpack.c.l.b16 %v259
    %v1839 = vunpack.c.h.b16 %v259
    %v1840 = vunpack.c.l.b16 %v260
    %v1841 = vunpack.c.h.b16 %v260
    %v1842 = vunpack.c.l.b16 %v261
    %v1843 = vunpack.c.h.b16 %v261
    %v1844 = vunpack.c.l.b16 %v262
    %v1845 = vunpack.c.h.b16 %v262
    %v1846 = vunpack.c.l.b16 %v263
    %v1847 = vunpack.c.h.b16 %v263
    %v1848 = vunpack.c.l.b16 %v264
    %v1849 = vunpack.c.h.b16 %v264
    %v1850 = vunpack.c.l.b16 %v265
    %v1851 = vunpack.c.h.b16 %v265
    %v1852 = vunpack.c.l.b16 %v266
    %v1853 = vunpack.c.h.b16 %v266
    %v1854 = vunpack.c.l.b16 %v267
    %v1855 = vunpack.c.h.b16 %v267
    %v1856 = vunpack.c.l.b16 %v268
    %v1857 = vunpack.c.h.b16 %v268
    %v1858 = vunpack.c.l.b16 %v269
    %v1859 = vunpack.c.h.b16 %v269
    %v1860 = vunpack.c.l.b16 %v270
    %v1861 = vunpack.c.h.b16 %v270
    %v1862 = vunpack.c.l.b16 %v271
    %v1863 = vunpack.c.h.b16 %v271
    %v1864 = vunpack.c.l.b16 %v272
    %v1865 = vunpack.c.h.b16 %v272
    %v1866 = vunpack.c.l.b16 %v273
    %v1867 = vunpack.c.h.b16 %v273
    %v1868 = vunpack.c.l.b16 %v274
    %v1869 = vunpack.c.h.b16 %v274
    %v1870 = vunpack.c.l.b16 %v275
    %v1871 = vunpack.c.h.b16 %v275
    %v1872 = vunpack.c.l.b16 %v276
    %v1873 = vunpack.c.h.b16 %v276
    %v1874 = vunpack.c.l.b16 %v277
    %v1875 = vunpack.c.h.b16 %v277
    %v1876 = vunpack.c.l.b16 %v278
    %v1877 = vunpack.c.h.b16 %v278
    %v1878 = vunpack.c.l.b16 %v279
    %v1879 = vunpack.c.h.b16 %v279
    %v1880 = vunpack.c.l.b16 %v280
    %v1881 = vunpack.c.h.b16 %v280
    %v1882 = vunpack.c.l.b16 %v281
    %v1883 = vunpack.c.h.b16 %v281
    %v1884 = vunpack.c.l.b16 %v282
    %v1885 = vunpack.c.h.b16 %v282
    %v1886 = vunpack.c.l.b16 %v283
    %v1887 = vunpack.c.h.b16 %v283
    %v1888 = vunpack.c.l.b16 %v284
    %v1889 = vunpack.c.h.b16 %v284
    %v1890 = vunpack.c.l.b16 %v285
    %v1891 = vunpack.c.h.b16 %v285
    %v1892 = vunpack.c.l.b16 %v286
    %v1893 = vunpack.c.h.b16 %v286
    %v1894 = vunpack.c.l.b16 %v287
    %v1895 = vunpack.c.h.b16 %v287
    %v1896 = vunpack.c.l.b16 %v288
    %v1897 = vunpack.c.h.b16 %v288
    %v1898 = vunpack.c.l.b16 %v289
    %v1899 = vunpack.c.h.b16 %v289
    %v1900 = vunpack.c.l.b16 %v290
    %v1901 = vunpack.c.h.b16 %v290
    %v1902 = vunpack.c.l.b16 %v291
    %v1903 = vunpack.c.h.b16 %v291
    %v1904 = vunpack.c.l.b16 %v292
    %v1905 = vunpack.c.h.b16 %v292
    %v1906 = vunpack.c.l.b16 %v293
    %v1907 = vunpack.c.h.b16 %v293
    %v1908 = vunpack.c.l.b16 %v294
    %v1909 = vunpack.c.h.b16 %v294
    %v1910 = vunpack.c.l.b16 %v295
    %v1911 = vunpack.c.h.b16 %v295
    %v1912 = vunpack.c.l.b16 %v296
    %v1913 = vunpack.c.h.b16 %v296
    %v1914 = vunpack.c.l.b16 %v297
    %v1915 = vunpack.c.h.b16 %v297
    %v1916 = vunpack.c.l.b16 %v298
    %v1917 = vunpack.c.h.b16 %v298
    %v1918 = vunpack.c.l.b16 %v299
    %v1919 = vunpack.c.h.b16 %v299
    %v1920 = vunpack.c.l.b16 %v300
    %v1921 = vunpack.c.h.b16 %v300
    %v1922 = vunpack.c.l.b16 %v301
    %v1923 = vunpack.c.h.b16 %v301
    %v1924 = vunpack.c.l.b16 %v302
    %v1925 = vunpack.c.h.b16 %v302
    %v1926 = vunpack.c.l.b16 %v303
    %v1927 = vunpack.c.h.b16 %v303
    %v1928 = vunpack.c.l.b16 %v304
    %v1929 = vunpack.c.h.b16 %v304
    %v1930 = vunpack.c.l.b16 %v305
    %v1931 = vunpack.c.h.b16 %v305
    %v1932 = vunpack.c.l.b16 %v306
    %v1933 = vunpack.c.h.b16 %v306
    %v1934 = vunpack.c.l.b16 %v307
    %v1935 = vunpack.c.h.b16 %v307
    %v1936 = vunpack.c.l.b16 %v308
    %v1937 = vunpack.c.h.b16 %v308
    %v1938 = vunpack.c.l.b16 %v309
    %v1939 = vunpack.c.h.b16 %v309
    %v1940 = vunpack.c.l.b16 %v310
    %v1941 = vunpack.c.h.b16 %v310
    %v1942 = vunpack.c.l.b16 %v311
    %v1943 = vunpack.c.h.b16 %v311
    %v1944 = vunpack.c.l.b16 %v312
    %v1945 = vunpack.c.h.b16 %v312
    %v1946 = vunpack.c.l.b16 %v313
    %v1947 = vunpack.c.h.b16 %v313
    %v1948 = vunpack.c.l.b16 %v314
    %v1949 = vunpack.c.h.b16 %v314
    %v1950 = vunpack.c.l.b16 %v315
    %v1951 = vunpack.c.h.b16 %v315
    %v1952 = vunpack.c.l.b16 %v316
    %v1953 = vunpack.c.h.b16 %v316
    %v1954 = vunpack.c.l.b16 %v317
    %v1955 = vunpack.c.h.b16 %v317
    %v1956 = vunpack.c.l.b16 %v318
    %v1957 = vunpack.c.h.b16 %v318
    %v1958 = vunpack.c.l.b16 %v319
    %v1959 = vunpack.c.h.b16 %v319
    %v1960 = vunpack.c.l.b16 %v320
    %v1961 = vunpack.c.h.b16 %v320
    %v1962 = vunpack.c.l.b16 %v321
    %v1963 = vunpack.c.h.b16 %v321
    %v1964 = vunpack.c.l.b16 %v322
    %v1965 = vunpack.c.h.b16 %v322
    %v1966 = vunpack.c.l.b16 %v323
    %v1967 = vunpack.c.h.b16 %v323
    %v1968 = vunpack.c.l.b16 %v324
    %v1969 = vunpack.c.h.b16 %v324
    %v1970 = vunpack.c.l.b16 %v325
    %v1971 = vunpack.c.h.b16 %v325
    %v1972 = vunpack.c.l.b16 %v326
    %v1973 = vunpack.c.h.b16 %v326
    %v1974 = vunpack.c.l.b16 %v327
    %v1975 = vunpack.c.h.b16 %v327
    %v1976 = vunpack.c.l.b16 %v328
    %v1977 = vunpack.c.h.b16 %v328
    %v1978 = vunpack.c.l.b16 %v329
    %v1979 = vunpack.c.h.b16 %v329
    %v1980 = vunpack.c.l.b16 %v330
    %v1981 = vunpack.c.h.b16 %v330
    %v1982 = vunpack.c.l.b16 %v331
    %v1983 = vunpack.c.h.b16 %v331
    %v1984 = vunpack.c.l.b16 %v332
    %v1985 = vunpack.c.h.b16 %v332
    %v1986 = vunpack.c.l.b16 %v333
    %v1987 = vunpack.c.h.b16 %v333
    %v1988 = vunpack.c.l.b16 %v334
    %v1989 = vunpack.c.h.b16 %v334
    %v1990 = vunpack.c.l.b16 %v335
    %v1991 = vunpack.c.h.b16 %v335
    %v1992 = vunpack.c.l.b16 %v336
    %v1993 = vunpack.c.h.b16 %v336
    %v1994 = vunpack.c.l.b16 %v337
    %v1995 = vunpack.c.h.b16 %v337
    %v1996 = vunpack.c.l.b16 %v338
    %v1997 = vunpack.c.h.b16 %v338
    %v1998 = vunpack.c.l.b16 %v339
    %v1999 = vunpack.c.h.b16 %v339
    %v2000 = vunpack.c.l.b16 %v340
    %v2001 = vunpack.c.h.b16 %v340
    %v2002 = vunpack.c.l.b16 %v341
    %v2003 = vunpack.c.h.b16 %v341
    %v2004 = vunpack.c.l.b16 %v342
    %v2005 = vunpack.c.h.b16 %v342
    %v2006 = vunpack.c.l.b16 %v343
    %v2007 = vunpack.c.h.b16 %v343
    %v2008 = vunpack.c.l.b16 %v344
    %v2009 = vunpack.c.h.b16 %v344
    %v2010 = vunpack.c.l.b16 %v345
    %v2011 = vunpack.c.h.b16 %v345
    %v2012 = vunpack.c.l.b16 %v346
    %v2013 = vunpack.c.h.b16 %v346
    %v2014 = vunpack.c.l.b16 %v347
    %v2015 = vunpack.c.h.b16 %v347
    %v2016 = vunpack.c.l.b16 %v348
    %v2017 = vunpack.c.h.b16 %v348
    %v2018 = vunpack.c.l.b16 %v349
    %v2019 = vunpack.c.h.b16 %v349
    %v2020 = vunpack.c.l.b16 %v350
    %v2021 = vunpack.c.h.b16 %v350
    %v2022 = vunpack.c.l.b16 %v351
    %v2023 = vunpack.c.h.b16 %v351
    %v2024 = vunpack.c.l.b16 %v352
    %v2025 = vunpack.c.h.b16 %v352
    %v2026 = vunpack.c.l.b16 %v353
    %v2027 = vunpack.c.h.b16 %v353
    %v2028 = vunpack.c.l.b16 %v354
    %v2029 = vunpack.c.h.b16 %v354
    %v2030 = vunpack.c.l.b16 %v355
    %v2031 = vunpack.c.h.b16 %v355
    %v2032 = vunpack.c.l.b16 %v356
    %v2033 = vunpack.c.h.b16 %v356
    %v2034 = vunpack.c.l.b16 %v357
    %v2035 = vunpack.c.h.b16 %v357
    %v2036 = vunpack.c.l.b16 %v358
    %v2037 = vunpack.c.h.b16 %v358
    %v2038 = vunpack.c.l.b16 %v359
    %v2039 = vunpack.c.h.b16 %v359
    %v2040 = vunpack.c.l.b16 %v360
    %v2041 = vunpack.c.h.b16 %v360
    %v2042 = vunpack.c.l.b16 %v361
    %v2043 = vunpack.c.h.b16 %v361
    %v2044 = vunpack.c.l.b16 %v362
    %v2045 = vunpack.c.h.b16 %v362
    %v2046 = vunpack.c.l.b16 %v363
    %v2047 = vunpack.c.h.b16 %v363
    %v2048 = vunpack.c.l.b16 %v364
    %v2049 = vunpack.c.h.b16 %v364
    %v2050 = vunpack.c.l.b16 %v365
    %v2051 = vunpack.c.h.b16 %v365
    %v2052 = vunpack.c.l.b16 %v366
    %v2053 = vunpack.c.h.b16 %v366
    %v2054 = vunpack.c.l.b16 %v367
    %v2055 = vunpack.c.h.b16 %v367
    %v2056 = vunpack.c.l.b16 %v368
    %v2057 = vunpack.c.h.b16 %v368
    %v2058 = vunpack.c.l.b16 %v369
    %v2059 = vunpack.c.h.b16 %v369
    %v2060 = vunpack.c.l.b16 %v370
    %v2061 = vunpack.c.h.b16 %v370
    %v2062 = vunpack.c.l.b16 %v371
    %v2063 = vunpack.c.h.b16 %v371
    %v2064 = vunpack.c.l.b16 %v372
    %v2065 = vunpack.c.h.b16 %v372
    %v2066 = vunpack.c.l.b16 %v373
    %v2067 = vunpack.c.h.b16 %v373
    %v2068 = vunpack.c.l.b16 %v374
    %v2069 = vunpack.c.h.b16 %v374
    %v2070 = vunpack.c.l.b16 %v375
    %v2071 = vunpack.c.h.b16 %v375
    %v2072 = vunpack.c.l.b16 %v376
    %v2073 = vunpack.c.h.b16 %v376
    %v2074 = vunpack.c.l.b16 %v377
    %v2075 = vunpack.c.h.b16 %v377
    %v2076 = vunpack.c.l.b16 %v378
    %v2077 = vunpack.c.h.b16 %v378
    %v2078 = vunpack.c.l.b16 %v379
    %v2079 = vunpack.c.h.b16 %v379
    %v2080 = vunpack.c.l.b16 %v380
    %v2081 = vunpack.c.h.b16 %v380
    %v2082 = vunpack.c.l.b16 %v381
    %v2083 = vunpack.c.h.b16 %v381
    %v2084 = vunpack.c.l.b16 %v382
    %v2085 = vunpack.c.h.b16 %v382
    %v2086 = vunpack.c.l.b16 %v383
    %v2087 = vunpack.c.h.b16 %v383
    %v2088 = vunpack.c.l.b16 %v384
    %v2089 = vunpack.c.h.b16 %v384
    %v2090 = vunpack.c.l.b16 %v385
    %v2091 = vunpack.c.h.b16 %v385
    %v2092 = vunpack.c.l.b16 %v386
    %v2093 = vunpack.c.h.b16 %v386
    %v2094 = vunpack.c.l.b16 %v387
    %v2095 = vunpack.c.h.b16 %v387
    %v2096 = vunpack.c.l.b16 %v388
    %v2097 = vunpack.c.h.b16 %v388
    %v2098 = vunpack.c.l.b16 %v389
    %v2099 = vunpack.c.h.b16 %v389
    %v2100 = vunpack.c.l.b16 %v390
    %v2101 = vunpack.c.h.b16 %v390
    %v2102 = vunpack.c.l.b16 %v391
    %v2103 = vunpack.c.h.b16 %v391
    %v2104 = vunpack.c.l.b16 %v392
    %v2105 = vunpack.c.h.b16 %v392
    %v2106 = vunpack.c.l.b16 %v393
    %v2107 = vunpack.c.h.b16 %v393
    %v2108 = vunpack.c.l.b16 %v394
    %v2109 = vunpack.c.h.b16 %v394
    %v2110 = vunpack.c.l.b16 %v395
    %v2111 = vunpack.c.h.b16 %v395
    %v2112 = vunpack.c.l.b16 %v396
    %v2113 = vunpack.c.h.b16 %v396
    %v2114 = vunpack.c.l.b16 %v397
    %v2115 = vunpack.c.h.b16 %v397
    %v2116 = vunpack.c.l.b16 %v398
    %v2117 = vunpack.c.h.b16 %v398
    %v2118 = vunpack.c.l.b16 %v399
    %v2119 = vunpack.c.h.b16 %v399
    %v2120 = vunpack.c.l.b16 %v400
    %v2121 = vunpack.c.h.b16 %v400
    %v2122 = vunpack.c.l.b16 %v401
    %v2123 = vunpack.c.h.b16 %v401
    %v2124 = vunpack.c.l.b16 %v402
    %v2125 = vunpack.c.h.b16 %v402
    %v2126 = vunpack.c.l.b16 %v403
    %v2127 = vunpack.c.h.b16 %v403
    %v2128 = vunpack.c.l.b16 %v404
    %v2129 = vunpack.c.h.b16 %v404
    %v2130 = vunpack.c.l.b16 %v405
    %v2131 = vunpack.c.h.b16 %v405
    %v2132 = vunpack.c.l.b16 %v406
    %v2133 = vunpack.c.h.b16 %v406
    %v2134 = vunpack.c.l.b16 %v407
    %v2135 = vunpack.c.h.b16 %v407
    %v2136 = vunpack.c.l.b16 %v408
    %v2137 = vunpack.c.h.b16 %v408
    %v2138 = vunpack.c.l.b16 %v409
    %v2139 = vunpack.c.h.b16 %v409
    %v2140 = vunpack.c.l.b16 %v410
    %v2141 = vunpack.c.h.b16 %v410
    %v2142 = vunpack.c.l.b16 %v411
    %v2143 = vunpack.c.h.b16 %v411
    %v2144 = vunpack.c.l.b16 %v412
    %v2145 = vunpack.c.h.b16 %v412
    %v2146 = vunpack.c.l.b16 %v413
    %v2147 = vunpack.c.h.b16 %v413
    %v2148 = vunpack.c.l.b16 %v414
    %v2149 = vunpack.c.h.b16 %v414
    %v2150 = vunpack.c.l.b16 %v415
    %v2151 = vunpack.c.h.b16 %v415
    %v2152 = vunpack.c.l.b16 %v416
    %v2153 = vunpack.c.h.b16 %v416
    %v2154 = vunpack.c.l.b16 %v417
    %v2155 = vunpack.c.h.b16 %v417
    %v2156 = vunpack.c.l.b16 %v418
    %v2157 = vunpack.c.h.b16 %v418
    %v2158 = vunpack.c.l.b16 %v419
    %v2159 = vunpack.c.h.b16 %v419
    %v2160 = vunpack.c.l.b16 %v420
    %v2161 = vunpack.c.h.b16 %v420
    %v2162 = vunpack.c.l.b16 %v421
    %v2163 = vunpack.c.h.b16 %v421
    %v2164 = vunpack.c.l.b16 %v422
    %v2165 = vunpack.c.h.b16 %v422
    %v2166 = vunpack.c.l.b16 %v423
    %v2167 = vunpack.c.h.b16 %v423
    %v2168 = vunpack.c.l.b16 %v424
    %v2169 = vunpack.c.h.b16 %v424
    %v2170 = vunpack.c.l.b16 %v425
    %v2171 = vunpack.c.h.b16 %v425
    %v2172 = vunpack.c.l.b16 %v426
    %v2173 = vunpack.c.h.b16 %v426
    %v2174 = vunpack.c.l.b16 %v427
    %v2175 = vunpack.c.h.b16 %v427
    %v2176 = vunpack.c.l.b16 %v428
    %v2177 = vunpack.c.h.b16 %v428
    %v2178 = vunpack.c.l.b16 %v429
    %v2179 = vunpack.c.h.b16 %v429
    %v2180 = vunpack.c.l.b16 %v430
    %v2181 = vunpack.c.h.b16 %v430
    %v2182 = vunpack.c.l.b16 %v431
    %v2183 = vunpack.c.h.b16 %v431
    %v2184 = vunpack.c.l.b16 %v432
    %v2185 = vunpack.c.h.b16 %v432
    %v2186 = vunpack.c.l.b16 %v433
    %v2187 = vunpack.c.h.b16 %v433
    %v2188 = vunpack.c.l.b16 %v434
    %v2189 = vunpack.c.h.b16 %v434
    %v2190 = vunpack.c.l.b16 %v435
    %v2191 = vunpack.c.h.b16 %v435
    %v2192 = vunpack.c.l.b16 %v436
    %v2193 = vunpack.c.h.b16 %v436
    %v2194 = vunpack.c.l.b16 %v437
    %v2195 = vunpack.c.h.b16 %v437
    %v2196 = vunpack.c.l.b16 %v438
    %v2197 = vunpack.c.h.b16 %v438
    %v2198 = vunpack.c.l.b16 %v439
    %v2199 = vunpack.c.h.b16 %v439
    %v2200 = vunpack.c.l.b16 %v440
    %v2201 = vunpack.c.h.b16 %v440
    %v2202 = vunpack.c.l.b16 %v441
    %v2203 = vunpack.c.h.b16 %v441
    %v2204 = vunpack.c.l.b16 %v442
    %v2205 = vunpack.c.h.b16 %v442
    %v2206 = vunpack.c.l.b16 %v443
    %v2207 = vunpack.c.h.b16 %v443
    %v2208 = vunpack.c.l.b16 %v444
    %v2209 = vunpack.c.h.b16 %v444
    %v2210 = vunpack.c.l.b16 %v445
    %v2211 = vunpack.c.h.b16 %v445
    %v2212 = vunpack.c.l.b16 %v446
    %v2213 = vunpack.c.h.b16 %v446
    %v2214 = vunpack.c.l.b16 %v447
    %v2215 = vunpack.c.h.b16 %v447
    %v2216 = vunpack.c.l.b16 %v448
    %v2217 = vunpack.c.h.b16 %v448
    %v2218 = vunpack.c.l.b16 %v449
    %v2219 = vunpack.c.h.b16 %v449
    %v2220 = vunpack.c.l.b16 %v450
    %v2221 = vunpack.c.h.b16 %v450
    %v2222 = vunpack.c.l.b16 %v451
    %v2223 = vunpack.c.h.b16 %v451
    %v2224 = vunpack.c.l.b16 %v452
    %v2225 = vunpack.c.h.b16 %v452
    %v2226 = vunpack.c.l.b16 %v453
    %v2227 = vunpack.c.h.b16 %v453
    %v2228 = vunpack.c.l.b16 %v454
    %v2229 = vunpack.c.h.b16 %v454
    %v2230 = vunpack.c.l.b16 %v455
    %v2231 = vunpack.c.h.b16 %v455
    %v2232 = vunpack.c.l.b16 %v456
    %v2233 = vunpack.c.h.b16 %v456
    %v2234 = vunpack.c.l.b16 %v457
    %v2235 = vunpack.c.h.b16 %v457
    %v2236 = vunpack.c.l.b16 %v458
    %v2237 = vunpack.c.h.b16 %v458
    %v2238 = vunpack.c.l.b16 %v459
    %v2239 = vunpack.c.h.b16 %v459
    %v2240 = vunpack.c.l.b16 %v460
    %v2241 = vunpack.c.h.b16 %v460
    %v2242 = vunpack.c.l.b16 %v461
    %v2243 = vunpack.c.h.b16 %v461
    %v2244 = vunpack.c.l.b16 %v462
    %v2245 = vunpack.c.h.b16 %v462
    %v2246 = vunpack.c.l.b16 %v463
    %v2247 = vunpack.c.h.b16 %v463
    %v2248 = vunpack.c.l.b16 %v464
    %v2249 = vunpack.c.h.b16 %v464
    %v2250 = vunpack.c.l.b16 %v465
    %v2251 = vunpack.c.h.b16 %v465
    %v2252 = vunpack.c.l.b16 %v466
    %v2253 = vunpack.c.h.b16 %v466
    %v2254 = vunpack.c.l.b16 %v467
    %v2255 = vunpack.c.h.b16 %v467
    %v2256 = vunpack.c.l.b16 %v468
    %v2257 = vunpack.c.h.b16 %v468
    %v2258 = vunpack.c.l.b16 %v469
    %v2259 = vunpack.c.h.b16 %v469
    %v2260 = vunpack.c.l.b16 %v470
    %v2261 = vunpack.c.h.b16 %v470
    %v2262 = vunpack.c.l.b16 %v471
    %v2263 = vunpack.c.h.b16 %v471
    %v2264 = vunpack.c.l.b16 %v472
    %v2265 = vunpack.c.h.b16 %v472
    %v2266 = vunpack.c.l.b16 %v473
    %v2267 = vunpack.c.h.b16 %v473
    %v2268 = vunpack.c.l.b16 %v474
    %v2269 = vunpack.c.h.b16 %v474
    %v2270 = vunpack.c.l.b16 %v475
    %v2271 = vunpack.c.h.b16 %v475
    %v2272 = vunpack.c.l.b16 %v476
    %v2273 = vunpack.c.h.b16 %v476
    %v2274 = vunpack.c.l.b16 %v477
    %v2275 = vunpack.c.h.b16 %v477
    %v2276 = vunpack.c.l.b16 %v478
    %v2277 = vunpack.c.h.b16 %v478
    %v2278 = vunpack.c.l.b16 %v479
    %v2279 = vunpack.c.h.b16 %v479
    %v2280 = vunpack.c.l.b16 %v480
    %v2281 = vunpack.c.h.b16 %v480
    %v2282 = vunpack.c.l.b16 %v481
    %v2283 = vunpack.c.h.b16 %v481
    %v2284 = vunpack.c.l.b16 %v482
    %v2285 = vunpack.c.h.b16 %v482
    %v2286 = vunpack.c.l.b16 %v483
    %v2287 = vunpack.c.h.b16 %v483
    %v2288 = vunpack.c.l.b16 %v484
    %v2289 = vunpack.c.h.b16 %v484
    %v2290 = vunpack.c.l.b16 %v485
    %v2291 = vunpack.c.h.b16 %v485
    %v2292 = vunpack.c.l.b16 %v486
    %v2293 = vunpack.c.h.b16 %v486
    %v2294 = vunpack.c.l.b16 %v487
    %v2295 = vunpack.c.h.b16 %v487
    %v2296 = vunpack.c.l.b16 %v488
    %v2297 = vunpack.c.h.b16 %v488
    %v2298 = vunpack.c.l.b16 %v489
    %v2299 = vunpack.c.h.b16 %v489
    %v2300 = vunpack.c.l.b16 %v490
    %v2301 = vunpack.c.h.b16 %v490
    %v2302 = vunpack.c.l.b16 %v491
    %v2303 = vunpack.c.h.b16 %v491
    %v2304 = vunpack.c.l.b16 %v492
    %v2305 = vunpack.c.h.b16 %v492
    %v2306 = vunpack.c.l.b16 %v493
    %v2307 = vunpack.c.h.b16 %v493
    %v2308 = vunpack.c.l.b16 %v494
    %v2309 = vunpack.c.h.b16 %v494
    %v2310 = vunpack.c.l.b16 %v495
    %v2311 = vunpack.c.h.b16 %v495
    %v2312 = vunpack.c.l.b16 %v496
    %v2313 = vunpack.c.h.b16 %v496
    %v2314 = vunpack.c.l.b16 %v497
    %v2315 = vunpack.c.h.b16 %v497
    %v2316 = vunpack.c.l.b16 %v498
    %v2317 = vunpack.c.h.b16 %v498
    %v2318 = vunpack.c.l.b16 %v499
    %v2319 = vunpack.c.h.b16 %v499
    %v2320 = vunpack.c.l.b16 %v500
    %v2321 = vunpack.c.h.b16 %v500
    %v2322 = vunpack.c.l.b16 %v501
    %v2323 = vunpack.c.h.b16 %v501
    %v2324 = vunpack.c.l.b16 %v502
    %v2325 = vunpack.c.h.b16 %v502
    %v2326 = vunpack.c.l.b16 %v503
    %v2327 = vunpack.c.h.b16 %v503
    %v2328 = vunpack.c.l.b16 %v504
    %v2329 = vunpack.c.h.b16 %v504
    %v2330 = vunpack.c.l.b16 %v505
    %v2331 = vunpack.c.h.b16 %v505
    %v2332 = vunpack.c.l.b16 %v506
    %v2333 = vunpack.c.h.b16 %v506
    %v2334 = vunpack.c.l.b16 %v507
    %v2335 = vunpack.c.h.b16 %v507
    %v2336 = vunpack.c.l.b16 %v508
    %v2337 = vunpack.c.h.b16 %v508
    %v2338 = vunpack.c.l.b16 %v509
    %v2339 = vunpack.c.h.b16 %v509
    %v2340 = vunpack.c.l.b16 %v510
    %v2341 = vunpack.c.h.b16 %v510
    %v2342 = vunpack.c.l.b16 %v511
    %v2343 = vunpack.c.h.b16 %v511
    %v2344 = vunpack.c.l.b16 %v512
    %v2345 = vunpack.c.h.b16 %v512
    %v2346 = vunpack.c.l.b16 %v513
    %v2347 = vunpack.c.h.b16 %v513
    %v2348 = vunpack.c.l.b16 %v514
    %v2349 = vunpack.c.h.b16 %v514
    %v2350 = vunpack.c.l.b16 %v515
    %v2351 = vunpack.c.h.b16 %v515
    %v2352 = vunpack.c.l.b16 %v516
    %v2353 = vunpack.c.h.b16 %v516
    %v2354 = vunpack.c.l.b16 %v517
    %v2355 = vunpack.c.h.b16 %v517
    %v2356 = vunpack.c.l.b16 %v518
    %v2357 = vunpack.c.h.b16 %v518
    %v2358 = vunpack.c.l.b16 %v519
    %v2359 = vunpack.c.h.b16 %v519
    %v2360 = vunpack.c.l.b16 %v520
    %v2361 = vunpack.c.h.b16 %v520
    %v2362 = vunpack.c.l.b16 %v521
    %v2363 = vunpack.c.h.b16 %v521
    %v2364 = vunpack.c.l.b16 %v522
    %v2365 = vunpack.c.h.b16 %v522
    %v2366 = vunpack.c.l.b16 %v523
    %v2367 = vunpack.c.h.b16 %v523
    %v2368 = vunpack.c.l.b16 %v524
    %v2369 = vunpack.c.h.b16 %v524
    %v2370 = vunpack.c.l.b16 %v525
    %v2371 = vunpack.c.h.b16 %v525
    %v2372 = vunpack.c.l.b16 %v526
    %v2373 = vunpack.c.h.b16 %v526
    %v2374 = vunpack.c.l.b16 %v527
    %v2375 = vunpack.c.h.b16 %v527
    %v2376 = vunpack.c.l.b16 %v528
    %v2377 = vunpack.c.h.b16 %v528
    %v2378 = vunpack.c.l.b16 %v529
    %v2379 = vunpack.c.h.b16 %v529
    %v2380 = vunpack.c.l.b16 %v530
    %v2381 = vunpack.c.h.b16 %v530
    %v2382 = vunpack.c.l.b16 %v531
    %v2383 = vunpack.c.h.b16 %v531
    %v2384 = vunpack.c.l.b16 %v532
    %v2385 = vunpack.c.h.b16 %v532
    %v2386 = vunpack.c.l.b16 %v533
    %v2387 = vunpack.c.h.b16 %v533
    %v2388 = vunpack.c.l.b16 %v534
    %v2389 = vunpack.c.h.b16 %v534
    %v2390 = vunpack.c.l.b16 %v535
    %v2391 = vunpack.c.h.b16 %v535
    %v2392 = vunpack.c.l.b16 %v536
    %v2393 = vunpack.c.h.b16 %v536
    %v2394 = vunpack.c.l.b16 %v537
    %v2395 = vunpack.c.h.b16 %v537
    %v2396 = vunpack.c.l.b16 %v538
    %v2397 = vunpack.c.h.b16 %v538
    %v2398 = vunpack.c.l.b16 %v539
    %v2399 = vunpack.c.h.b16 %v539
    %v2400 = vunpack.c.l.b16 %v540
    %v2401 = vunpack.c.h.b16 %v540
    %v2402 = vunpack.c.l.b16 %v541
    %v2403 = vunpack.c.h.b16 %v541
    %v2404 = vunpack.c.l.b16 %v542
    %v2405 = vunpack.c.h.b16 %v542
    %v2406 = vunpack.c.l.b16 %v543
    %v2407 = vunpack.c.h.b16 %v543
    %v2408 = vunpack.c.l.b16 %v544
    %v2409 = vunpack.c.h.b16 %v544
    %v2410 = vunpack.c.l.b16 %v545
    %v2411 = vunpack.c.h.b16 %v545
    %v2412 = vunpack.c.l.b16 %v546
    %v2413 = vunpack.c.h.b16 %v546
    %v2414 = vunpack.c.l.b16 %v547
    %v2415 = vunpack.c.h.b16 %v547
    %v2416 = vunpack.c.l.b16 %v548
    %v2417 = vunpack.c.h.b16 %v548
    %v2418 = vunpack.c.l.b16 %v549
    %v2419 = vunpack.c.h.b16 %v549
    %v2420 = vunpack.c.l.b16 %v550
    %v2421 = vunpack.c.h.b16 %v550
    %v2422 = vunpack.c.l.b16 %v551
    %v2423 = vunpack.c.h.b16 %v551
    %v2424 = vunpack.c.l.b16 %v552
    %v2425 = vunpack.c.h.b16 %v552
    %v2426 = vunpack.c.l.b16 %v553
    %v2427 = vunpack.c.h.b16 %v553
    %v2428 = vunpack.c.l.b16 %v554
    %v2429 = vunpack.c.h.b16 %v554
    %v2430 = vunpack.c.l.b16 %v555
    %v2431 = vunpack.c.h.b16 %v555
    %v2432 = vunpack.c.l.b16 %v556
    %v2433 = vunpack.c.h.b16 %v556
    %v2434 = vunpack.c.l.b16 %v557
    %v2435 = vunpack.c.h.b16 %v557
    %v2436 = vunpack.c.l.b16 %v558
    %v2437 = vunpack.c.h.b16 %v558
    %v2438 = vunpack.c.l.b16 %v559
    %v2439 = vunpack.c.h.b16 %v559
    %v2440 = vunpack.c.l.b16 %v560
    %v2441 = vunpack.c.h.b16 %v560
    %v2442 = vunpack.c.l.b16 %v561
    %v2443 = vunpack.c.h.b16 %v561
    %v2444 = vunpack.c.l.b16 %v562
    %v2445 = vunpack.c.h.b16 %v562
    %v2446 = vunpack.c.l.b16 %v563
    %v2447 = vunpack.c.h.b16 %v563
    %v2448 = vunpack.c.l.b16 %v564
    %v2449 = vunpack.c.h.b16 %v564
    %v2450 = vunpack.c.l.b16 %v565
    %v2451 = vunpack.c.h.b16 %v565
    %v2452 = vunpack.c.l.b16 %v566
    %v2453 = vunpack.c.h.b16 %v566
    %v2454 = vunpack.c.l.b16 %v567
    %v2455 = vunpack.c.h.b16 %v567
    %v2456 = vunpack.c.l.b16 %v568
    %v2457 = vunpack.c.h.b16 %v568
    %v2458 = vunpack.c.l.b16 %v569
    %v2459 = vunpack.c.h.b16 %v569
    %v2460 = vunpack.c.l.b16 %v570
    %v2461 = vunpack.c.h.b16 %v570
    %v2462 = vunpack.c.l.b16 %v571
    %v2463 = vunpack.c.h.b16 %v571
    %v2464 = vunpack.c.l.b16 %v572
    %v2465 = vunpack.c.h.b16 %v572
    %v2466 = vunpack.c.l.b16 %v573
    %v2467 = vunpack.c.h.b16 %v573
    %v2468 = vunpack.c.l.b16 %v574
    %v2469 = vunpack.c.h.b16 %v574
    %v2470 = vunpack.c.l.b16 %v575
    %v2471 = vunpack.c.h.b16 %v575
    %v2472 = vunpack.c.l.b16 %v576
    %v2473 = vunpack.c.h.b16 %v576
    %v2474 = vunpack.c.l.b16 %v577
    %v2475 = vunpack.c.h.b16 %v577
    %v2476 = vunpack.c.l.b16 %v578
    %v2477 = vunpack.c.h.b16 %v578
    %v2478 = vunpack.c.l.b16 %v579
    %v2479 = vunpack.c.h.b16 %v579
    %v2480 = vunpack.c.l.b16 %v580
    %v2481 = vunpack.c.h.b16 %v580
    %v2482 = vunpack.c.l.b16 %v581
    %v2483 = vunpack.c.h.b16 %v581
    %v2484 = vunpack.c.l.b16 %v582
    %v2485 = vunpack.c.h.b16 %v582
    %v2486 = vunpack.c.l.b16 %v583
    %v2487 = vunpack.c.h.b16 %v583
    %v2488 = vunpack.c.l.b16 %v584
    %v2489 = vunpack.c.h.b16 %v584
    %v2490 = vunpack.c.l.b16 %v585
    %v2491 = vunpack.c.h.b16 %v585
    %v2492 = vunpack.c.l.b16 %v586
    %v2493 = vunpack.c.h.b16 %v586
    %v2494 = vunpack.c.l.b16 %v587
    %v2495 = vunpack.c.h.b16 %v587
    %v2496 = vunpack.c.l.b16 %v588
    %v2497 = vunpack.c.h.b16 %v588
    %v2498 = vunpack.c.l.b16 %v589
    %v2499 = vunpack.c.h.b16 %v589
    %v2500 = vunpack.c.l.b16 %v590
    %v2501 = vunpack.c.h.b16 %v590
    %v2502 = vunpack.c.l.b16 %v591
    %v2503 = vunpack.c.h.b16 %v591
    %v2504 = vunpack.c.l.b16 %v592
    %v2505 = vunpack.c.h.b16 %v592
    %v2506 = vunpack.c.l.b16 %v593
    %v2507 = vunpack.c.h.b16 %v593
    %v2508 = vunpack.c.l.b16 %v594
    %v2509 = vunpack.c.h.b16 %v594
    %v2510 = vunpack.c.l.b16 %v595
    %v2511 = vunpack.c.h.b16 %v595
    %v2512 = vunpack.c.l.b16 %v596
    %v2513 = vunpack.c.h.b16 %v596
    %v2514 = vunpack.c.l.b16 %v597
    %v2515 = vunpack.c.h.b16 %v597
    %v2516 = vunpack.c.l.b16 %v598
    %v2517 = vunpack.c.h.b16 %v598
    %v2518 = vunpack.c.l.b16 %v599
    %v2519 = vunpack.c.h.b16 %v599
    %v2520 = vunpack.c.l.b16 %v600
    %v2521 = vunpack.c.h.b16 %v600
    %v2522 = vunpack.c.l.b16 %v601
    %v2523 = vunpack.c.h.b16 %v601
    %v2524 = vunpack.c.l.b16 %v602
    %v2525 = vunpack.c.h.b16 %v602
    %v2526 = vunpack.c.l.b16 %v603
    %v2527 = vunpack.c.h.b16 %v603
    %v2528 = vunpack.c.l.b16 %v604
    %v2529 = vunpack.c.h.b16 %v604
    %v2530 = vunpack.c.l.b16 %v605
    %v2531 = vunpack.c.h.b16 %v605
    %v2532 = vunpack.c.l.b16 %v606
    %v2533 = vunpack.c.h.b16 %v606
    %v2534 = vunpack.c.l.b16 %v607
    %v2535 = vunpack.c.h.b16 %v607
    %v2536 = vunpack.c.l.b16 %v608
    %v2537 = vunpack.c.h.b16 %v608
    %v2538 = vunpack.c.l.b16 %v609
    %v2539 = vunpack.c.h.b16 %v609
    %v2540 = vunpack.c.l.b16 %v610
    %v2541 = vunpack.c.h.b16 %v610
    %v2542 = vunpack.c.l.b16 %v611
    %v2543 = vunpack.c.h.b16 %v611
    %v2544 = vunpack.c.l.b16 %v612
    %v2545 = vunpack.c.h.b16 %v612
    %v2546 = vunpack.c.l.b16 %v613
    %v2547 = vunpack.c.h.b16 %v613
    %v2548 = vunpack.c.l.b16 %v614
    %v2549 = vunpack.c.h.b16 %v614
    %v2550 = vunpack.c.l.b16 %v615
    %v2551 = vunpack.c.h.b16 %v615
    %v2552 = vunpack.c.l.b16 %v616
    %v2553 = vunpack.c.h.b16 %v616
    %v2554 = vunpack.c.l.b16 %v617
    %v2555 = vunpack.c.h.b16 %v617
    %v2556 = vunpack.c.l.b16 %v618
    %v2557 = vunpack.c.h.b16 %v618
    %v2558 = vunpack.c.l.b16 %v619
    %v2559 = vunpack.c.h.b16 %v619
    %v2560 = vunpack.c.l.b16 %v620
    %v2561 = vunpack.c.h.b16 %v620
    %v2562 = vunpack.c.l.b16 %v621
    %v2563 = vunpack.c.h.b16 %v621
    %v2564 = vunpack.c.l.b16 %v622
    %v2565 = vunpack.c.h.b16 %v622
    %v2566 = vunpack.c.l.b16 %v623
    %v2567 = vunpack.c.h.b16 %v623
    %v2568 = vunpack.c.l.b16 %v624
    %v2569 = vunpack.c.h.b16 %v624
    %v2570 = vunpack.c.l.b16 %v625
    %v2571 = vunpack.c.h.b16 %v625
    %v2572 = vunpack.c.l.b16 %v626
    %v2573 = vunpack.c.h.b16 %v626
    %v2574 = vunpack.c.l.b16 %v627
    %v2575 = vunpack.c.h.b16 %v627
    %v2576 = vunpack.c.l.b16 %v628
    %v2577 = vunpack.c.h.b16 %v628
    %v2578 = vunpack.c.l.b16 %v629
    %v2579 = vunpack.c.h.b16 %v629
    %v2580 = vunpack.c.l.b16 %v630
    %v2581 = vunpack.c.h.b16 %v630
    %v2582 = vunpack.c.l.b16 %v631
    %v2583 = vunpack.c.h.b16 %v631
    %v2584 = vunpack.c.l.b16 %v632
    %v2585 = vunpack.c.h.b16 %v632
    %v2586 = vunpack.c.l.b16 %v633
    %v2587 = vunpack.c.h.b16 %v633
    %v2588 = vunpack.c.l.b16 %v634
    %v2589 = vunpack.c.h.b16 %v634
    %v2590 = vunpack.c.l.b16 %v635
    %v2591 = vunpack.c.h.b16 %v635
    %v2592 = vunpack.c.l.b16 %v636
    %v2593 = vunpack.c.h.b16 %v636
    %v2594 = vunpack.c.l.b16 %v637
    %v2595 = vunpack.c.h.b16 %v637
    %v2596 = vunpack.c.l.b16 %v638
    %v2597 = vunpack.c.h.b16 %v638
    %v2598 = vunpack.c.l.b16 %v639
    %v2599 = vunpack.c.h.b16 %v639
    %v2600 = vunpack.c.l.b16 %v640
    %v2601 = vunpack.c.h.b16 %v640
    %v2602 = vunpack.c.l.b16 %v641
    %v2603 = vunpack.c.h.b16 %v641
    %v2604 = vunpack.c.l.b16 %v642
    %v2605 = vunpack.c.h.b16 %v642
    %v2606 = vunpack.c.l.b16 %v643
    %v2607 = vunpack.c.h.b16 %v643
    %v2608 = vunpack.c.l.b16 %v644
    %v2609 = vunpack.c.h.b16 %v644
    %v2610 = vunpack.c.l.b16 %v645
    %v2611 = vunpack.c.h.b16 %v645
    %v2612 = vunpack.c.l.b16 %v646
    %v2613 = vunpack.c.h.b16 %v646
    %v2614 = vunpack.c.l.b16 %v647
    %v2615 = vunpack.c.h.b16 %v647
    %v2616 = vunpack.c.l.b16 %v648
    %v2617 = vunpack.c.h.b16 %v648
    %v2618 = vunpack.c.l.b16 %v649
    %v2619 = vunpack.c.h.b16 %v649
    %v2620 = vunpack.c.l.b16 %v650
    %v2621 = vunpack.c.h.b16 %v650
    %v2622 = vunpack.c.l.b16 %v651
    %v2623 = vunpack.c.h.b16 %v651
    %v2624 = vunpack.c.l.b16 %v652
    %v2625 = vunpack.c.h.b16 %v652
    %v2626 = vunpack.c.l.b16 %v653
    %v2627 = vunpack.c.h.b16 %v653
    %v2628 = vunpack.c.l.b16 %v654
    %v2629 = vunpack.c.h.b16 %v654
    %v2630 = vunpack.c.l.b16 %v655
    %v2631 = vunpack.c.h.b16 %v655
    %v2632 = vunpack.c.l.b16 %v656
    %v2633 = vunpack.c.h.b16 %v656
    %v2634 = vunpack.c.l.b16 %v657
    %v2635 = vunpack.c.h.b16 %v657
    %v2636 = vunpack.c.l.b16 %v658
    %v2637 = vunpack.c.h.b16 %v658
    %v2638 = vunpack.c.l.b16 %v659
    %v2639 = vunpack.c.h.b16 %v659
    %v2640 = vunpack.c.l.b16 %v660
    %v2641 = vunpack.c.h.b16 %v660
    %v2642 = vunpack.c.l.b16 %v661
    %v2643 = vunpack.c.h.b16 %v661
    %v2644 = vunpack.c.l.b16 %v662
    %v2645 = vunpack.c.h.b16 %v662
    %v2646 = vunpack.c.l.b16 %v663
    %v2647 = vunpack.c.h.b16 %v663
    %v2648 = vunpack.c.l.b16 %v664
    %v2649 = vunpack.c.h.b16 %v664
    %v2650 = vunpack.c.l.b16 %v665
    %v2651 = vunpack.c.h.b16 %v665
    %v2652 = vunpack.c.l.b16 %v666
    %v2653 = vunpack.c.h.b16 %v666
    %v2654 = vunpack.c.l.b16 %v667
    %v2655 = vunpack.c.h.b16 %v667
    %v2656 = vunpack.c.l.b16 %v668
    %v2657 = vunpack.c.h.b16 %v668
    %v2658 = vunpack.c.l.b16 %v669
    %v2659 = vunpack.c.h.b16 %v669
    %v2660 = vunpack.c.l.b16 %v670
    %v2661 = vunpack.c.h.b16 %v670
    %v2662 = vunpack.c.l.b16 %v671
    %v2663 = vunpack.c.h.b16 %v671
    %v2664 = vunpack.c.l.b16 %v672
    %v2665 = vunpack.c.h.b16 %v672
    %v2666 = vunpack.c.l.b16 %v673
    %v2667 = vunpack.c.h.b16 %v673
    %v2668 = vunpack.c.l.b16 %v674
    %v2669 = vunpack.c.h.b16 %v674
    %v2670 = vunpack.c.l.b16 %v675
    %v2671 = vunpack.c.h.b16 %v675
    %v2672 = vunpack.c.l.b16 %v676
    %v2673 = vunpack.c.h.b16 %v676
    %v2674 = vunpack.c.l.b16 %v677
    %v2675 = vunpack.c.h.b16 %v677
    %v2676 = vunpack.c.l.b16 %v678
    %v2677 = vunpack.c.h.b16 %v678
    %v2678 = vunpack.c.l.b16 %v679
    %v2679 = vunpack.c.h.b16 %v679
    %v2680 = vunpack.c.l.b16 %v680
    %v2681 = vunpack.c.h.b16 %v680
    %v2682 = vunpack.c.l.b16 %v681
    %v2683 = vunpack.c.h.b16 %v681
    %v2684 = vunpack.c.l.b16 %v682
    %v2685 = vunpack.c.h.b16 %v682
    %v2686 = vunpack.c.l.b16 %v683
    %v2687 = vunpack.c.h.b16 %v683
    %v2688 = vunpack.c.l.b16 %v684
    %v2689 = vunpack.c.h.b16 %v684
    %v2690 = vunpack.c.l.b16 %v685
    %v2691 = vunpack.c.h.b16 %v685
    %v2692 = vunpack.c.l.b16 %v686
    %v2693 = vunpack.c.h.b16 %v686
    %v2694 = vunpack.c.l.b16 %v687
    %v2695 = vunpack.c.h.b16 %v687
    %v2696 = vunpack.c.l.b16 %v688
    %v2697 = vunpack.c.h.b16 %v688
    %v2698 = vunpack.c.l.b16 %v689
    %v2699 = vunpack.c.h.b16 %v689
    %v2700 = vunpack.c.l.b16 %v690
    %v2701 = vunpack.c.h.b16 %v690
    %v2702 = vunpack.c.l.b16 %v691
    %v2703 = vunpack.c.h.b16 %v691
    %v2704 = vunpack.c.l.b16 %v692
    %v2705 = vunpack.c.h.b16 %v692
    %v2706 = vunpack.c.l.b16 %v693
    %v2707 = vunpack.c.h.b16 %v693
    %v2708 = vunpack.c.l.b16 %v694
    %v2709 = vunpack.c.h.b16 %v694
    %v2710 = vunpack.c.l.b16 %v695
    %v2711 = vunpack.c.h.b16 %v695
    %v2712 = vunpack.c.l.b16 %v696
    %v2713 = vunpack.c.h.b16 %v696
    %v2714 = vunpack.c.l.b16 %v697
    %v2715 = vunpack.c.h.b16 %v697
    %v2716 = vunpack.c.l.b16 %v698
    %v2717 = vunpack.c.h.b16 %v698
    %v2718 = vunpack.c.l.b16 %v699
    %v2719 = vunpack.c.h.b16 %v699
    %v2720 = vunpack.c.l.b16 %v700
    %v2721 = vunpack.c.h.b16 %v700
    %v2722 = vunpack.c.l.b16 %v701
    %v2723 = vunpack.c.h.b16 %v701
    %v2724 = vunpack.c.l.b16 %v702
    %v2725 = vunpack.c.h.b16 %v702
    %v2726 = vunpack.c.l.b16 %v703
    %v2727 = vunpack.c.h.b16 %v703
    %v2728 = vunpack.c.l.b16 %v704
    %v2729 = vunpack.c.h.b16 %v704
    %v2730 = vunpack.c.l.b16 %v705
    %v2731 = vunpack.c.h.b16 %v705
    %v2732 = vunpack.c.l.b16 %v706
    %v2733 = vunpack.c.h.b16 %v706
    %v2734 = vunpack.c.l.b16 %v707
    %v2735 = vunpack.c.h.b16 %v707
    %v2736 = vunpack.c.l.b16 %v708
    %v2737 = vunpack.c.h.b16 %v708
    %v2738 = vunpack.c.l.b16 %v709
    %v2739 = vunpack.c.h.b16 %v709
    %v2740 = vunpack.c.l.b16 %v710
    %v2741 = vunpack.c.h.b16 %v710
    %v2742 = vunpack.c.l.b16 %v711
    %v2743 = vunpack.c.h.b16 %v711
    %v2744 = vunpack.c.l.b16 %v712
    %v2745 = vunpack.c.h.b16 %v712
    %v2746 = vunpack.c.l.b16 %v713
    %v2747 = vunpack.c.h.b16 %v713
    %v2748 = vunpack.c.l.b16 %v714
    %v2749 = vunpack.c.h.b16 %v714
    %v2750 = vunpack.c.l.b16 %v715
    %v2751 = vunpack.c.h.b16 %v715
    %v2752 = vunpack.c.l.b16 %v716
    %v2753 = vunpack.c.h.b16 %v716
    %v2754 = vunpack.c.l.b16 %v717
    %v2755 = vunpack.c.h.b16 %v717
    %v2756 = vunpack.c.l.b16 %v718
    %v2757 = vunpack.c.h.b16 %v718
    %v2758 = vunpack.c.l.b16 %v719
    %v2759 = vunpack.c.h.b16 %v719
    %v2760 = vunpack.c.l.b16 %v720
    %v2761 = vunpack.c.h.b16 %v720
    %v2762 = vunpack.c.l.b16 %v721
    %v2763 = vunpack.c.h.b16 %v721
    %v2764 = vunpack.c.l.b16 %v722
    %v2765 = vunpack.c.h.b16 %v722
    %v2766 = vunpack.c.l.b16 %v723
    %v2767 = vunpack.c.h.b16 %v723
    %v2768 = vunpack.c.l.b16 %v724
    %v2769 = vunpack.c.h.b16 %v724
    %v2770 = vunpack.c.l.b16 %v725
    %v2771 = vunpack.c.h.b16 %v725
    %v2772 = vunpack.c.l.b16 %v726
    %v2773 = vunpack.c.h.b16 %v726
    %v2774 = vunpack.c.l.b16 %v727
    %v2775 = vunpack.c.h.b16 %v727
    %v2776 = vunpack.c.l.b16 %v728
    %v2777 = vunpack.c.h.b16 %v728
    %v2778 = vunpack.c.l.b16 %v729
    %v2779 = vunpack.c.h.b16 %v729
    %v2780 = vunpack.c.l.b16 %v730
    %v2781 = vunpack.c.h.b16 %v730
    %v2782 = vunpack.c.l.b16 %v731
    %v2783 = vunpack.c.h.b16 %v731
    %v2784 = vunpack.c.l.b16 %v732
    %v2785 = vunpack.c.h.b16 %v732
    %v2786 = vunpack.c.l.b16 %v733
    %v2787 = vunpack.c.h.b16 %v733
    %v2788 = vunpack.c.l.b16 %v734
    %v2789 = vunpack.c.h.b16 %v734
    %v2790 = vunpack.c.l.b16 %v735
    %v2791 = vunpack.c.h.b16 %v735
    %v2792 = vunpack.c.l.b16 %v736
    %v2793 = vunpack.c.h.b16 %v736
    %v2794 = vunpack.c.l.b16 %v737
    %v2795 = vunpack.c.h.b16 %v737
    %v2796 = vunpack.c.l.b16 %v738
    %v2797 = vunpack.c.h.b16 %v738
    %v2798 = vunpack.c.l.b16 %v739
    %v2799 = vunpack.c.h.b16 %v739
    %v2800 = vunpack.c.l.b16 %v740
    %v2801 = vunpack.c.h.b16 %v740
    %v2802 = vunpack.c.l.b16 %v741
    %v2803 = vunpack.c.h.b16 %v741
    %v2804 = vunpack.c.l.b16 %v742
    %v2805 = vunpack.c.h.b16 %v742
    %v2806 = vunpack.c.l.b16 %v743
    %v2807 = vunpack.c.h.b16 %v743
    %v2808 = vunpack.c.l.b16 %v744
    %v2809 = vunpack.c.h.b16 %v744
    %v2810 = vunpack.c.l.b16 %v745
    %v2811 = vunpack.c.h.b16 %v745
    %v2812 = vunpack.c.l.b16 %v746
    %v2813 = vunpack.c.h.b16 %v746
    %v2814 = vunpack.c.l.b16 %v747
    %v2815 = vunpack.c.h.b16 %v747
    %v2816 = vunpack.c.l.b16 %v748
    %v2817 = vunpack.c.h.b16 %v748
    %v2818 = vunpack.c.l.b16 %v749
    %v2819 = vunpack.c.h.b16 %v749
    %v2820 = vunpack.c.l.b16 %v750
    %v2821 = vunpack.c.h.b16 %v750
    %v2822 = vunpack.c.l.b16 %v751
    %v2823 = vunpack.c.h.b16 %v751
    %v2824 = vunpack.c.l.b16 %v752
    %v2825 = vunpack.c.h.b16 %v752
    %v2826 = vunpack.c.l.b16 %v753
    %v2827 = vunpack.c.h.b16 %v753
    %v2828 = vunpack.c.l.b16 %v754
    %v2829 = vunpack.c.h.b16 %v754
    %v2830 = vunpack.c.l.b16 %v755
    %v2831 = vunpack.c.h.b16 %v755
    %v2832 = vunpack.c.l.b16 %v756
    %v2833 = vunpack.c.h.b16 %v756
    %v2834 = vunpack.c.l.b16 %v757
    %v2835 = vunpack.c.h.b16 %v757
    %v2836 = vunpack.c.l.b16 %v758
    %v2837 = vunpack.c.h.b16 %v758
    %v2838 = vunpack.c.l.b16 %v759
    %v2839 = vunpack.c.h.b16 %v759
    %v2840 = vunpack.c.l.b16 %v760
    %v2841 = vunpack.c.h.b16 %v760
    %v2842 = vunpack.c.l.b16 %v761
    %v2843 = vunpack.c.h.b16 %v761
    %v2844 = vunpack.c.l.b16 %v762
    %v2845 = vunpack.c.h.b16 %v762
    %v2846 = vunpack.c.l.b16 %v763
    %v2847 = vunpack.c.h.b16 %v763
    %v2848 = vunpack.c.l.b16 %v764
    %v2849 = vunpack.c.h.b16 %v764
    %v2850 = vunpack.c.l.b16 %v765
    %v2851 = vunpack.c.h.b16 %v765
    %v2852 = vunpack.c.l.b16 %v766
    %v2853 = vunpack.c.h.b16 %v766
    %v2854 = vunpack.c.l.b16 %v767
    %v2855 = vunpack.c.h.b16 %v767
    %v2856 = vunpack.c.l.b16 %v768
    %v2857 = vunpack.c.h.b16 %v768
    %v2858 = vunpack.c.l.b16 %v769
    %v2859 = vunpack.c.h.b16 %v769
    %v2860 = vunpack.c.l.b16 %v770
    %v2861 = vunpack.c.h.b16 %v770
    %v2862 = vunpack.c.l.b16 %v771
    %v2863 = vunpack.c.h.b16 %v771
    %v2864 = vunpack.c.l.b16 %v772
    %v2865 = vunpack.c.h.b16 %v772
    %v2866 = vunpack.c.l.b16 %v773
    %v2867 = vunpack.c.h.b16 %v773
    %v2868 = vunpack.c.l.b16 %v774
    %v2869 = vunpack.c.h.b16 %v774
    %v2870 = vunpack.c.l.b16 %v775
    %v2871 = vunpack.c.h.b16 %v775
    %v2872 = vunpack.c.l.b16 %v776
    %v2873 = vunpack.c.h.b16 %v776
    %v2874 = vunpack.c.l.b16 %v777
    %v2875 = vunpack.c.h.b16 %v777
    %v2876 = vunpack.c.l.b16 %v778
    %v2877 = vunpack.c.h.b16 %v778
    %v2878 = vunpack.c.l.b16 %v779
    %v2879 = vunpack.c.h.b16 %v779
    %v2880 = vunpack.c.l.b16 %v780
    %v2881 = vunpack.c.h.b16 %v780
    %v2882 = vunpack.c.l.b16 %v781
    %v2883 = vunpack.c.h.b16 %v781
    %v2884 = vunpack.c.l.b16 %v782
    %v2885 = vunpack.c.h.b16 %v782
    %v2886 = vunpack.c.l.b16 %v783
    %v2887 = vunpack.c.h.b16 %v783
    %v2888 = vunpack.c.l.b16 %v784
    %v2889 = vunpack.c.h.b16 %v784
    %v2890 = vunpack.c.l.b16 %v785
    %v2891 = vunpack.c.h.b16 %v785
    %v2892 = vunpack.c.l.b16 %v786
    %v2893 = vunpack.c.h.b16 %v786
    %v2894 = vunpack.c.l.b16 %v787
    %v2895 = vunpack.c.h.b16 %v787
    %v2896 = vunpack.c.l.b16 %v788
    %v2897 = vunpack.c.h.b16 %v788
    %v2898 = vunpack.c.l.b16 %v789
    %v2899 = vunpack.c.h.b16 %v789
    %v2900 = vunpack.c.l.b16 %v790
    %v2901 = vunpack.c.h.b16 %v790
    %v2902 = vunpack.c.l.b16 %v791
    %v2903 = vunpack.c.h.b16 %v791
    %v2904 = vunpack.c.l.b16 %v792
    %v2905 = vunpack.c.h.b16 %v792
    %v2906 = vunpack.c.l.b16 %v793
    %v2907 = vunpack.c.h.b16 %v793
    %v2908 = vunpack.c.l.b16 %v794
    %v2909 = vunpack.c.h.b16 %v794
    %v2910 = vunpack.c.l.b16 %v795
    %v2911 = vunpack.c.h.b16 %v795
    %v2912 = vunpack.c.l.b16 %v796
    %v2913 = vunpack.c.h.b16 %v796
    %v2914 = vunpack.c.l.b16 %v797
    %v2915 = vunpack.c.h.b16 %v797
    %v2916 = vunpack.c.l.b16 %v798
    %v2917 = vunpack.c.h.b16 %v798
    %v2918 = vunpack.c.l.b16 %v799
    %v2919 = vunpack.c.h.b16 %v799
    %v2920 = vunpack.c.l.b16 %v800
    %v2921 = vunpack.c.h.b16 %v800
    %v2922 = vunpack.c.l.b16 %v801
    %v2923 = vunpack.c.h.b16 %v801
    %v2924 = vunpack.c.l.b16 %v802
    %v2925 = vunpack.c.h.b16 %v802
    %v2926 = vunpack.c.l.b16 %v803
    %v2927 = vunpack.c.h.b16 %v803
    %v2928 = vunpack.c.l.b16 %v804
    %v2929 = vunpack.c.h.b16 %v804
    %v2930 = vunpack.c.l.b16 %v805
    %v2931 = vunpack.c.h.b16 %v805
    %v2932 = vunpack.c.l.b16 %v806
    %v2933 = vunpack.c.h.b16 %v806
    %v2934 = vunpack.c.l.b16 %v807
    %v2935 = vunpack.c.h.b16 %v807
    %v2936 = vunpack.c.l.b16 %v808
    %v2937 = vunpack.c.h.b16 %v808
    %v2938 = vunpack.c.l.b16 %v809
    %v2939 = vunpack.c.h.b16 %v809
    %v2940 = vunpack.c.l.b16 %v810
    %v2941 = vunpack.c.h.b16 %v810
    %v2942 = vunpack.c.l.b16 %v811
    %v2943 = vunpack.c.h.b16 %v811
    %v2944 = vunpack.c.l.b16 %v812
    %v2945 = vunpack.c.h.b16 %v812
    %v2946 = vunpack.c.l.b16 %v813
    %v2947 = vunpack.c.h.b16 %v813
    %v2948 = vunpack.c.l.b16 %v814
    %v2949 = vunpack.c.h.b16 %v814
    %v2950 = vunpack.c.l.b16 %v815
    %v2951 = vunpack.c.h.b16 %v815
    %v2952 = vunpack.c.l.b16 %v816
    %v2953 = vunpack.c.h.b16 %v816
    %v2954 = vunpack.c.l.b16 %v817
    %v2955 = vunpack.c.h.b16 %v817
    %v2956 = vunpack.c.l.b16 %v818
    %v2957 = vunpack.c.h.b16 %v818
    %v2958 = vunpack.c.l.b16 %v819
    %v2959 = vunpack.c.h.b16 %v819
    %v2960 = vunpack.c.l.b16 %v820
    %v2961 = vunpack.c.h.b16 %v820
    %v2962 = vunpack.c.l.b16 %v821
    %v2963 = vunpack.c.h.b16 %v821
    %v2964 = vunpack.c.l.b16 %v822
    %v2965 = vunpack.c.h.b16 %v822
    %v2966 = vunpack.c.l.b16 %v823
    %v2967 = vunpack.c.h.b16 %v823
    %v2968 = vunpack.c.l.b16 %v824
    %v2969 = vunpack.c.h.b16 %v824
    %v2970 = vunpack.c.l.b16 %v825
    %v2971 = vunpack.c.h.b16 %v825
    %v2972 = vunpack.c.l.b16 %v826
    %v2973 = vunpack.c.h.b16 %v826
    %v2974 = vunpack.c.l.b16 %v827
    %v2975 = vunpack.c.h.b16 %v827
    %v2976 = vunpack.c.l.b16 %v828
    %v2977 = vunpack.c.h.b16 %v828
    %v2978 = vunpack.c.l.b16 %v829
    %v2979 = vunpack.c.h.b16 %v829
    %v2980 = vunpack.c.l.b16 %v830
    %v2981 = vunpack.c.h.b16 %v830
    %v2982 = vunpack.c.l.b16 %v831
    %v2983 = vunpack.c.h.b16 %v831
    %v2984 = vunpack.c.l.b16 %v832
    %v2985 = vunpack.c.h.b16 %v832
    %v2986 = vunpack.c.l.b16 %v833
    %v2987 = vunpack.c.h.b16 %v833
    %v2988 = vunpack.c.l.b16 %v834
    %v2989 = vunpack.c.h.b16 %v834
    %v2990 = vunpack.c.l.b16 %v835
    %v2991 = vunpack.c.h.b16 %v835
    %v2992 = vunpack.c.l.b16 %v836
    %v2993 = vunpack.c.h.b16 %v836
    %v2994 = vunpack.c.l.b16 %v837
    %v2995 = vunpack.c.h.b16 %v837
    %v2996 = vunpack.c.l.b16 %v838
    %v2997 = vunpack.c.h.b16 %v838
    %v2998 = vunpack.c.l.b16 %v839
    %v2999 = vunpack.c.h.b16 %v839
    %v3000 = vunpack.c.l.b16 %v840
    %v3001 = vunpack.c.h.b16 %v840
    %v3002 = vunpack.c.l.b16 %v841
    %v3003 = vunpack.c.h.b16 %v841
    %v3004 = vunpack.c.l.b16 %v842
    %v3005 = vunpack.c.h.b16 %v842
    %v3006 = vunpack.c.l.b16 %v843
    %v3007 = vunpack.c.h.b16 %v843
    %v3008 = vunpack.c.l.b16 %v844
    %v3009 = vunpack.c.h.b16 %v844
    %v3010 = vunpack.c.l.b16 %v845
    %v3011 = vunpack.c.h.b16 %v845
    %v3012 = vunpack.c.l.b16 %v846
    %v3013 = vunpack.c.h.b16 %v846
    %v3014 = vunpack.c.l.b16 %v847
    %v3015 = vunpack.c.h.b16 %v847
    %v3016 = vunpack.c.l.b16 %v848
    %v3017 = vunpack.c.h.b16 %v848
    %v3018 = vunpack.c.l.b16 %v849
    %v3019 = vunpack.c.h.b16 %v849
    %v3020 = vunpack.c.l.b16 %v850
    %v3021 = vunpack.c.h.b16 %v850
    %v3022 = vunpack.c.l.b16 %v851
    %v3023 = vunpack.c.h.b16 %v851
    %v3024 = vunpack.c.l.b16 %v852
    %v3025 = vunpack.c.h.b16 %v852
    %v3026 = vunpack.c.l.b16 %v853
    %v3027 = vunpack.c.h.b16 %v853
    %v3028 = vunpack.c.l.b16 %v854
    %v3029 = vunpack.c.h.b16 %v854
    %v3030 = vunpack.c.l.b16 %v855
    %v3031 = vunpack.c.h.b16 %v855
    %v3032 = vunpack.c.l.b16 %v856
    %v3033 = vunpack.c.h.b16 %v856
    %v3034 = vunpack.c.l.b16 %v857
    %v3035 = vunpack.c.h.b16 %v857
    %v3036 = vunpack.c.l.b16 %v858
    %v3037 = vunpack.c.h.b16 %v858
    %v3038 = vunpack.c.l.b16 %v859
    %v3039 = vunpack.c.h.b16 %v859
    %v3040 = vunpack.c.l.b16 %v860
    %v3041 = vunpack.c.h.b16 %v860
    %v3042 = vunpack.c.l.b16 %v861
    %v3043 = vunpack.c.h.b16 %v861
    %v3044 = vunpack.c.l.b16 %v862
    %v3045 = vunpack.c.h.b16 %v862
    %v3046 = vunpack.c.l.b16 %v863
    %v3047 = vunpack.c.h.b16 %v863
    %v3048 = vunpack.c.l.b16 %v864
    %v3049 = vunpack.c.h.b16 %v864
    %v3050 = vunpack.c.l.b16 %v865
    %v3051 = vunpack.c.h.b16 %v865
    %v3052 = vunpack.c.l.b16 %v866
    %v3053 = vunpack.c.h.b16 %v866
    %v3054 = vunpack.c.l.b16 %v867
    %v3055 = vunpack.c.h.b16 %v867
    %v3056 = vunpack.c.l.b16 %v868
    %v3057 = vunpack.c.h.b16 %v868
    %v3058 = vunpack.c.l.b16 %v869
    %v3059 = vunpack.c.h.b16 %v869
    %v3060 = vunpack.c.l.b16 %v870
    %v3061 = vunpack.c.h.b16 %v870
    %v3062 = vunpack.c.l.b16 %v871
    %v3063 = vunpack.c.h.b16 %v871
    %v3064 = vunpack.c.l.b16 %v872
    %v3065 = vunpack.c.h.b16 %v872
    %v3066 = vunpack.c.l.b16 %v873
    %v3067 = vunpack.c.h.b16 %v873
    %v3068 = vunpack.c.l.b16 %v874
    %v3069 = vunpack.c.h.b16 %v874
    %v3070 = vunpack.c.l.b16 %v875
    %v3071 = vunpack.c.h.b16 %v875
    %v3072 = vunpack.c.l.b16 %v876
    %v3073 = vunpack.c.h.b16 %v876
    %v3074 = vunpack.c.l.b16 %v877
    %v3075 = vunpack.c.h.b16 %v877
    %v3076 = vunpack.c.l.b16 %v878
    %v3077 = vunpack.c.h.b16 %v878
    %v3078 = vunpack.c.l.b16 %v879
    %v3079 = vunpack.c.h.b16 %v879
    %v3080 = vunpack.c.l.b16 %v880
    %v3081 = vunpack.c.h.b16 %v880
    %v3082 = vunpack.c.l.b16 %v881
    %v3083 = vunpack.c.h.b16 %v881
    %v3084 = vunpack.c.l.b16 %v882
    %v3085 = vunpack.c.h.b16 %v882
    %v3086 = vunpack.c.l.b16 %v883
    %v3087 = vunpack.c.h.b16 %v883
    %v3088 = vunpack.c.l.b16 %v884
    %v3089 = vunpack.c.h.b16 %v884
    %v3090 = vunpack.c.l.b16 %v885
    %v3091 = vunpack.c.h.b16 %v885
    %v3092 = vunpack.c.l.b16 %v886
    %v3093 = vunpack.c.h.b16 %v886
    %v3094 = vunpack.c.l.b16 %v887
    %v3095 = vunpack.c.h.b16 %v887
    %v3096 = vunpack.c.l.b16 %v888
    %v3097 = vunpack.c.h.b16 %v888
    %v3098 = vunpack.c.l.b16 %v889
    %v3099 = vunpack.c.h.b16 %v889
    %v3100 = vunpack.c.l.b16 %v890
    %v3101 = vunpack.c.h.b16 %v890
    %v3102 = vunpack.c.l.b16 %v891
    %v3103 = vunpack.c.h.b16 %v891
    %v3104 = vunpack.c.l.b16 %v892
    %v3105 = vunpack.c.h.b16 %v892
    %v3106 = vunpack.c.l.b16 %v893
    %v3107 = vunpack.c.h.b16 %v893
    %v3108 = vunpack.c.l.b16 %v894
    %v3109 = vunpack.c.h.b16 %v894
    %v3110 = vunpack.c.l.b16 %v895
    %v3111 = vunpack.c.h.b16 %v895
    %v3112 = vunpack.c.l.b16 %v896
    %v3113 = vunpack.c.h.b16 %v896
    %v3114 = vunpack.c.l.b16 %v897
    %v3115 = vunpack.c.h.b16 %v897
    %v3116 = vunpack.c.l.b16 %v898
    %v3117 = vunpack.c.h.b16 %v898
    %v3118 = vunpack.c.l.b16 %v899
    %v3119 = vunpack.c.h.b16 %v899
    %v3120 = vunpack.c.l.b16 %v900
    %v3121 = vunpack.c.h.b16 %v900
    %v3122 = vunpack.c.l.b16 %v901
    %v3123 = vunpack.c.h.b16 %v901
    %v3124 = vunpack.c.l.b16 %v902
    %v3125 = vunpack.c.h.b16 %v902
    %v3126 = vunpack.c.l.b16 %v903
    %v3127 = vunpack.c.h.b16 %v903
    %v3128 = vunpack.c.l.b16 %v904
    %v3129 = vunpack.c.h.b16 %v904
    %v3130 = vunpack.c.l.b16 %v905
    %v3131 = vunpack.c.h.b16 %v905
    %v3132 = vunpack.c.l.b16 %v906
    %v3133 = vunpack.c.h.b16 %v906
    %v3134 = vunpack.c.l.b16 %v907
    %v3135 = vunpack.c.h.b16 %v907
    %v3136 = vunpack.c.l.b16 %v908
    %v3137 = vunpack.c.h.b16 %v908
    %v3138 = vunpack.c.l.b16 %v909
    %v3139 = vunpack.c.h.b16 %v909
    %v3140 = vunpack.c.l.b16 %v910
    %v3141 = vunpack.c.h.b16 %v910
    %v3142 = vunpack.c.l.b16 %v911
    %v3143 = vunpack.c.h.b16 %v911
    %v3144 = vunpack.c.l.b16 %v912
    %v3145 = vunpack.c.h.b16 %v912
    %v3146 = vunpack.c.l.b16 %v913
    %v3147 = vunpack.c.h.b16 %v913
    %v3148 = vunpack.c.l.b16 %v914
    %v3149 = vunpack.c.h.b16 %v914
    %v3150 = vunpack.c.l.b16 %v915
    %v3151 = vunpack.c.h.b16 %v915
    %v3152 = vunpack.c.l.b16 %v916
    %v3153 = vunpack.c.h.b16 %v916
    %v3154 = vunpack.c.l.b16 %v917
    %v3155 = vunpack.c.h.b16 %v917
    %v3156 = vunpack.c.l.b16 %v918
    %v3157 = vunpack.c.h.b16 %v918
    %v3158 = vunpack.c.l.b16 %v919
    %v3159 = vunpack.c.h.b16 %v919
    %v3160 = vunpack.c.l.b16 %v920
    %v3161 = vunpack.c.h.b16 %v920
    %v3162 = vunpack.c.l.b16 %v921
    %v3163 = vunpack.c.h.b16 %v921
    %v3164 = vunpack.c.l.b16 %v922
    %v3165 = vunpack.c.h.b16 %v922
    %v3166 = vunpack.c.l.b16 %v923
    %v3167 = vunpack.c.h.b16 %v923
    %v3168 = vunpack.c.l.b16 %v924
    %v3169 = vunpack.c.h.b16 %v924
    %v3170 = vunpack.c.l.b16 %v925
    %v3171 = vunpack.c.h.b16 %v925
    %v3172 = vunpack.c.l.b16 %v926
    %v3173 = vunpack.c.h.b16 %v926
    %v3174 = vunpack.c.l.b16 %v927
    %v3175 = vunpack.c.h.b16 %v927
    %v3176 = vunpack.c.l.b16 %v928
    %v3177 = vunpack.c.h.b16 %v928
    %v3178 = vunpack.c.l.b16 %v929
    %v3179 = vunpack.c.h.b16 %v929
    %v3180 = vunpack.c.l.b16 %v930
    %v3181 = vunpack.c.h.b16 %v930
    %v3182 = vunpack.c.l.b16 %v931
    %v3183 = vunpack.c.h.b16 %v931
    %v3184 = vunpack.c.l.b16 %v932
    %v3185 = vunpack.c.h.b16 %v932
    %v3186 = vunpack.c.l.b16 %v933
    %v3187 = vunpack.c.h.b16 %v933
    %v3188 = vunpack.c.l.b16 %v934
    %v3189 = vunpack.c.h.b16 %v934
    %v3190 = vunpack.c.l.b16 %v935
    %v3191 = vunpack.c.h.b16 %v935
    %v3192 = vunpack.c.l.b16 %v936
    %v3193 = vunpack.c.h.b16 %v936
    %v3194 = vunpack.c.l.b16 %v937
    %v3195 = vunpack.c.h.b16 %v937
    %v3196 = vunpack.c.l.b16 %v938
    %v3197 = vunpack.c.h.b16 %v938
    %v3198 = vunpack.c.l.b16 %v939
    %v3199 = vunpack.c.h.b16 %v939
    %v3200 = vunpack.c.l.b16 %v940
    %v3201 = vunpack.c.h.b16 %v940
    %v3202 = vunpack.c.l.b16 %v941
    %v3203 = vunpack.c.h.b16 %v941
    %v3204 = vunpack.c.l.b16 %v942
    %v3205 = vunpack.c.h.b16 %v942
    %v3206 = vunpack.c.l.b16 %v943
    %v3207 = vunpack.c.h.b16 %v943
    %v3208 = vunpack.c.l.b16 %v944
    %v3209 = vunpack.c.h.b16 %v944
    %v3210 = vunpack.c.l.b16 %v945
    %v3211 = vunpack.c.h.b16 %v945
    %v3212 = vunpack.c.l.b16 %v946
    %v3213 = vunpack.c.h.b16 %v946
    %v3214 = vunpack.c.l.b16 %v947
    %v3215 = vunpack.c.h.b16 %v947
    %v3216 = vunpack.c.l.b16 %v948
    %v3217 = vunpack.c.h.b16 %v948
    %v3218 = vunpack.c.l.b16 %v949
    %v3219 = vunpack.c.h.b16 %v949
    %v3220 = vunpack.c.l.b16 %v950
    %v3221 = vunpack.c.h.b16 %v950
    %v3222 = vunpack.c.l.b16 %v951
    %v3223 = vunpack.c.h.b16 %v951
    %v3224 = vunpack.c.l.b16 %v952
    %v3225 = vunpack.c.h.b16 %v952
    %v3226 = vunpack.c.l.b16 %v953
    %v3227 = vunpack.c.h.b16 %v953
    %v3228 = vunpack.c.l.b16 %v954
    %v3229 = vunpack.c.h.b16 %v954
    %v3230 = vunpack.c.l.b16 %v955
    %v3231 = vunpack.c.h.b16 %v955
    %v3232 = vunpack.c.l.b16 %v956
    %v3233 = vunpack.c.h.b16 %v956
    %v3234 = vunpack.c.l.b16 %v957
    %v3235 = vunpack.c.h.b16 %v957
    %v3236 = vunpack.c.l.b16 %v958
    %v3237 = vunpack.c.h.b16 %v958
    %v3238 = vunpack.c.l.b16 %v959
    %v3239 = vunpack.c.h.b16 %v959
    %v3240 = vunpack.c.l.b16 %v960
    %v3241 = vunpack.c.h.b16 %v960
    %v3242 = vunpack.c.l.b16 %v961
    %v3243 = vunpack.c.h.b16 %v961
    %v3244 = vunpack.c.l.b16 %v962
    %v3245 = vunpack.c.h.b16 %v962
    %v3246 = vunpack.c.l.b16 %v963
    %v3247 = vunpack.c.h.b16 %v963
    %v3248 = vunpack.c.l.b16 %v964
    %v3249 = vunpack.c.h.b16 %v964
    %v3250 = vunpack.c.l.b16 %v965
    %v3251 = vunpack.c.h.b16 %v965
    %v3252 = vunpack.c.l.b16 %v966
    %v3253 = vunpack.c.h.b16 %v966
    %v3254 = vunpack.c.l.b16 %v967
    %v3255 = vunpack.c.h.b16 %v967
    %v3256 = vunpack.c.l.b16 %v968
    %v3257 = vunpack.c.h.b16 %v968
    %v3258 = vunpack.c.l.b16 %v969
    %v3259 = vunpack.c.h.b16 %v969
    %v3260 = vunpack.c.l.b16 %v970
    %v3261 = vunpack.c.h.b16 %v970
    %v3262 = vunpack.c.l.b16 %v971
    %v3263 = vunpack.c.h.b16 %v971
    %v3264 = vunpack.c.l.b16 %v972
    %v3265 = vunpack.c.h.b16 %v972
    %v3266 = vunpack.c.l.b16 %v973
    %v3267 = vunpack.c.h.b16 %v973
    %v3268 = vunpack.c.l.b16 %v974
    %v3269 = vunpack.c.h.b16 %v974
    %v3270 = vunpack.c.l.b16 %v975
    %v3271 = vunpack.c.h.b16 %v975
    %v3272 = vunpack.c.l.b16 %v976
    %v3273 = vunpack.c.h.b16 %v976
    %v3274 = vunpack.c.l.b16 %v977
    %v3275 = vunpack.c.h.b16 %v977
    %v3276 = vunpack.c.l.b16 %v978
    %v3277 = vunpack.c.h.b16 %v978
    %v3278 = vunpack.c.l.b16 %v979
    %v3279 = vunpack.c.h.b16 %v979
    %v3280 = vunpack.c.l.b16 %v980
    %v3281 = vunpack.c.h.b16 %v980
    %v3282 = vunpack.c.l.b16 %v981
    %v3283 = vunpack.c.h.b16 %v981
    %v3284 = vunpack.c.l.b16 %v982
    %v3285 = vunpack.c.h.b16 %v982
    %v3286 = vunpack.c.l.b16 %v983
    %v3287 = vunpack.c.h.b16 %v983
    %v3288 = vunpack.c.l.b16 %v984
    %v3289 = vunpack.c.h.b16 %v984
    %v3290 = vunpack.c.l.b16 %v985
    %v3291 = vunpack.c.h.b16 %v985
    %v3292 = vunpack.c.l.b16 %v986
    %v3293 = vunpack.c.h.b16 %v986
    %v3294 = vunpack.c.l.b16 %v987
    %v3295 = vunpack.c.h.b16 %v987
    %v3296 = vunpack.c.l.b16 %v988
    %v3297 = vunpack.c.h.b16 %v988
    %v3298 = vunpack.c.l.b16 %v989
    %v3299 = vunpack.c.h.b16 %v989
    %v3300 = vunpack.c.l.b16 %v990
    %v3301 = vunpack.c.h.b16 %v990
    %v3302 = vunpack.c.l.b16 %v991
    %v3303 = vunpack.c.h.b16 %v991
    %v3304 = vunpack.c.l.b16 %v992
    %v3305 = vunpack.c.h.b16 %v992
    %v3306 = vunpack.c.l.b16 %v993
    %v3307 = vunpack.c.h.b16 %v993
    %v3308 = vpack.c.b16 %v1776, %v1772
    %v3309 = vpack.c.b16 %v1777, %v1773
    %v3310 = vpack.c.b16 %v1778, %v1774
    %v3311 = vpack.c.b16 %v1779, %v1775
    %v3312 = vpack.c.b16 %v1784, %v1780
    %v3313 = vpack.c.b16 %v1785, %v1781
    %v3314 = vpack.c.b16 %v1786, %v1782
    %v3315 = vpack.c.b16 %v1787, %v1783
    %v3316 = vpack.c.b16 %v1792, %v1788
    %v3317 = vpack.c.b16 %v1793, %v1789
    %v3318 = vpack.c.b16 %v1794, %v1790
    %v3319 = vpack.c.b16 %v1795, %v1791
    %v3320 = vpack.c.b16 %v1800, %v1796
    %v3321 = vpack.c.b16 %v1801, %v1797
    %v3322 = vpack.c.b16 %v1802, %v1798
    %v3323 = vpack.c.b16 %v1803, %v1799
    %v3324 = vpack.c.b16 %v1808, %v1804
    %v3325 = vpack.c.b16 %v1809, %v1805
    %v3326 = vpack.c.b16 %v1810, %v1806
    %v3327 = vpack.c.b16 %v1811, %v1807
    %v3328 = vpack.c.b16 %v1816, %v1812
    %v3329 = vpack.c.b16 %v1817, %v1813
    %v3330 = vpack.c.b16 %v1818, %v1814
    %v3331 = vpack.c.b16 %v1819, %v1815
    %v3332 = vpack.c.b16 %v1824, %v1820
    %v3333 = vpack.c.b16 %v1825, %v1821
    %v3334 = vpack.c.b16 %v1826, %v1822
    %v3335 = vpack.c.b16 %v1827, %v1823
    %v3336 = vpack.c.b16 %v1832, %v1828
    %v3337 = vpack.c.b16 %v1833, %v1829
    %v3338 = vpack.c.b16 %v1834, %v1830
    %v3339 = vpack.c.b16 %v1835, %v1831
    %v3340 = vpack.c.b16 %v1840, %v1836
    %v3341 = vpack.c.b16 %v1841, %v1837
    %v3342 = vpack.c.b16 %v1842, %v1838
    %v3343 = vpack.c.b16 %v1843, %v1839
    %v3344 = vpack.c.b16 %v1848, %v1844
    %v3345 = vpack.c.b16 %v1849, %v1845
    %v3346 = vpack.c.b16 %v1850, %v1846
    %v3347 = vpack.c.b16 %v1851, %v1847
    %v3348 = vpack.c.b16 %v1856, %v1852
    %v3349 = vpack.c.b16 %v1857, %v1853
    %v3350 = vpack.c.b16 %v1858, %v1854
    %v3351 = vpack.c.b16 %v1859, %v1855
    %v3352 = vpack.c.b16 %v1864, %v1860
    %v3353 = vpack.c.b16 %v1865, %v1861
    %v3354 = vpack.c.b16 %v1866, %v1862
    %v3355 = vpack.c.b16 %v1867, %v1863
    %v3356 = vpack.c.b16 %v1872, %v1868
    %v3357 = vpack.c.b16 %v1873, %v1869
    %v3358 = vpack.c.b16 %v1874, %v1870
    %v3359 = vpack.c.b16 %v1875, %v1871
    %v3360 = vpack.c.b16 %v1880, %v1876
    %v3361 = vpack.c.b16 %v1881, %v1877
    %v3362 = vpack.c.b16 %v1882, %v1878
    %v3363 = vpack.c.b16 %v1883, %v1879
    %v3364 = vpack.c.b16 %v1888, %v1884
    %v3365 = vpack.c.b16 %v1889, %v1885
    %v3366 = vpack.c.b16 %v1890, %v1886
    %v3367 = vpack.c.b16 %v1891, %v1887
    %v3368 = vpack.c.b16 %v1896, %v1892
    %v3369 = vpack.c.b16 %v1897, %v1893
    %v3370 = vpack.c.b16 %v1898, %v1894
    %v3371 = vpack.c.b16 %v1899, %v1895
    %v3372 = vpack.c.b16 %v1904, %v1900
    %v3373 = vpack.c.b16 %v1905, %v1901
    %v3374 = vpack.c.b16 %v1906, %v1902
    %v3375 = vpack.c.b16 %v1907, %v1903
    %v3376 = vpack.c.b16 %v1912, %v1908
    %v3377 = vpack.c.b16 %v1913, %v1909
    %v3378 = vpack.c.b16 %v1914, %v1910
    %v3379 = vpack.c.b16 %v1915, %v1911
    %v3380 = vpack.c.b16 %v1920, %v1916
    %v3381 = vpack.c.b16 %v1921, %v1917
    %v3382 = vpack.c.b16 %v1922, %v1918
    %v3383 = vpack.c.b16 %v1923, %v1919
    %v3384 = vpack.c.b16 %v1928, %v1924
    %v3385 = vpack.c.b16 %v1929, %v1925
    %v3386 = vpack.c.b16 %v1930, %v1926
    %v3387 = vpack.c.b16 %v1931, %v1927
    %v3388 = vpack.c.b16 %v1936, %v1932
    %v3389 = vpack.c.b16 %v1937, %v1933
    %v3390 = vpack.c.b16 %v1938, %v1934
    %v3391 = vpack.c.b16 %v1939, %v1935
    %v3392 = vpack.c.b16 %v1944, %v1940
    %v3393 = vpack.c.b16 %v1945, %v1941
    %v3394 = vpack.c.b16 %v1946, %v1942
    %v3395 = vpack.c.b16 %v1947, %v1943
    %v3396 = vpack.c.b16 %v1952, %v1948
    %v3397 = vpack.c.b16 %v1953, %v1949
    %v3398 = vpack.c.b16 %v1954, %v1950
    %v3399 = vpack.c.b16 %v1955, %v1951
    %v3400 = vpack.c.b16 %v1960, %v1956
    %v3401 = vpack.c.b16 %v1961, %v1957
    %v3402 = vpack.c.b16 %v1962, %v1958
    %v3403 = vpack.c.b16 %v1963, %v1959
    %v3404 = vpack.c.b16 %v1968, %v1964
    %v3405 = vpack.c.b16 %v1969, %v1965
    %v3406 = vpack.c.b16 %v1970, %v1966
    %v3407 = vpack.c.b16 %v1971, %v1967
    %v3408 = vpack.c.b16 %v1976, %v1972
    %v3409 = vpack.c.b16 %v1977, %v1973
    %v3410 = vpack.c.b16 %v1978, %v1974
    %v3411 = vpack.c.b16 %v1979, %v1975
    %v3412 = vpack.c.b16 %v1984, %v1980
    %v3413 = vpack.c.b16 %v1985, %v1981
    %v3414 = vpack.c.b16 %v1986, %v1982
    %v3415 = vpack.c.b16 %v1987, %v1983
    %v3416 = vpack.c.b16 %v1992, %v1988
    %v3417 = vpack.c.b16 %v1993, %v1989
    %v3418 = vpack.c.b16 %v1994, %v1990
    %v3419 = vpack.c.b16 %v1995, %v1991
    %v3420 = vpack.c.b16 %v2000, %v1996
    %v3421 = vpack.c.b16 %v2001, %v1997
    %v3422 = vpack.c.b16 %v2002, %v1998
    %v3423 = vpack.c.b16 %v2003, %v1999
    %v3424 = vpack.c.b16 %v2008, %v2004
    %v3425 = vpack.c.b16 %v2009, %v2005
    %v3426 = vpack.c.b16 %v2010, %v2006
    %v3427 = vpack.c.b16 %v2011, %v2007
    %v3428 = vpack.c.b16 %v2016, %v2012
    %v3429 = vpack.c.b16 %v2017, %v2013
    %v3430 = vpack.c.b16 %v2018, %v2014
    %v3431 = vpack.c.b16 %v2019, %v2015
    %v3432 = vpack.c.b16 %v2024, %v2020
    %v3433 = vpack.c.b16 %v2025, %v2021
    %v3434 = vpack.c.b16 %v2026, %v2022
    %v3435 = vpack.c.b16 %v2027, %v2023
    %v3436 = vpack.c.b16 %v2032, %v2028
    %v3437 = vpack.c.b16 %v2033, %v2029
    %v3438 = vpack.c.b16 %v2034, %v2030
    %v3439 = vpack.c.b16 %v2035, %v2031
    %v3440 = vpack.c.b16 %v2040, %v2036
    %v3441 = vpack.c.b16 %v2041, %v2037
    %v3442 = vpack.c.b16 %v2042, %v2038
    %v3443 = vpack.c.b16 %v2043, %v2039
    %v3444 = vpack.c.b16 %v2048, %v2044
    %v3445 = vpack.c.b16 %v2049, %v2045
    %v3446 = vpack.c.b16 %v2050, %v2046
    %v3447 = vpack.c.b16 %v2051, %v2047
    %v3448 = vpack.c.b16 %v2056, %v2052
    %v3449 = vpack.c.b16 %v2057, %v2053
    %v3450 = vpack.c.b16 %v2058, %v2054
    %v3451 = vpack.c.b16 %v2059, %v2055
    %v3452 = vpack.c.b16 %v2064, %v2060
    %v3453 = vpack.c.b16 %v2065, %v2061
    %v3454 = vpack.c.b16 %v2066, %v2062
    %v3455 = vpack.c.b16 %v2067, %v2063
    %v3456 = vpack.c.b16 %v2072, %v2068
    %v3457 = vpack.c.b16 %v2073, %v2069
    %v3458 = vpack.c.b16 %v2074, %v2070
    %v3459 = vpack.c.b16 %v2075, %v2071
    %v3460 = vpack.c.b16 %v2080, %v2076
    %v3461 = vpack.c.b16 %v2081, %v2077
    %v3462 = vpack.c.b16 %v2082, %v2078
    %v3463 = vpack.c.b16 %v2083, %v2079
    %v3464 = vpack.c.b16 %v2088, %v2084
    %v3465 = vpack.c.b16 %v2089, %v2085
    %v3466 = vpack.c.b16 %v2090, %v2086
    %v3467 = vpack.c.b16 %v2091, %v2087
    %v3468 = vpack.c.b16 %v2096, %v2092
    %v3469 = vpack.c.b16 %v2097, %v2093
    %v3470 = vpack.c.b16 %v2098, %v2094
    %v3471 = vpack.c.b16 %v2099, %v2095
    %v3472 = vpack.c.b16 %v2104, %v2100
    %v3473 = vpack.c.b16 %v2105, %v2101
    %v3474 = vpack.c.b16 %v2106, %v2102
    %v3475 = vpack.c.b16 %v2107, %v2103
    %v3476 = vpack.c.b16 %v2112, %v2108
    %v3477 = vpack.c.b16 %v2113, %v2109
    %v3478 = vpack.c.b16 %v2114, %v2110
    %v3479 = vpack.c.b16 %v2115, %v2111
    %v3480 = vpack.c.b16 %v2120, %v2116
    %v3481 = vpack.c.b16 %v2121, %v2117
    %v3482 = vpack.c.b16 %v2122, %v2118
    %v3483 = vpack.c.b16 %v2123, %v2119
    %v3484 = vpack.c.b16 %v2128, %v2124
    %v3485 = vpack.c.b16 %v2129, %v2125
    %v3486 = vpack.c.b16 %v2130, %v2126
    %v3487 = vpack.c.b16 %v2131, %v2127
    %v3488 = vpack.c.b16 %v2136, %v2132
    %v3489 = vpack.c.b16 %v2137, %v2133
    %v3490 = vpack.c.b16 %v2138, %v2134
    %v3491 = vpack.c.b16 %v2139, %v2135
    %v3492 = vpack.c.b16 %v2144, %v2140
    %v3493 = vpack.c.b16 %v2145, %v2141
    %v3494 = vpack.c.b16 %v2146, %v2142
    %v3495 = vpack.c.b16 %v2147, %v2143
    %v3496 = vpack.c.b16 %v2152, %v2148
    %v3497 = vpack.c.b16 %v2153, %v2149
    %v3498 = vpack.c.b16 %v2154, %v2150
    %v3499 = vpack.c.b16 %v2155, %v2151
    %v3500 = vpack.c.b16 %v2160, %v2156
    %v3501 = vpack.c.b16 %v2161, %v2157
    %v3502 = vpack.c.b16 %v2162, %v2158
    %v3503 = vpack.c.b16 %v2163, %v2159
    %v3504 = vpack.c.b16 %v2168, %v2164
    %v3505 = vpack.c.b16 %v2169, %v2165
    %v3506 = vpack.c.b16 %v2170, %v2166
    %v3507 = vpack.c.b16 %v2171, %v2167
    %v3508 = vpack.c.b16 %v2176, %v2172
    %v3509 = vpack.c.b16 %v2177, %v2173
    %v3510 = vpack.c.b16 %v2178, %v2174
    %v3511 = vpack.c.b16 %v2179, %v2175
    %v3512 = vpack.c.b16 %v2184, %v2180
    %v3513 = vpack.c.b16 %v2185, %v2181
    %v3514 = vpack.c.b16 %v2186, %v2182
    %v3515 = vpack.c.b16 %v2187, %v2183
    %v3516 = vpack.c.b16 %v2192, %v2188
    %v3517 = vpack.c.b16 %v2193, %v2189
    %v3518 = vpack.c.b16 %v2194, %v2190
    %v3519 = vpack.c.b16 %v2195, %v2191
    %v3520 = vpack.c.b16 %v2200, %v2196
    %v3521 = vpack.c.b16 %v2201, %v2197
    %v3522 = vpack.c.b16 %v2202, %v2198
    %v3523 = vpack.c.b16 %v2203, %v2199
    %v3524 = vpack.c.b16 %v2208, %v2204
    %v3525 = vpack.c.b16 %v2209, %v2205
    %v3526 = vpack.c.b16 %v2210, %v2206
    %v3527 = vpack.c.b16 %v2211, %v2207
    %v3528 = vpack.c.b16 %v2216, %v2212
    %v3529 = vpack.c.b16 %v2217, %v2213
    %v3530 = vpack.c.b16 %v2218, %v2214
    %v3531 = vpack.c.b16 %v2219, %v2215
    %v3532 = vpack.c.b16 %v2224, %v2220
    %v3533 = vpack.c.b16 %v2225, %v2221
    %v3534 = vpack.c.b16 %v2226, %v2222
    %v3535 = vpack.c.b16 %v2227, %v2223
    %v3536 = vpack.c.b16 %v2232, %v2228
    %v3537 = vpack.c.b16 %v2233, %v2229
    %v3538 = vpack.c.b16 %v2234, %v2230
    %v3539 = vpack.c.b16 %v2235, %v2231
    %v3540 = vpack.c.b16 %v2240, %v2236
    %v3541 = vpack.c.b16 %v2241, %v2237
    %v3542 = vpack.c.b16 %v2242, %v2238
    %v3543 = vpack.c.b16 %v2243, %v2239
    %v3544 = vpack.c.b16 %v2248, %v2244
    %v3545 = vpack.c.b16 %v2249, %v2245
    %v3546 = vpack.c.b16 %v2250, %v2246
    %v3547 = vpack.c.b16 %v2251, %v2247
    %v3548 = vpack.c.b16 %v2256, %v2252
    %v3549 = vpack.c.b16 %v2257, %v2253
    %v3550 = vpack.c.b16 %v2258, %v2254
    %v3551 = vpack.c.b16 %v2259, %v2255
    %v3552 = vpack.c.b16 %v2264, %v2260
    %v3553 = vpack.c.b16 %v2265, %v2261
    %v3554 = vpack.c.b16 %v2266, %v2262
    %v3555 = vpack.c.b16 %v2267, %v2263
    %v3556 = vpack.c.b16 %v2272, %v2268
    %v3557 = vpack.c.b16 %v2273, %v2269
    %v3558 = vpack.c.b16 %v2274, %v2270
    %v3559 = vpack.c.b16 %v2275, %v2271
    %v3560 = vpack.c.b16 %v2280, %v2276
    %v3561 = vpack.c.b16 %v2281, %v2277
    %v3562 = vpack.c.b16 %v2282, %v2278
    %v3563 = vpack.c.b16 %v2283, %v2279
    %v3564 = vpack.c.b16 %v2288, %v2284
    %v3565 = vpack.c.b16 %v2289, %v2285
    %v3566 = vpack.c.b16 %v2290, %v2286
    %v3567 = vpack.c.b16 %v2291, %v2287
    %v3568 = vpack.c.b16 %v2296, %v2292
    %v3569 = vpack.c.b16 %v2297, %v2293
    %v3570 = vpack.c.b16 %v2298, %v2294
    %v3571 = vpack.c.b16 %v2299, %v2295
    %v3572 = vpack.c.b16 %v2304, %v2300
    %v3573 = vpack.c.b16 %v2305, %v2301
    %v3574 = vpack.c.b16 %v2306, %v2302
    %v3575 = vpack.c.b16 %v2307, %v2303
    %v3576 = vpack.c.b16 %v2312, %v2308
    %v3577 = vpack.c.b16 %v2313, %v2309
    %v3578 = vpack.c.b16 %v2314, %v2310
    %v3579 = vpack.c.b16 %v2315, %v2311
    %v3580 = vpack.c.b16 %v2320, %v2316
    %v3581 = vpack.c.b16 %v2321, %v2317
    %v3582 = vpack.c.b16 %v2322, %v2318
    %v3583 = vpack.c.b16 %v2323, %v2319
    %v3584 = vpack.c.b16 %v2328, %v2324
    %v3585 = vpack.c.b16 %v2329, %v2325
    %v3586 = vpack.c.b16 %v2330, %v2326
    %v3587 = vpack.c.b16 %v2331, %v2327
    %v3588 = vpack.c.b16 %v2336, %v2332
    %v3589 = vpack.c.b16 %v2337, %v2333
    %v3590 = vpack.c.b16 %v2338, %v2334
    %v3591 = vpack.c.b16 %v2339, %v2335
    %v3592 = vpack.c.b16 %v2344, %v2340
    %v3593 = vpack.c.b16 %v2345, %v2341
    %v3594 = vpack.c.b16 %v2346, %v2342
    %v3595 = vpack.c.b16 %v2347, %v2343
    %v3596 = vpack.c.b16 %v2352, %v2348
    %v3597 = vpack.c.b16 %v2353, %v2349
    %v3598 = vpack.c.b16 %v2354, %v2350
    %v3599 = vpack.c.b16 %v2355, %v2351
    %v3600 = vpack.c.b16 %v2360, %v2356
    %v3601 = vpack.c.b16 %v2361, %v2357
    %v3602 = vpack.c.b16 %v2362, %v2358
    %v3603 = vpack.c.b16 %v2363, %v2359
    %v3604 = vpack.c.b16 %v2368, %v2364
    %v3605 = vpack.c.b16 %v2369, %v2365
    %v3606 = vpack.c.b16 %v2370, %v2366
    %v3607 = vpack.c.b16 %v2371, %v2367
    %v3608 = vpack.c.b16 %v2376, %v2372
    %v3609 = vpack.c.b16 %v2377, %v2373
    %v3610 = vpack.c.b16 %v2378, %v2374
    %v3611 = vpack.c.b16 %v2379, %v2375
    %v3612 = vpack.c.b16 %v2384, %v2380
    %v3613 = vpack.c.b16 %v2385, %v2381
    %v3614 = vpack.c.b16 %v2386, %v2382
    %v3615 = vpack.c.b16 %v2387, %v2383
    %v3616 = vpack.c.b16 %v2392, %v2388
    %v3617 = vpack.c.b16 %v2393, %v2389
    %v3618 = vpack.c.b16 %v2394, %v2390
    %v3619 = vpack.c.b16 %v2395, %v2391
    %v3620 = vpack.c.b16 %v2400, %v2396
    %v3621 = vpack.c.b16 %v2401, %v2397
    %v3622 = vpack.c.b16 %v2402, %v2398
    %v3623 = vpack.c.b16 %v2403, %v2399
    %v3624 = vpack.c.b16 %v2408, %v2404
    %v3625 = vpack.c.b16 %v2409, %v2405
    %v3626 = vpack.c.b16 %v2410, %v2406
    %v3627 = vpack.c.b16 %v2411, %v2407
    %v3628 = vpack.c.b16 %v2416, %v2412
    %v3629 = vpack.c.b16 %v2417, %v2413
    %v3630 = vpack.c.b16 %v2418, %v2414
    %v3631 = vpack.c.b16 %v2419, %v2415
    %v3632 = vpack.c.b16 %v2424, %v2420
    %v3633 = vpack.c.b16 %v2425, %v2421
    %v3634 = vpack.c.b16 %v2426, %v2422
    %v3635 = vpack.c.b16 %v2427, %v2423
    %v3636 = vpack.c.b16 %v2432, %v2428
    %v3637 = vpack.c.b16 %v2433, %v2429
    %v3638 = vpack.c.b16 %v2434, %v2430
    %v3639 = vpack.c.b16 %v2435, %v2431
    %v3640 = vpack.c.b16 %v2440, %v2436
    %v3641 = vpack.c.b16 %v2441, %v2437
    %v3642 = vpack.c.b16 %v2442, %v2438
    %v3643 = vpack.c.b16 %v2443, %v2439
    %v3644 = vpack.c.b16 %v2448, %v2444
    %v3645 = vpack.c.b16 %v2449, %v2445
    %v3646 = vpack.c.b16 %v2450, %v2446
    %v3647 = vpack.c.b16 %v2451, %v2447
    %v3648 = vpack.c.b16 %v2456, %v2452
    %v3649 = vpack.c.b16 %v2457, %v2453
    %v3650 = vpack.c.b16 %v2458, %v2454
    %v3651 = vpack.c.b16 %v2459, %v2455
    %v3652 = vpack.c.b16 %v2464, %v2460
    %v3653 = vpack.c.b16 %v2465, %v2461
    %v3654 = vpack.c.b16 %v2466, %v2462
    %v3655 = vpack.c.b16 %v2467, %v2463
    %v3656 = vpack.c.b16 %v2472, %v2468
    %v3657 = vpack.c.b16 %v2473, %v2469
    %v3658 = vpack.c.b16 %v2474, %v2470
    %v3659 = vpack.c.b16 %v2475, %v2471
    %v3660 = vpack.c.b16 %v2480, %v2476
    %v3661 = vpack.c.b16 %v2481, %v2477
    %v3662 = vpack.c.b16 %v2482, %v2478
    %v3663 = vpack.c.b16 %v2483, %v2479
    %v3664 = vpack.c.b16 %v2488, %v2484
    %v3665 = vpack.c.b16 %v2489, %v2485
    %v3666 = vpack.c.b16 %v2490, %v2486
    %v3667 = vpack.c.b16 %v2491, %v2487
    %v3668 = vpack.c.b16 %v2496, %v2492
    %v3669 = vpack.c.b16 %v2497, %v2493
    %v3670 = vpack.c.b16 %v2498, %v2494
    %v3671 = vpack.c.b16 %v2499, %v2495
    %v3672 = vpack.c.b16 %v2504, %v2500
    %v3673 = vpack.c.b16 %v2505, %v2501
    %v3674 = vpack.c.b16 %v2506, %v2502
    %v3675 = vpack.c.b16 %v2507, %v2503
    %v3676 = vpack.c.b16 %v2512, %v2508
    %v3677 = vpack.c.b16 %v2513, %v2509
    %v3678 = vpack.c.b16 %v2514, %v2510
    %v3679 = vpack.c.b16 %v2515, %v2511
    %v3680 = vpack.c.b16 %v2520, %v2516
    %v3681 = vpack.c.b16 %v2521, %v2517
    %v3682 = vpack.c.b16 %v2522, %v2518
    %v3683 = vpack.c.b16 %v2523, %v2519
    %v3684 = vpack.c.b16 %v2528, %v2524
    %v3685 = vpack.c.b16 %v2529, %v2525
    %v3686 = vpack.c.b16 %v2530, %v2526
    %v3687 = vpack.c.b16 %v2531, %v2527
    %v3688 = vpack.c.b16 %v2536, %v2532
    %v3689 = vpack.c.b16 %v2537, %v2533
    %v3690 = vpack.c.b16 %v2538, %v2534
    %v3691 = vpack.c.b16 %v2539, %v2535
    %v3692 = vpack.c.b16 %v2544, %v2540
    %v3693 = vpack.c.b16 %v2545, %v2541
    %v3694 = vpack.c.b16 %v2546, %v2542
    %v3695 = vpack.c.b16 %v2547, %v2543
    %v3696 = vpack.c.b16 %v2552, %v2548
    %v3697 = vpack.c.b16 %v2553, %v2549
    %v3698 = vpack.c.b16 %v2554, %v2550
    %v3699 = vpack.c.b16 %v2555, %v2551
    %v3700 = vpack.c.b16 %v2560, %v2556
    %v3701 = vpack.c.b16 %v2561, %v2557
    %v3702 = vpack.c.b16 %v2562, %v2558
    %v3703 = vpack.c.b16 %v2563, %v2559
    %v3704 = vpack.c.b16 %v2568, %v2564
    %v3705 = vpack.c.b16 %v2569, %v2565
    %v3706 = vpack.c.b16 %v2570, %v2566
    %v3707 = vpack.c.b16 %v2571, %v2567
    %v3708 = vpack.c.b16 %v2576, %v2572
    %v3709 = vpack.c.b16 %v2577, %v2573
    %v3710 = vpack.c.b16 %v2578, %v2574
    %v3711 = vpack.c.b16 %v2579, %v2575
    %v3712 = vpack.c.b16 %v2584, %v2580
    %v3713 = vpack.c.b16 %v2585, %v2581
    %v3714 = vpack.c.b16 %v2586, %v2582
    %v3715 = vpack.c.b16 %v2587, %v2583
    %v3716 = vpack.c.b16 %v2592, %v2588
    %v3717 = vpack.c.b16 %v2593, %v2589
    %v3718 = vpack.c.b16 %v2594, %v2590
    %v3719 = vpack.c.b16 %v2595, %v2591
    %v3720 = vpack.c.b16 %v2600, %v2596
    %v3721 = vpack.c.b16 %v2601, %v2597
    %v3722 = vpack.c.b16 %v2602, %v2598
    %v3723 = vpack.c.b16 %v2603, %v2599
    %v3724 = vpack.c.b16 %v2608, %v2604
    %v3725 = vpack.c.b16 %v2609, %v2605
    %v3726 = vpack.c.b16 %v2610, %v2606
    %v3727 = vpack.c.b16 %v2611, %v2607
    %v3728 = vpack.c.b16 %v2616, %v2612
    %v3729 = vpack.c.b16 %v2617, %v2613
    %v3730 = vpack.c.b16 %v2618, %v2614
    %v3731 = vpack.c.b16 %v2619, %v2615
    %v3732 = vpack.c.b16 %v2624, %v2620
    %v3733 = vpack.c.b16 %v2625, %v2621
    %v3734 = vpack.c.b16 %v2626, %v2622
    %v3735 = vpack.c.b16 %v2627, %v2623
    %v3736 = vpack.c.b16 %v2632, %v2628
    %v3737 = vpack.c.b16 %v2633, %v2629
    %v3738 = vpack.c.b16 %v2634, %v2630
    %v3739 = vpack.c.b16 %v2635, %v2631
    %v3740 = vpack.c.b16 %v2640, %v2636
    %v3741 = vpack.c.b16 %v2641, %v2637
    %v3742 = vpack.c.b16 %v2642, %v2638
    %v3743 = vpack.c.b16 %v2643, %v2639
    %v3744 = vpack.c.b16 %v2648, %v2644
    %v3745 = vpack.c.b16 %v2649, %v2645
    %v3746 = vpack.c.b16 %v2650, %v2646
    %v3747 = vpack.c.b16 %v2651, %v2647
    %v3748 = vpack.c.b16 %v2656, %v2652
    %v3749 = vpack.c.b16 %v2657, %v2653
    %v3750 = vpack.c.b16 %v2658, %v2654
    %v3751 = vpack.c.b16 %v2659, %v2655
    %v3752 = vpack.c.b16 %v2664, %v2660
    %v3753 = vpack.c.b16 %v2665, %v2661
    %v3754 = vpack.c.b16 %v2666, %v2662
    %v3755 = vpack.c.b16 %v2667, %v2663
    %v3756 = vpack.c.b16 %v2672, %v2668
    %v3757 = vpack.c.b16 %v2673, %v2669
    %v3758 = vpack.c.b16 %v2674, %v2670
    %v3759 = vpack.c.b16 %v2675, %v2671
    %v3760 = vpack.c.b16 %v2680, %v2676
    %v3761 = vpack.c.b16 %v2681, %v2677
    %v3762 = vpack.c.b16 %v2682, %v2678
    %v3763 = vpack.c.b16 %v2683, %v2679
    %v3764 = vpack.c.b16 %v2688, %v2684
    %v3765 = vpack.c.b16 %v2689, %v2685
    %v3766 = vpack.c.b16 %v2690, %v2686
    %v3767 = vpack.c.b16 %v2691, %v2687
    %v3768 = vpack.c.b16 %v2696, %v2692
    %v3769 = vpack.c.b16 %v2697, %v2693
    %v3770 = vpack.c.b16 %v2698, %v2694
    %v3771 = vpack.c.b16 %v2699, %v2695
    %v3772 = vpack.c.b16 %v2704, %v2700
    %v3773 = vpack.c.b16 %v2705, %v2701
    %v3774 = vpack.c.b16 %v2706, %v2702
    %v3775 = vpack.c.b16 %v2707, %v2703
    %v3776 = vpack.c.b16 %v2712, %v2708
    %v3777 = vpack.c.b16 %v2713, %v2709
    %v3778 = vpack.c.b16 %v2714, %v2710
    %v3779 = vpack.c.b16 %v2715, %v2711
    %v3780 = vpack.c.b16 %v2720, %v2716
    %v3781 = vpack.c.b16 %v2721, %v2717
    %v3782 = vpack.c.b16 %v2722, %v2718
    %v3783 = vpack.c.b16 %v2723, %v2719
    %v3784 = vpack.c.b16 %v2728, %v2724
    %v3785 = vpack.c.b16 %v2729, %v2725
    %v3786 = vpack.c.b16 %v2730, %v2726
    %v3787 = vpack.c.b16 %v2731, %v2727
    %v3788 = vpack.c.b16 %v2736, %v2732
    %v3789 = vpack.c.b16 %v2737, %v2733
    %v3790 = vpack.c.b16 %v2738, %v2734
    %v3791 = vpack.c.b16 %v2739, %v2735
    %v3792 = vpack.c.b16 %v2744, %v2740
    %v3793 = vpack.c.b16 %v2745, %v2741
    %v3794 = vpack.c.b16 %v2746, %v2742
    %v3795 = vpack.c.b16 %v2747, %v2743
    %v3796 = vpack.c.b16 %v2752, %v2748
    %v3797 = vpack.c.b16 %v2753, %v2749
    %v3798 = vpack.c.b16 %v2754, %v2750
    %v3799 = vpack.c.b16 %v2755, %v2751
    %v3800 = vpack.c.b16 %v2760, %v2756
    %v3801 = vpack.c.b16 %v2761, %v2757
    %v3802 = vpack.c.b16 %v2762, %v2758
    %v3803 = vpack.c.b16 %v2763, %v2759
    %v3804 = vpack.c.b16 %v2768, %v2764
    %v3805 = vpack.c.b16 %v2769, %v2765
    %v3806 = vpack.c.b16 %v2770, %v2766
    %v3807 = vpack.c.b16 %v2771, %v2767
    %v3808 = vpack.c.b16 %v2776, %v2772
    %v3809 = vpack.c.b16 %v2777, %v2773
    %v3810 = vpack.c.b16 %v2778, %v2774
    %v3811 = vpack.c.b16 %v2779, %v2775
    %v3812 = vpack.c.b16 %v2784, %v2780
    %v3813 = vpack.c.b16 %v2785, %v2781
    %v3814 = vpack.c.b16 %v2786, %v2782
    %v3815 = vpack.c.b16 %v2787, %v2783
    %v3816 = vpack.c.b16 %v2792, %v2788
    %v3817 = vpack.c.b16 %v2793, %v2789
    %v3818 = vpack.c.b16 %v2794, %v2790
    %v3819 = vpack.c.b16 %v2795, %v2791
    %v3820 = vpack.c.b16 %v2800, %v2796
    %v3821 = vpack.c.b16 %v2801, %v2797
    %v3822 = vpack.c.b16 %v2802, %v2798
    %v3823 = vpack.c.b16 %v2803, %v2799
    %v3824 = vpack.c.b16 %v2808, %v2804
    %v3825 = vpack.c.b16 %v2809, %v2805
    %v3826 = vpack.c.b16 %v2810, %v2806
    %v3827 = vpack.c.b16 %v2811, %v2807
    %v3828 = vpack.c.b16 %v2816, %v2812
    %v3829 = vpack.c.b16 %v2817, %v2813
    %v3830 = vpack.c.b16 %v2818, %v2814
    %v3831 = vpack.c.b16 %v2819, %v2815
    %v3832 = vpack.c.b16 %v2824, %v2820
    %v3833 = vpack.c.b16 %v2825, %v2821
    %v3834 = vpack.c.b16 %v2826, %v2822
    %v3835 = vpack.c.b16 %v2827, %v2823
    %v3836 = vpack.c.b16 %v2832, %v2828
    %v3837 = vpack.c.b16 %v2833, %v2829
    %v3838 = vpack.c.b16 %v2834, %v2830
    %v3839 = vpack.c.b16 %v2835, %v2831
    %v3840 = vpack.c.b16 %v2840, %v2836
    %v3841 = vpack.c.b16 %v2841, %v2837
    %v3842 = vpack.c.b16 %v2842, %v2838
    %v3843 = vpack.c.b16 %v2843, %v2839
    %v3844 = vpack.c.b16 %v2848, %v2844
    %v3845 = vpack.c.b16 %v2849, %v2845
    %v3846 = vpack.c.b16 %v2850, %v2846
    %v3847 = vpack.c.b16 %v2851, %v2847
    %v3848 = vpack.c.b16 %v2856, %v2852
    %v3849 = vpack.c.b16 %v2857, %v2853
    %v3850 = vpack.c.b16 %v2858, %v2854
    %v3851 = vpack.c.b16 %v2859, %v2855
    %v3852 = vpack.c.b16 %v2864, %v2860
    %v3853 = vpack.c.b16 %v2865, %v2861
    %v3854 = vpack.c.b16 %v2866, %v2862
    %v3855 = vpack.c.b16 %v2867, %v2863
    %v3856 = vpack.c.b16 %v2872, %v2868
    %v3857 = vpack.c.b16 %v2873, %v2869
    %v3858 = vpack.c.b16 %v2874, %v2870
    %v3859 = vpack.c.b16 %v2875, %v2871
    %v3860 = vpack.c.b16 %v2880, %v2876
    %v3861 = vpack.c.b16 %v2881, %v2877
    %v3862 = vpack.c.b16 %v2882, %v2878
    %v3863 = vpack.c.b16 %v2883, %v2879
    %v3864 = vpack.c.b16 %v2888, %v2884
    %v3865 = vpack.c.b16 %v2889, %v2885
    %v3866 = vpack.c.b16 %v2890, %v2886
    %v3867 = vpack.c.b16 %v2891, %v2887
    %v3868 = vpack.c.b16 %v2896, %v2892
    %v3869 = vpack.c.b16 %v2897, %v2893
    %v3870 = vpack.c.b16 %v2898, %v2894
    %v3871 = vpack.c.b16 %v2899, %v2895
    %v3872 = vpack.c.b16 %v2904, %v2900
    %v3873 = vpack.c.b16 %v2905, %v2901
    %v3874 = vpack.c.b16 %v2906, %v2902
    %v3875 = vpack.c.b16 %v2907, %v2903
    %v3876 = vpack.c.b16 %v2912, %v2908
    %v3877 = vpack.c.b16 %v2913, %v2909
    %v3878 = vpack.c.b16 %v2914, %v2910
    %v3879 = vpack.c.b16 %v2915, %v2911
    %v3880 = vpack.c.b16 %v2920, %v2916
    %v3881 = vpack.c.b16 %v2921, %v2917
    %v3882 = vpack.c.b16 %v2922, %v2918
    %v3883 = vpack.c.b16 %v2923, %v2919
    %v3884 = vpack.c.b16 %v2928, %v2924
    %v3885 = vpack.c.b16 %v2929, %v2925
    %v3886 = vpack.c.b16 %v2930, %v2926
    %v3887 = vpack.c.b16 %v2931, %v2927
    %v3888 = vpack.c.b16 %v2936, %v2932
    %v3889 = vpack.c.b16 %v2937, %v2933
    %v3890 = vpack.c.b16 %v2938, %v2934
    %v3891 = vpack.c.b16 %v2939, %v2935
    %v3892 = vpack.c.b16 %v2944, %v2940
    %v3893 = vpack.c.b16 %v2945, %v2941
    %v3894 = vpack.c.b16 %v2946, %v2942
    %v3895 = vpack.c.b16 %v2947, %v2943
    %v3896 = vpack.c.b16 %v2952, %v2948
    %v3897 = vpack.c.b16 %v2953, %v2949
    %v3898 = vpack.c.b16 %v2954, %v2950
    %v3899 = vpack.c.b16 %v2955, %v2951
    %v3900 = vpack.c.b16 %v2960, %v2956
    %v3901 = vpack.c.b16 %v2961, %v2957
    %v3902 = vpack.c.b16 %v2962, %v2958
    %v3903 = vpack.c.b16 %v2963, %v2959
    %v3904 = vpack.c.b16 %v2968, %v2964
    %v3905 = vpack.c.b16 %v2969, %v2965
    %v3906 = vpack.c.b16 %v2970, %v2966
    %v3907 = vpack.c.b16 %v2971, %v2967
    %v3908 = vpack.c.b16 %v2976, %v2972
    %v3909 = vpack.c.b16 %v2977, %v2973
    %v3910 = vpack.c.b16 %v2978, %v2974
    %v3911 = vpack.c.b16 %v2979, %v2975
    %v3912 = vpack.c.b16 %v2984, %v2980
    %v3913 = vpack.c.b16 %v2985, %v2981
    %v3914 = vpack.c.b16 %v2986, %v2982
    %v3915 = vpack.c.b16 %v2987, %v2983
    %v3916 = vpack.c.b16 %v2992, %v2988
    %v3917 = vpack.c.b16 %v2993, %v2989
    %v3918 = vpack.c.b16 %v2994, %v2990
    %v3919 = vpack.c.b16 %v2995, %v2991
    %v3920 = vpack.c.b16 %v3000, %v2996
    %v3921 = vpack.c.b16 %v3001, %v2997
    %v3922 = vpack.c.b16 %v3002, %v2998
    %v3923 = vpack.c.b16 %v3003, %v2999
    %v3924 = vpack.c.b16 %v3008, %v3004
    %v3925 = vpack.c.b16 %v3009, %v3005
    %v3926 = vpack.c.b16 %v3010, %v3006
    %v3927 = vpack.c.b16 %v3011, %v3007
    %v3928 = vpack.c.b16 %v3016, %v3012
    %v3929 = vpack.c.b16 %v3017, %v3013
    %v3930 = vpack.c.b16 %v3018, %v3014
    %v3931 = vpack.c.b16 %v3019, %v3015
    %v3932 = vpack.c.b16 %v3024, %v3020
    %v3933 = vpack.c.b16 %v3025, %v3021
    %v3934 = vpack.c.b16 %v3026, %v3022
    %v3935 = vpack.c.b16 %v3027, %v3023
    %v3936 = vpack.c.b16 %v3032, %v3028
    %v3937 = vpack.c.b16 %v3033, %v3029
    %v3938 = vpack.c.b16 %v3034, %v3030
    %v3939 = vpack.c.b16 %v3035, %v3031
    %v3940 = vpack.c.b16 %v3040, %v3036
    %v3941 = vpack.c.b16 %v3041, %v3037
    %v3942 = vpack.c.b16 %v3042, %v3038
    %v3943 = vpack.c.b16 %v3043, %v3039
    %v3944 = vpack.c.b16 %v3048, %v3044
    %v3945 = vpack.c.b16 %v3049, %v3045
    %v3946 = vpack.c.b16 %v3050, %v3046
    %v3947 = vpack.c.b16 %v3051, %v3047
    %v3948 = vpack.c.b16 %v3056, %v3052
    %v3949 = vpack.c.b16 %v3057, %v3053
    %v3950 = vpack.c.b16 %v3058, %v3054
    %v3951 = vpack.c.b16 %v3059, %v3055
    %v3952 = vpack.c.b16 %v3064, %v3060
    %v3953 = vpack.c.b16 %v3065, %v3061
    %v3954 = vpack.c.b16 %v3066, %v3062
    %v3955 = vpack.c.b16 %v3067, %v3063
    %v3956 = vpack.c.b16 %v3072, %v3068
    %v3957 = vpack.c.b16 %v3073, %v3069
    %v3958 = vpack.c.b16 %v3074, %v3070
    %v3959 = vpack.c.b16 %v3075, %v3071
    %v3960 = vpack.c.b16 %v3080, %v3076
    %v3961 = vpack.c.b16 %v3081, %v3077
    %v3962 = vpack.c.b16 %v3082, %v3078
    %v3963 = vpack.c.b16 %v3083, %v3079
    %v3964 = vpack.c.b16 %v3088, %v3084
    %v3965 = vpack.c.b16 %v3089, %v3085
    %v3966 = vpack.c.b16 %v3090, %v3086
    %v3967 = vpack.c.b16 %v3091, %v3087
    %v3968 = vpack.c.b16 %v3096, %v3092
    %v3969 = vpack.c.b16 %v3097, %v3093
    %v3970 = vpack.c.b16 %v3098, %v3094
    %v3971 = vpack.c.b16 %v3099, %v3095
    %v3972 = vpack.c.b16 %v3104, %v3100
    %v3973 = vpack.c.b16 %v3105, %v3101
    %v3974 = vpack.c.b16 %v3106, %v3102
    %v3975 = vpack.c.b16 %v3107, %v3103
    %v3976 = vpack.c.b16 %v3112, %v3108
    %v3977 = vpack.c.b16 %v3113, %v3109
    %v3978 = vpack.c.b16 %v3114, %v3110
    %v3979 = vpack.c.b16 %v3115, %v3111
    %v3980 = vpack.c.b16 %v3120, %v3116
    %v3981 = vpack.c.b16 %v3121, %v3117
    %v3982 = vpack.c.b16 %v3122, %v3118
    %v3983 = vpack.c.b16 %v3123, %v3119
    %v3984 = vpack.c.b16 %v3128, %v3124
    %v3985 = vpack.c.b16 %v3129, %v3125
    %v3986 = vpack.c.b16 %v3130, %v3126
    %v3987 = vpack.c.b16 %v3131, %v3127
    %v3988 = vpack.c.b16 %v3136, %v3132
    %v3989 = vpack.c.b16 %v3137, %v3133
    %v3990 = vpack.c.b16 %v3138, %v3134
    %v3991 = vpack.c.b16 %v3139, %v3135
    %v3992 = vpack.c.b16 %v3144, %v3140
    %v3993 = vpack.c.b16 %v3145, %v3141
    %v3994 = vpack.c.b16 %v3146, %v3142
    %v3995 = vpack.c.b16 %v3147, %v3143
    %v3996 = vpack.c.b16 %v3152, %v3148
    %v3997 = vpack.c.b16 %v3153, %v3149
    %v3998 = vpack.c.b16 %v3154, %v3150
    %v3999 = vpack.c.b16 %v3155, %v3151
    %v4000 = vpack.c.b16 %v3160, %v3156
    %v4001 = vpack.c.b16 %v3161, %v3157
    %v4002 = vpack.c.b16 %v3162, %v3158
    %v4003 = vpack.c.b16 %v3163, %v3159
    %v4004 = vpack.c.b16 %v3168, %v3164
    %v4005 = vpack.c.b16 %v3169, %v3165
    %v4006 = vpack.c.b16 %v3170, %v3166
    %v4007 = vpack.c.b16 %v3171, %v3167
    %v4008 = vpack.c.b16 %v3176, %v3172
    %v4009 = vpack.c.b16 %v3177, %v3173
    %v4010 = vpack.c.b16 %v3178, %v3174
    %v4011 = vpack.c.b16 %v3179, %v3175
    %v4012 = vpack.c.b16 %v3184, %v3180
    %v4013 = vpack.c.b16 %v3185, %v3181
    %v4014 = vpack.c.b16 %v3186, %v3182
    %v4015 = vpack.c.b16 %v3187, %v3183
    %v4016 = vpack.c.b16 %v3192, %v3188
    %v4017 = vpack.c.b16 %v3193, %v3189
    %v4018 = vpack.c.b16 %v3194, %v3190
    %v4019 = vpack.c.b16 %v3195, %v3191
    %v4020 = vpack.c.b16 %v3200, %v3196
    %v4021 = vpack.c.b16 %v3201, %v3197
    %v4022 = vpack.c.b16 %v3202, %v3198
    %v4023 = vpack.c.b16 %v3203, %v3199
    %v4024 = vpack.c.b16 %v3208, %v3204
    %v4025 = vpack.c.b16 %v3209, %v3205
    %v4026 = vpack.c.b16 %v3210, %v3206
    %v4027 = vpack.c.b16 %v3211, %v3207
    %v4028 = vpack.c.b16 %v3216, %v3212
    %v4029 = vpack.c.b16 %v3217, %v3213
    %v4030 = vpack.c.b16 %v3218, %v3214
    %v4031 = vpack.c.b16 %v3219, %v3215
    %v4032 = vpack.c.b16 %v3224, %v3220
    %v4033 = vpack.c.b16 %v3225, %v3221
    %v4034 = vpack.c.b16 %v3226, %v3222
    %v4035 = vpack.c.b16 %v3227, %v3223
    %v4036 = vpack.c.b16 %v3232, %v3228
    %v4037 = vpack.c.b16 %v3233, %v3229
    %v4038 = vpack.c.b16 %v3234, %v3230
    %v4039 = vpack.c.b16 %v3235, %v3231
    %v4040 = vpack.c.b16 %v3240, %v3236
    %v4041 = vpack.c.b16 %v3241, %v3237
    %v4042 = vpack.c.b16 %v3242, %v3238
    %v4043 = vpack.c.b16 %v3243, %v3239
    %v4044 = vpack.c.b16 %v3248, %v3244
    %v4045 = vpack.c.b16 %v3249, %v3245
    %v4046 = vpack.c.b16 %v3250, %v3246
    %v4047 = vpack.c.b16 %v3251, %v3247
    %v4048 = vpack.c.b16 %v3256, %v3252
    %v4049 = vpack.c.b16 %v3257, %v3253
    %v4050 = vpack.c.b16 %v3258, %v3254
    %v4051 = vpack.c.b16 %v3259, %v3255
    %v4052 = vpack.c.b16 %v3264, %v3260
    %v4053 = vpack.c.b16 %v3265, %v3261
    %v4054 = vpack.c.b16 %v3266, %v3262
    %v4055 = vpack.c.b16 %v3267, %v3263
    %v4056 = vpack.c.b16 %v3272, %v3268
    %v4057 = vpack.c.b16 %v3273, %v3269
    %v4058 = vpack.c.b16 %v3274, %v3270
    %v4059 = vpack.c.b16 %v3275, %v3271
    %v4060 = vpack.c.b16 %v3280, %v3276
    %v4061 = vpack.c.b16 %v3281, %v3277
    %v4062 = vpack.c.b16 %v3282, %v3278
    %v4063 = vpack.c.b16 %v3283, %v3279
    %v4064 = vpack.c.b16 %v3288, %v3284
    %v4065 = vpack.c.b16 %v3289, %v3285
    %v4066 = vpack.c.b16 %v3290, %v3286
    %v4067 = vpack.c.b16 %v3291, %v3287
    %v4068 = vpack.c.b16 %v3296, %v3292
    %v4069 = vpack.c.b16 %v3297, %v3293
    %v4070 = vpack.c.b16 %v3298, %v3294
    %v4071 = vpack.c.b16 %v3299, %v3295
    %v4072 = vpack.c.b16 %v3304, %v3300
    %v4073 = vpack.c.b16 %v3305, %v3301
    %v4074 = vpack.c.b16 %v3306, %v3302
    %v4075 = vpack.c.b16 %v3307, %v3303
    %4844 = vmatpush.bf16.msra.mxu0 %v3336
    %4845 = vmatpush.bf16.msra.mxu0 %v3332
    %4846 = vmatpush.bf16.msra.mxu0 %v3328
    %4847 = vmatpush.bf16.msra.mxu0 %v3324
    %4848 = vmatpush.bf16.msra.mxu0 %v3320
    %4849 = vmatpush.bf16.msra.mxu0 %v3316
    %4850 = vmatpush.bf16.msra.mxu0 %v3312
    %4851 = vmatpush.bf16.msra.mxu0 %v3308
    %4852 = vmatmul.bf16.gmra.mxu0 %v202
    %v4853 = vpop.f32.mrf.mxu0
    %v4854 = vadd.f32 %v996, %v4853
    %v4855 = vpop.f32.mrf.mxu0
    %4856 = vdwg.mxu0
    %4857 = vmatpush.bf16.msra.mxu0 %v3368
    %4858 = vmatpush.bf16.msra.mxu0 %v3364
    %4859 = vmatpush.bf16.msra.mxu0 %v3360
    %4860 = vmatpush.bf16.msra.mxu0 %v3356
    %4861 = vmatpush.bf16.msra.mxu0 %v3352
    %4862 = vmatpush.bf16.msra.mxu0 %v3348
    %4863 = vmatpush.bf16.msra.mxu0 %v3344
    %4864 = vmatpush.bf16.msra.mxu0 %v3340
    %4865 = vmatmul.bf16.gmra.mxu0 %v203
    %v4866 = vpop.f32.mrf.mxu0
    %v4867 = vadd.f32 %v4854, %v4866
    %v4868 = vpop.f32.mrf.mxu0
    %4869 = vdwg.mxu0
    %4870 = vmatpush.bf16.msra.mxu0 %v3400
    %4871 = vmatpush.bf16.msra.mxu0 %v3396
    %4872 = vmatpush.bf16.msra.mxu0 %v3392
    %4873 = vmatpush.bf16.msra.mxu0 %v3388
    %4874 = vmatpush.bf16.msra.mxu0 %v3384
    %4875 = vmatpush.bf16.msra.mxu0 %v3380
    %4876 = vmatpush.bf16.msra.mxu0 %v3376
    %4877 = vmatpush.bf16.msra.mxu0 %v3372
    %4878 = vmatmul.bf16.gmra.mxu0 %v204
    %v4879 = vpop.f32.mrf.mxu0
    %v4880 = vadd.f32 %v4867, %v4879
    %v4881 = vpop.f32.mrf.mxu0
    %4882 = vdwg.mxu0
    %4883 = vmatpush.bf16.msra.mxu0 %v3432
    %4884 = vmatpush.bf16.msra.mxu0 %v3428
    %4885 = vmatpush.bf16.msra.mxu0 %v3424
    %4886 = vmatpush.bf16.msra.mxu0 %v3420
    %4887 = vmatpush.bf16.msra.mxu0 %v3416
    %4888 = vmatpush.bf16.msra.mxu0 %v3412
    %4889 = vmatpush.bf16.msra.mxu0 %v3408
    %4890 = vmatpush.bf16.msra.mxu0 %v3404
    %4891 = vmatmul.bf16.gmra.mxu0 %v205
    %v4892 = vpop.f32.mrf.mxu0
    %v4893 = vadd.f32 %v4880, %v4892
    %v4894 = vpop.f32.mrf.mxu0
    %4895 = vdwg.mxu0
    %4896 = vmatpush.bf16.msra.mxu0 %v3464
    %4897 = vmatpush.bf16.msra.mxu0 %v3460
    %4898 = vmatpush.bf16.msra.mxu0 %v3456
    %4899 = vmatpush.bf16.msra.mxu0 %v3452
    %4900 = vmatpush.bf16.msra.mxu0 %v3448
    %4901 = vmatpush.bf16.msra.mxu0 %v3444
    %4902 = vmatpush.bf16.msra.mxu0 %v3440
    %4903 = vmatpush.bf16.msra.mxu0 %v3436
    %4904 = vmatmul.bf16.gmra.mxu0 %v206
    %v4905 = vpop.f32.mrf.mxu0
    %v4906 = vadd.f32 %v4893, %v4905
    %v4907 = vpop.f32.mrf.mxu0
    %4908 = vdwg.mxu0
    %4909 = vmatpush.bf16.msra.mxu0 %v3496
    %4910 = vmatpush.bf16.msra.mxu0 %v3492
    %4911 = vmatpush.bf16.msra.mxu0 %v3488
    %4912 = vmatpush.bf16.msra.mxu0 %v3484
    %4913 = vmatpush.bf16.msra.mxu0 %v3480
    %4914 = vmatpush.bf16.msra.mxu0 %v3476
    %4915 = vmatpush.bf16.msra.mxu0 %v3472
    %4916 = vmatpush.bf16.msra.mxu0 %v3468
    %4917 = vmatmul.bf16.gmra.mxu0 %v207
    %v4918 = vpop.f32.mrf.mxu0
    %v4919 = vadd.f32 %v4906, %v4918
    %v4920 = vpop.f32.mrf.mxu0
    %4921 = vdwg.mxu0
    %4922 = vmatpush.bf16.msra.mxu0 %v3528
    %4923 = vmatpush.bf16.msra.mxu0 %v3524
    %4924 = vmatpush.bf16.msra.mxu0 %v3520
    %4925 = vmatpush.bf16.msra.mxu0 %v3516
    %4926 = vmatpush.bf16.msra.mxu0 %v3512
    %4927 = vmatpush.bf16.msra.mxu0 %v3508
    %4928 = vmatpush.bf16.msra.mxu0 %v3504
    %4929 = vmatpush.bf16.msra.mxu0 %v3500
    %4930 = vmatmul.bf16.gmra.mxu0 %v208
    %v4931 = vpop.f32.mrf.mxu0
    %v4932 = vadd.f32 %v4919, %v4931
    %v4933 = vpop.f32.mrf.mxu0
    %4934 = vdwg.mxu0
    %4935 = vmatpush.bf16.msra.mxu0 %v3560
    %4936 = vmatpush.bf16.msra.mxu0 %v3556
    %4937 = vmatpush.bf16.msra.mxu0 %v3552
    %4938 = vmatpush.bf16.msra.mxu0 %v3548
    %4939 = vmatpush.bf16.msra.mxu0 %v3544
    %4940 = vmatpush.bf16.msra.mxu0 %v3540
    %4941 = vmatpush.bf16.msra.mxu0 %v3536
    %4942 = vmatpush.bf16.msra.mxu0 %v3532
    %4943 = vmatmul.bf16.gmra.mxu0 %v209
    %v4944 = vpop.f32.mrf.mxu0
    %v4945 = vadd.f32 %v4932, %v4944
    %v4946 = vpop.f32.mrf.mxu0
    %4947 = vdwg.mxu0
    %4948 = vmatpush.bf16.msra.mxu0 %v3592
    %4949 = vmatpush.bf16.msra.mxu0 %v3588
    %4950 = vmatpush.bf16.msra.mxu0 %v3584
    %4951 = vmatpush.bf16.msra.mxu0 %v3580
    %4952 = vmatpush.bf16.msra.mxu0 %v3576
    %4953 = vmatpush.bf16.msra.mxu0 %v3572
    %4954 = vmatpush.bf16.msra.mxu0 %v3568
    %4955 = vmatpush.bf16.msra.mxu0 %v3564
    %4956 = vmatmul.bf16.gmra.mxu0 %v210
    %v4957 = vpop.f32.mrf.mxu0
    %v4958 = vadd.f32 %v4945, %v4957
    %v4959 = vpop.f32.mrf.mxu0
    %4960 = vdwg.mxu0
    %4961 = vmatpush.bf16.msra.mxu0 %v3624
    %4962 = vmatpush.bf16.msra.mxu0 %v3620
    %4963 = vmatpush.bf16.msra.mxu0 %v3616
    %4964 = vmatpush.bf16.msra.mxu0 %v3612
    %4965 = vmatpush.bf16.msra.mxu0 %v3608
    %4966 = vmatpush.bf16.msra.mxu0 %v3604
    %4967 = vmatpush.bf16.msra.mxu0 %v3600
    %4968 = vmatpush.bf16.msra.mxu0 %v3596
    %4969 = vmatmul.bf16.gmra.mxu0 %v211
    %v4970 = vpop.f32.mrf.mxu0
    %v4971 = vadd.f32 %v4958, %v4970
    %v4972 = vpop.f32.mrf.mxu0
    %4973 = vdwg.mxu0
    %4974 = vmatpush.bf16.msra.mxu0 %v3656
    %4975 = vmatpush.bf16.msra.mxu0 %v3652
    %4976 = vmatpush.bf16.msra.mxu0 %v3648
    %4977 = vmatpush.bf16.msra.mxu0 %v3644
    %4978 = vmatpush.bf16.msra.mxu0 %v3640
    %4979 = vmatpush.bf16.msra.mxu0 %v3636
    %4980 = vmatpush.bf16.msra.mxu0 %v3632
    %4981 = vmatpush.bf16.msra.mxu0 %v3628
    %4982 = vmatmul.bf16.gmra.mxu0 %v212
    %v4983 = vpop.f32.mrf.mxu0
    %v4984 = vadd.f32 %v4971, %v4983
    %v4985 = vpop.f32.mrf.mxu0
    %4986 = vdwg.mxu0
    %4987 = vmatpush.bf16.msra.mxu0 %v3688
    %4988 = vmatpush.bf16.msra.mxu0 %v3684
    %4989 = vmatpush.bf16.msra.mxu0 %v3680
    %4990 = vmatpush.bf16.msra.mxu0 %v3676
    %4991 = vmatpush.bf16.msra.mxu0 %v3672
    %4992 = vmatpush.bf16.msra.mxu0 %v3668
    %4993 = vmatpush.bf16.msra.mxu0 %v3664
    %4994 = vmatpush.bf16.msra.mxu0 %v3660
    %4995 = vmatmul.bf16.gmra.mxu0 %v213
    %v4996 = vpop.f32.mrf.mxu0
    %v4997 = vadd.f32 %v4984, %v4996
    %v4998 = vpop.f32.mrf.mxu0
    %4999 = vdwg.mxu0
    %5000 = vmatpush.bf16.msra.mxu0 %v3720
    %5001 = vmatpush.bf16.msra.mxu0 %v3716
    %5002 = vmatpush.bf16.msra.mxu0 %v3712
    %5003 = vmatpush.bf16.msra.mxu0 %v3708
    %5004 = vmatpush.bf16.msra.mxu0 %v3704
    %5005 = vmatpush.bf16.msra.mxu0 %v3700
    %5006 = vmatpush.bf16.msra.mxu0 %v3696
    %5007 = vmatpush.bf16.msra.mxu0 %v3692
    %5008 = vmatmul.bf16.gmra.mxu0 %v214
    %v5009 = vpop.f32.mrf.mxu0
    %v5010 = vadd.f32 %v4997, %v5009
    %v5011 = vpop.f32.mrf.mxu0
    %5012 = vdwg.mxu0
    %5013 = vmatpush.bf16.msra.mxu0 %v3752
    %5014 = vmatpush.bf16.msra.mxu0 %v3748
    %5015 = vmatpush.bf16.msra.mxu0 %v3744
    %5016 = vmatpush.bf16.msra.mxu0 %v3740
    %5017 = vmatpush.bf16.msra.mxu0 %v3736
    %5018 = vmatpush.bf16.msra.mxu0 %v3732
    %5019 = vmatpush.bf16.msra.mxu0 %v3728
    %5020 = vmatpush.bf16.msra.mxu0 %v3724
    %5021 = vmatmul.bf16.gmra.mxu0 %v215
    %v5022 = vpop.f32.mrf.mxu0
    %v5023 = vadd.f32 %v5010, %v5022
    %v5024 = vpop.f32.mrf.mxu0
    %5025 = vdwg.mxu0
    %5026 = vmatpush.bf16.msra.mxu0 %v3784
    %5027 = vmatpush.bf16.msra.mxu0 %v3780
    %5028 = vmatpush.bf16.msra.mxu0 %v3776
    %5029 = vmatpush.bf16.msra.mxu0 %v3772
    %5030 = vmatpush.bf16.msra.mxu0 %v3768
    %5031 = vmatpush.bf16.msra.mxu0 %v3764
    %5032 = vmatpush.bf16.msra.mxu0 %v3760
    %5033 = vmatpush.bf16.msra.mxu0 %v3756
    %5034 = vmatmul.bf16.gmra.mxu0 %v216
    %v5035 = vpop.f32.mrf.mxu0
    %v5036 = vadd.f32 %v5023, %v5035
    %v5037 = vpop.f32.mrf.mxu0
    %5038 = vdwg.mxu0
    %5039 = vmatpush.bf16.msra.mxu0 %v3816
    %5040 = vmatpush.bf16.msra.mxu0 %v3812
    %5041 = vmatpush.bf16.msra.mxu0 %v3808
    %5042 = vmatpush.bf16.msra.mxu0 %v3804
    %5043 = vmatpush.bf16.msra.mxu0 %v3800
    %5044 = vmatpush.bf16.msra.mxu0 %v3796
    %5045 = vmatpush.bf16.msra.mxu0 %v3792
    %5046 = vmatpush.bf16.msra.mxu0 %v3788
    %5047 = vmatmul.bf16.gmra.mxu0 %v217
    %v5048 = vpop.f32.mrf.mxu0
    %v5049 = vadd.f32 %v5036, %v5048
    %v5050 = vpop.f32.mrf.mxu0
    %5051 = vdwg.mxu0
    %5052 = vmatpush.bf16.msra.mxu0 %v3848
    %5053 = vmatpush.bf16.msra.mxu0 %v3844
    %5054 = vmatpush.bf16.msra.mxu0 %v3840
    %5055 = vmatpush.bf16.msra.mxu0 %v3836
    %5056 = vmatpush.bf16.msra.mxu0 %v3832
    %5057 = vmatpush.bf16.msra.mxu0 %v3828
    %5058 = vmatpush.bf16.msra.mxu0 %v3824
    %5059 = vmatpush.bf16.msra.mxu0 %v3820
    %5060 = vmatmul.bf16.gmra.mxu0 %v218
    %v5061 = vpop.f32.mrf.mxu0
    %v5062 = vadd.f32 %v5049, %v5061
    %v5063 = vpop.f32.mrf.mxu0
    %5064 = vdwg.mxu0
    %5065 = vmatpush.bf16.msra.mxu0 %v3880
    %5066 = vmatpush.bf16.msra.mxu0 %v3876
    %5067 = vmatpush.bf16.msra.mxu0 %v3872
    %5068 = vmatpush.bf16.msra.mxu0 %v3868
    %5069 = vmatpush.bf16.msra.mxu0 %v3864
    %5070 = vmatpush.bf16.msra.mxu0 %v3860
    %5071 = vmatpush.bf16.msra.mxu0 %v3856
    %5072 = vmatpush.bf16.msra.mxu0 %v3852
    %5073 = vmatmul.bf16.gmra.mxu0 %v219
    %v5074 = vpop.f32.mrf.mxu0
    %v5075 = vadd.f32 %v5062, %v5074
    %v5076 = vpop.f32.mrf.mxu0
    %5077 = vdwg.mxu0
    %5078 = vmatpush.bf16.msra.mxu0 %v3912
    %5079 = vmatpush.bf16.msra.mxu0 %v3908
    %5080 = vmatpush.bf16.msra.mxu0 %v3904
    %5081 = vmatpush.bf16.msra.mxu0 %v3900
    %5082 = vmatpush.bf16.msra.mxu0 %v3896
    %5083 = vmatpush.bf16.msra.mxu0 %v3892
    %5084 = vmatpush.bf16.msra.mxu0 %v3888
    %5085 = vmatpush.bf16.msra.mxu0 %v3884
    %5086 = vmatmul.bf16.gmra.mxu0 %v220
    %v5087 = vpop.f32.mrf.mxu0
    %v5088 = vadd.f32 %v5075, %v5087
    %v5089 = vpop.f32.mrf.mxu0
    %5090 = vdwg.mxu0
    %5091 = vmatpush.bf16.msra.mxu0 %v3944
    %5092 = vmatpush.bf16.msra.mxu0 %v3940
    %5093 = vmatpush.bf16.msra.mxu0 %v3936
    %5094 = vmatpush.bf16.msra.mxu0 %v3932
    %5095 = vmatpush.bf16.msra.mxu0 %v3928
    %5096 = vmatpush.bf16.msra.mxu0 %v3924
    %5097 = vmatpush.bf16.msra.mxu0 %v3920
    %5098 = vmatpush.bf16.msra.mxu0 %v3916
    %5099 = vmatmul.bf16.gmra.mxu0 %v221
    %v5100 = vpop.f32.mrf.mxu0
    %v5101 = vadd.f32 %v5088, %v5100
    %v5102 = vpop.f32.mrf.mxu0
    %5103 = vdwg.mxu0
    %5104 = vmatpush.bf16.msra.mxu0 %v3976
    %5105 = vmatpush.bf16.msra.mxu0 %v3972
    %5106 = vmatpush.bf16.msra.mxu0 %v3968
    %5107 = vmatpush.bf16.msra.mxu0 %v3964
    %5108 = vmatpush.bf16.msra.mxu0 %v3960
    %5109 = vmatpush.bf16.msra.mxu0 %v3956
    %5110 = vmatpush.bf16.msra.mxu0 %v3952
    %5111 = vmatpush.bf16.msra.mxu0 %v3948
    %5112 = vmatmul.bf16.gmra.mxu0 %v222
    %v5113 = vpop.f32.mrf.mxu0
    %v5114 = vadd.f32 %v5101, %v5113
    %v5115 = vpop.f32.mrf.mxu0
    %5116 = vdwg.mxu0
    %5117 = vmatpush.bf16.msra.mxu0 %v4008
    %5118 = vmatpush.bf16.msra.mxu0 %v4004
    %5119 = vmatpush.bf16.msra.mxu0 %v4000
    %5120 = vmatpush.bf16.msra.mxu0 %v3996
    %5121 = vmatpush.bf16.msra.mxu0 %v3992
    %5122 = vmatpush.bf16.msra.mxu0 %v3988
    %5123 = vmatpush.bf16.msra.mxu0 %v3984
    %5124 = vmatpush.bf16.msra.mxu0 %v3980
    %5125 = vmatmul.bf16.gmra.mxu0 %v223
    %v5126 = vpop.f32.mrf.mxu0
    %v5127 = vadd.f32 %v5114, %v5126
    %v5128 = vpop.f32.mrf.mxu0
    %5129 = vdwg.mxu0
    %5130 = vmatpush.bf16.msra.mxu0 %v4040
    %5131 = vmatpush.bf16.msra.mxu0 %v4036
    %5132 = vmatpush.bf16.msra.mxu0 %v4032
    %5133 = vmatpush.bf16.msra.mxu0 %v4028
    %5134 = vmatpush.bf16.msra.mxu0 %v4024
    %5135 = vmatpush.bf16.msra.mxu0 %v4020
    %5136 = vmatpush.bf16.msra.mxu0 %v4016
    %5137 = vmatpush.bf16.msra.mxu0 %v4012
    %5138 = vmatmul.bf16.gmra.mxu0 %v224
    %v5139 = vpop.f32.mrf.mxu0
    %v5140 = vadd.f32 %v5127, %v5139
    %v5141 = vpop.f32.mrf.mxu0
    %5142 = vdwg.mxu0
    %5143 = vmatpush.bf16.msra.mxu0 %v4072
    %5144 = vmatpush.bf16.msra.mxu0 %v4068
    %5145 = vmatpush.bf16.msra.mxu0 %v4064
    %5146 = vmatpush.bf16.msra.mxu0 %v4060
    %5147 = vmatpush.bf16.msra.mxu0 %v4056
    %5148 = vmatpush.bf16.msra.mxu0 %v4052
    %5149 = vmatpush.bf16.msra.mxu0 %v4048
    %5150 = vmatpush.bf16.msra.mxu0 %v4044
    %5151 = vmatmul.bf16.gmra.mxu0 %v225
    %v5152 = vpop.f32.mrf.mxu0
    %v5153 = vadd.f32 %v5140, %v5152
    %v5154 = vpop.f32.mrf.mxu0
    %5155 = vdwg.mxu0
    %5156 = vmatpush.bf16.msra.mxu0 %v3337
    %5157 = vmatpush.bf16.msra.mxu0 %v3333
    %5158 = vmatpush.bf16.msra.mxu0 %v3329
    %5159 = vmatpush.bf16.msra.mxu0 %v3325
    %5160 = vmatpush.bf16.msra.mxu0 %v3321
    %5161 = vmatpush.bf16.msra.mxu0 %v3317
    %5162 = vmatpush.bf16.msra.mxu0 %v3313
    %5163 = vmatpush.bf16.msra.mxu0 %v3309
    %5164 = vmatmul.bf16.gmra.mxu0 %v202
    %v5165 = vpop.f32.mrf.mxu0
    %v5166 = vadd.f32 %v997, %v5165
    %v5167 = vpop.f32.mrf.mxu0
    %5168 = vdwg.mxu0
    %5169 = vmatpush.bf16.msra.mxu0 %v3369
    %5170 = vmatpush.bf16.msra.mxu0 %v3365
    %5171 = vmatpush.bf16.msra.mxu0 %v3361
    %5172 = vmatpush.bf16.msra.mxu0 %v3357
    %5173 = vmatpush.bf16.msra.mxu0 %v3353
    %5174 = vmatpush.bf16.msra.mxu0 %v3349
    %5175 = vmatpush.bf16.msra.mxu0 %v3345
    %5176 = vmatpush.bf16.msra.mxu0 %v3341
    %5177 = vmatmul.bf16.gmra.mxu0 %v203
    %v5178 = vpop.f32.mrf.mxu0
    %v5179 = vadd.f32 %v5166, %v5178
    %v5180 = vpop.f32.mrf.mxu0
    %5181 = vdwg.mxu0
    %5182 = vmatpush.bf16.msra.mxu0 %v3401
    %5183 = vmatpush.bf16.msra.mxu0 %v3397
    %5184 = vmatpush.bf16.msra.mxu0 %v3393
    %5185 = vmatpush.bf16.msra.mxu0 %v3389
    %5186 = vmatpush.bf16.msra.mxu0 %v3385
    %5187 = vmatpush.bf16.msra.mxu0 %v3381
    %5188 = vmatpush.bf16.msra.mxu0 %v3377
    %5189 = vmatpush.bf16.msra.mxu0 %v3373
    %5190 = vmatmul.bf16.gmra.mxu0 %v204
    %v5191 = vpop.f32.mrf.mxu0
    %v5192 = vadd.f32 %v5179, %v5191
    %v5193 = vpop.f32.mrf.mxu0
    %5194 = vdwg.mxu0
    %5195 = vmatpush.bf16.msra.mxu0 %v3433
    %5196 = vmatpush.bf16.msra.mxu0 %v3429
    %5197 = vmatpush.bf16.msra.mxu0 %v3425
    %5198 = vmatpush.bf16.msra.mxu0 %v3421
    %5199 = vmatpush.bf16.msra.mxu0 %v3417
    %5200 = vmatpush.bf16.msra.mxu0 %v3413
    %5201 = vmatpush.bf16.msra.mxu0 %v3409
    %5202 = vmatpush.bf16.msra.mxu0 %v3405
    %5203 = vmatmul.bf16.gmra.mxu0 %v205
    %v5204 = vpop.f32.mrf.mxu0
    %v5205 = vadd.f32 %v5192, %v5204
    %v5206 = vpop.f32.mrf.mxu0
    %5207 = vdwg.mxu0
    %5208 = vmatpush.bf16.msra.mxu0 %v3465
    %5209 = vmatpush.bf16.msra.mxu0 %v3461
    %5210 = vmatpush.bf16.msra.mxu0 %v3457
    %5211 = vmatpush.bf16.msra.mxu0 %v3453
    %5212 = vmatpush.bf16.msra.mxu0 %v3449
    %5213 = vmatpush.bf16.msra.mxu0 %v3445
    %5214 = vmatpush.bf16.msra.mxu0 %v3441
    %5215 = vmatpush.bf16.msra.mxu0 %v3437
    %5216 = vmatmul.bf16.gmra.mxu0 %v206
    %v5217 = vpop.f32.mrf.mxu0
    %v5218 = vadd.f32 %v5205, %v5217
    %v5219 = vpop.f32.mrf.mxu0
    %5220 = vdwg.mxu0
    %5221 = vmatpush.bf16.msra.mxu0 %v3497
    %5222 = vmatpush.bf16.msra.mxu0 %v3493
    %5223 = vmatpush.bf16.msra.mxu0 %v3489
    %5224 = vmatpush.bf16.msra.mxu0 %v3485
    %5225 = vmatpush.bf16.msra.mxu0 %v3481
    %5226 = vmatpush.bf16.msra.mxu0 %v3477
    %5227 = vmatpush.bf16.msra.mxu0 %v3473
    %5228 = vmatpush.bf16.msra.mxu0 %v3469
    %5229 = vmatmul.bf16.gmra.mxu0 %v207
    %v5230 = vpop.f32.mrf.mxu0
    %v5231 = vadd.f32 %v5218, %v5230
    %v5232 = vpop.f32.mrf.mxu0
    %5233 = vdwg.mxu0
    %5234 = vmatpush.bf16.msra.mxu0 %v3529
    %5235 = vmatpush.bf16.msra.mxu0 %v3525
    %5236 = vmatpush.bf16.msra.mxu0 %v3521
    %5237 = vmatpush.bf16.msra.mxu0 %v3517
    %5238 = vmatpush.bf16.msra.mxu0 %v3513
    %5239 = vmatpush.bf16.msra.mxu0 %v3509
    %5240 = vmatpush.bf16.msra.mxu0 %v3505
    %5241 = vmatpush.bf16.msra.mxu0 %v3501
    %5242 = vmatmul.bf16.gmra.mxu0 %v208
    %v5243 = vpop.f32.mrf.mxu0
    %v5244 = vadd.f32 %v5231, %v5243
    %v5245 = vpop.f32.mrf.mxu0
    %5246 = vdwg.mxu0
    %5247 = vmatpush.bf16.msra.mxu0 %v3561
    %5248 = vmatpush.bf16.msra.mxu0 %v3557
    %5249 = vmatpush.bf16.msra.mxu0 %v3553
    %5250 = vmatpush.bf16.msra.mxu0 %v3549
    %5251 = vmatpush.bf16.msra.mxu0 %v3545
    %5252 = vmatpush.bf16.msra.mxu0 %v3541
    %5253 = vmatpush.bf16.msra.mxu0 %v3537
    %5254 = vmatpush.bf16.msra.mxu0 %v3533
    %5255 = vmatmul.bf16.gmra.mxu0 %v209
    %v5256 = vpop.f32.mrf.mxu0
    %v5257 = vadd.f32 %v5244, %v5256
    %v5258 = vpop.f32.mrf.mxu0
    %5259 = vdwg.mxu0
    %5260 = vmatpush.bf16.msra.mxu0 %v3593
    %5261 = vmatpush.bf16.msra.mxu0 %v3589
    %5262 = vmatpush.bf16.msra.mxu0 %v3585
    %5263 = vmatpush.bf16.msra.mxu0 %v3581
    %5264 = vmatpush.bf16.msra.mxu0 %v3577
    %5265 = vmatpush.bf16.msra.mxu0 %v3573
    %5266 = vmatpush.bf16.msra.mxu0 %v3569
    %5267 = vmatpush.bf16.msra.mxu0 %v3565
    %5268 = vmatmul.bf16.gmra.mxu0 %v210
    %v5269 = vpop.f32.mrf.mxu0
    %v5270 = vadd.f32 %v5257, %v5269
    %v5271 = vpop.f32.mrf.mxu0
    %5272 = vdwg.mxu0
    %5273 = vmatpush.bf16.msra.mxu0 %v3625
    %5274 = vmatpush.bf16.msra.mxu0 %v3621
    %5275 = vmatpush.bf16.msra.mxu0 %v3617
    %5276 = vmatpush.bf16.msra.mxu0 %v3613
    %5277 = vmatpush.bf16.msra.mxu0 %v3609
    %5278 = vmatpush.bf16.msra.mxu0 %v3605
    %5279 = vmatpush.bf16.msra.mxu0 %v3601
    %5280 = vmatpush.bf16.msra.mxu0 %v3597
    %5281 = vmatmul.bf16.gmra.mxu0 %v211
    %v5282 = vpop.f32.mrf.mxu0
    %v5283 = vadd.f32 %v5270, %v5282
    %v5284 = vpop.f32.mrf.mxu0
    %5285 = vdwg.mxu0
    %5286 = vmatpush.bf16.msra.mxu0 %v3657
    %5287 = vmatpush.bf16.msra.mxu0 %v3653
    %5288 = vmatpush.bf16.msra.mxu0 %v3649
    %5289 = vmatpush.bf16.msra.mxu0 %v3645
    %5290 = vmatpush.bf16.msra.mxu0 %v3641
    %5291 = vmatpush.bf16.msra.mxu0 %v3637
    %5292 = vmatpush.bf16.msra.mxu0 %v3633
    %5293 = vmatpush.bf16.msra.mxu0 %v3629
    %5294 = vmatmul.bf16.gmra.mxu0 %v212
    %v5295 = vpop.f32.mrf.mxu0
    %v5296 = vadd.f32 %v5283, %v5295
    %v5297 = vpop.f32.mrf.mxu0
    %5298 = vdwg.mxu0
    %5299 = vmatpush.bf16.msra.mxu0 %v3689
    %5300 = vmatpush.bf16.msra.mxu0 %v3685
    %5301 = vmatpush.bf16.msra.mxu0 %v3681
    %5302 = vmatpush.bf16.msra.mxu0 %v3677
    %5303 = vmatpush.bf16.msra.mxu0 %v3673
    %5304 = vmatpush.bf16.msra.mxu0 %v3669
    %5305 = vmatpush.bf16.msra.mxu0 %v3665
    %5306 = vmatpush.bf16.msra.mxu0 %v3661
    %5307 = vmatmul.bf16.gmra.mxu0 %v213
    %v5308 = vpop.f32.mrf.mxu0
    %v5309 = vadd.f32 %v5296, %v5308
    %v5310 = vpop.f32.mrf.mxu0
    %5311 = vdwg.mxu0
    %5312 = vmatpush.bf16.msra.mxu0 %v3721
    %5313 = vmatpush.bf16.msra.mxu0 %v3717
    %5314 = vmatpush.bf16.msra.mxu0 %v3713
    %5315 = vmatpush.bf16.msra.mxu0 %v3709
    %5316 = vmatpush.bf16.msra.mxu0 %v3705
    %5317 = vmatpush.bf16.msra.mxu0 %v3701
    %5318 = vmatpush.bf16.msra.mxu0 %v3697
    %5319 = vmatpush.bf16.msra.mxu0 %v3693
    %5320 = vmatmul.bf16.gmra.mxu0 %v214
    %v5321 = vpop.f32.mrf.mxu0
    %v5322 = vadd.f32 %v5309, %v5321
    %v5323 = vpop.f32.mrf.mxu0
    %5324 = vdwg.mxu0
    %5325 = vmatpush.bf16.msra.mxu0 %v3753
    %5326 = vmatpush.bf16.msra.mxu0 %v3749
    %5327 = vmatpush.bf16.msra.mxu0 %v3745
    %5328 = vmatpush.bf16.msra.mxu0 %v3741
    %5329 = vmatpush.bf16.msra.mxu0 %v3737
    %5330 = vmatpush.bf16.msra.mxu0 %v3733
    %5331 = vmatpush.bf16.msra.mxu0 %v3729
    %5332 = vmatpush.bf16.msra.mxu0 %v3725
    %5333 = vmatmul.bf16.gmra.mxu0 %v215
    %v5334 = vpop.f32.mrf.mxu0
    %v5335 = vadd.f32 %v5322, %v5334
    %v5336 = vpop.f32.mrf.mxu0
    %5337 = vdwg.mxu0
    %5338 = vmatpush.bf16.msra.mxu0 %v3785
    %5339 = vmatpush.bf16.msra.mxu0 %v3781
    %5340 = vmatpush.bf16.msra.mxu0 %v3777
    %5341 = vmatpush.bf16.msra.mxu0 %v3773
    %5342 = vmatpush.bf16.msra.mxu0 %v3769
    %5343 = vmatpush.bf16.msra.mxu0 %v3765
    %5344 = vmatpush.bf16.msra.mxu0 %v3761
    %5345 = vmatpush.bf16.msra.mxu0 %v3757
    %5346 = vmatmul.bf16.gmra.mxu0 %v216
    %v5347 = vpop.f32.mrf.mxu0
    %v5348 = vadd.f32 %v5335, %v5347
    %v5349 = vpop.f32.mrf.mxu0
    %5350 = vdwg.mxu0
    %5351 = vmatpush.bf16.msra.mxu0 %v3817
    %5352 = vmatpush.bf16.msra.mxu0 %v3813
    %5353 = vmatpush.bf16.msra.mxu0 %v3809
    %5354 = vmatpush.bf16.msra.mxu0 %v3805
    %5355 = vmatpush.bf16.msra.mxu0 %v3801
    %5356 = vmatpush.bf16.msra.mxu0 %v3797
    %5357 = vmatpush.bf16.msra.mxu0 %v3793
    %5358 = vmatpush.bf16.msra.mxu0 %v3789
    %5359 = vmatmul.bf16.gmra.mxu0 %v217
    %v5360 = vpop.f32.mrf.mxu0
    %v5361 = vadd.f32 %v5348, %v5360
    %v5362 = vpop.f32.mrf.mxu0
    %5363 = vdwg.mxu0
    %5364 = vmatpush.bf16.msra.mxu0 %v3849
    %5365 = vmatpush.bf16.msra.mxu0 %v3845
    %5366 = vmatpush.bf16.msra.mxu0 %v3841
    %5367 = vmatpush.bf16.msra.mxu0 %v3837
    %5368 = vmatpush.bf16.msra.mxu0 %v3833
    %5369 = vmatpush.bf16.msra.mxu0 %v3829
    %5370 = vmatpush.bf16.msra.mxu0 %v3825
    %5371 = vmatpush.bf16.msra.mxu0 %v3821
    %5372 = vmatmul.bf16.gmra.mxu0 %v218
    %v5373 = vpop.f32.mrf.mxu0
    %v5374 = vadd.f32 %v5361, %v5373
    %v5375 = vpop.f32.mrf.mxu0
    %5376 = vdwg.mxu0
    %5377 = vmatpush.bf16.msra.mxu0 %v3881
    %5378 = vmatpush.bf16.msra.mxu0 %v3877
    %5379 = vmatpush.bf16.msra.mxu0 %v3873
    %5380 = vmatpush.bf16.msra.mxu0 %v3869
    %5381 = vmatpush.bf16.msra.mxu0 %v3865
    %5382 = vmatpush.bf16.msra.mxu0 %v3861
    %5383 = vmatpush.bf16.msra.mxu0 %v3857
    %5384 = vmatpush.bf16.msra.mxu0 %v3853
    %5385 = vmatmul.bf16.gmra.mxu0 %v219
    %v5386 = vpop.f32.mrf.mxu0
    %v5387 = vadd.f32 %v5374, %v5386
    %v5388 = vpop.f32.mrf.mxu0
    %5389 = vdwg.mxu0
    %5390 = vmatpush.bf16.msra.mxu0 %v3913
    %5391 = vmatpush.bf16.msra.mxu0 %v3909
    %5392 = vmatpush.bf16.msra.mxu0 %v3905
    %5393 = vmatpush.bf16.msra.mxu0 %v3901
    %5394 = vmatpush.bf16.msra.mxu0 %v3897
    %5395 = vmatpush.bf16.msra.mxu0 %v3893
    %5396 = vmatpush.bf16.msra.mxu0 %v3889
    %5397 = vmatpush.bf16.msra.mxu0 %v3885
    %5398 = vmatmul.bf16.gmra.mxu0 %v220
    %v5399 = vpop.f32.mrf.mxu0
    %v5400 = vadd.f32 %v5387, %v5399
    %v5401 = vpop.f32.mrf.mxu0
    %5402 = vdwg.mxu0
    %5403 = vmatpush.bf16.msra.mxu0 %v3945
    %5404 = vmatpush.bf16.msra.mxu0 %v3941
    %5405 = vmatpush.bf16.msra.mxu0 %v3937
    %5406 = vmatpush.bf16.msra.mxu0 %v3933
    %5407 = vmatpush.bf16.msra.mxu0 %v3929
    %5408 = vmatpush.bf16.msra.mxu0 %v3925
    %5409 = vmatpush.bf16.msra.mxu0 %v3921
    %5410 = vmatpush.bf16.msra.mxu0 %v3917
    %5411 = vmatmul.bf16.gmra.mxu0 %v221
    %v5412 = vpop.f32.mrf.mxu0
    %v5413 = vadd.f32 %v5400, %v5412
    %v5414 = vpop.f32.mrf.mxu0
    %5415 = vdwg.mxu0
    %5416 = vmatpush.bf16.msra.mxu0 %v3977
    %5417 = vmatpush.bf16.msra.mxu0 %v3973
    %5418 = vmatpush.bf16.msra.mxu0 %v3969
    %5419 = vmatpush.bf16.msra.mxu0 %v3965
    %5420 = vmatpush.bf16.msra.mxu0 %v3961
    %5421 = vmatpush.bf16.msra.mxu0 %v3957
    %5422 = vmatpush.bf16.msra.mxu0 %v3953
    %5423 = vmatpush.bf16.msra.mxu0 %v3949
    %5424 = vmatmul.bf16.gmra.mxu0 %v222
    %v5425 = vpop.f32.mrf.mxu0
    %v5426 = vadd.f32 %v5413, %v5425
    %v5427 = vpop.f32.mrf.mxu0
    %5428 = vdwg.mxu0
    %5429 = vmatpush.bf16.msra.mxu0 %v4009
    %5430 = vmatpush.bf16.msra.mxu0 %v4005
    %5431 = vmatpush.bf16.msra.mxu0 %v4001
    %5432 = vmatpush.bf16.msra.mxu0 %v3997
    %5433 = vmatpush.bf16.msra.mxu0 %v3993
    %5434 = vmatpush.bf16.msra.mxu0 %v3989
    %5435 = vmatpush.bf16.msra.mxu0 %v3985
    %5436 = vmatpush.bf16.msra.mxu0 %v3981
    %5437 = vmatmul.bf16.gmra.mxu0 %v223
    %v5438 = vpop.f32.mrf.mxu0
    %v5439 = vadd.f32 %v5426, %v5438
    %v5440 = vpop.f32.mrf.mxu0
    %5441 = vdwg.mxu0
    %5442 = vmatpush.bf16.msra.mxu0 %v4041
    %5443 = vmatpush.bf16.msra.mxu0 %v4037
    %5444 = vmatpush.bf16.msra.mxu0 %v4033
    %5445 = vmatpush.bf16.msra.mxu0 %v4029
    %5446 = vmatpush.bf16.msra.mxu0 %v4025
    %5447 = vmatpush.bf16.msra.mxu0 %v4021
    %5448 = vmatpush.bf16.msra.mxu0 %v4017
    %5449 = vmatpush.bf16.msra.mxu0 %v4013
    %5450 = vmatmul.bf16.gmra.mxu0 %v224
    %v5451 = vpop.f32.mrf.mxu0
    %v5452 = vadd.f32 %v5439, %v5451
    %v5453 = vpop.f32.mrf.mxu0
    %5454 = vdwg.mxu0
    %5455 = vmatpush.bf16.msra.mxu0 %v4073
    %5456 = vmatpush.bf16.msra.mxu0 %v4069
    %5457 = vmatpush.bf16.msra.mxu0 %v4065
    %5458 = vmatpush.bf16.msra.mxu0 %v4061
    %5459 = vmatpush.bf16.msra.mxu0 %v4057
    %5460 = vmatpush.bf16.msra.mxu0 %v4053
    %5461 = vmatpush.bf16.msra.mxu0 %v4049
    %5462 = vmatpush.bf16.msra.mxu0 %v4045
    %5463 = vmatmul.bf16.gmra.mxu0 %v225
    %v5464 = vpop.f32.mrf.mxu0
    %v5465 = vadd.f32 %v5452, %v5464
    %v5466 = vpop.f32.mrf.mxu0
    %5467 = vdwg.mxu0
    %5468 = vmatpush.bf16.msra.mxu0 %v3338
    %5469 = vmatpush.bf16.msra.mxu0 %v3334
    %5470 = vmatpush.bf16.msra.mxu0 %v3330
    %5471 = vmatpush.bf16.msra.mxu0 %v3326
    %5472 = vmatpush.bf16.msra.mxu0 %v3322
    %5473 = vmatpush.bf16.msra.mxu0 %v3318
    %5474 = vmatpush.bf16.msra.mxu0 %v3314
    %5475 = vmatpush.bf16.msra.mxu0 %v3310
    %5476 = vmatmul.bf16.gmra.mxu0 %v202
    %v5477 = vpop.f32.mrf.mxu0
    %v5478 = vadd.f32 %v998, %v5477
    %v5479 = vpop.f32.mrf.mxu0
    %5480 = vdwg.mxu0
    %5481 = vmatpush.bf16.msra.mxu0 %v3370
    %5482 = vmatpush.bf16.msra.mxu0 %v3366
    %5483 = vmatpush.bf16.msra.mxu0 %v3362
    %5484 = vmatpush.bf16.msra.mxu0 %v3358
    %5485 = vmatpush.bf16.msra.mxu0 %v3354
    %5486 = vmatpush.bf16.msra.mxu0 %v3350
    %5487 = vmatpush.bf16.msra.mxu0 %v3346
    %5488 = vmatpush.bf16.msra.mxu0 %v3342
    %5489 = vmatmul.bf16.gmra.mxu0 %v203
    %v5490 = vpop.f32.mrf.mxu0
    %v5491 = vadd.f32 %v5478, %v5490
    %v5492 = vpop.f32.mrf.mxu0
    %5493 = vdwg.mxu0
    %5494 = vmatpush.bf16.msra.mxu0 %v3402
    %5495 = vmatpush.bf16.msra.mxu0 %v3398
    %5496 = vmatpush.bf16.msra.mxu0 %v3394
    %5497 = vmatpush.bf16.msra.mxu0 %v3390
    %5498 = vmatpush.bf16.msra.mxu0 %v3386
    %5499 = vmatpush.bf16.msra.mxu0 %v3382
    %5500 = vmatpush.bf16.msra.mxu0 %v3378
    %5501 = vmatpush.bf16.msra.mxu0 %v3374
    %5502 = vmatmul.bf16.gmra.mxu0 %v204
    %v5503 = vpop.f32.mrf.mxu0
    %v5504 = vadd.f32 %v5491, %v5503
    %v5505 = vpop.f32.mrf.mxu0
    %5506 = vdwg.mxu0
    %5507 = vmatpush.bf16.msra.mxu0 %v3434
    %5508 = vmatpush.bf16.msra.mxu0 %v3430
    %5509 = vmatpush.bf16.msra.mxu0 %v3426
    %5510 = vmatpush.bf16.msra.mxu0 %v3422
    %5511 = vmatpush.bf16.msra.mxu0 %v3418
    %5512 = vmatpush.bf16.msra.mxu0 %v3414
    %5513 = vmatpush.bf16.msra.mxu0 %v3410
    %5514 = vmatpush.bf16.msra.mxu0 %v3406
    %5515 = vmatmul.bf16.gmra.mxu0 %v205
    %v5516 = vpop.f32.mrf.mxu0
    %v5517 = vadd.f32 %v5504, %v5516
    %v5518 = vpop.f32.mrf.mxu0
    %5519 = vdwg.mxu0
    %5520 = vmatpush.bf16.msra.mxu0 %v3466
    %5521 = vmatpush.bf16.msra.mxu0 %v3462
    %5522 = vmatpush.bf16.msra.mxu0 %v3458
    %5523 = vmatpush.bf16.msra.mxu0 %v3454
    %5524 = vmatpush.bf16.msra.mxu0 %v3450
    %5525 = vmatpush.bf16.msra.mxu0 %v3446
    %5526 = vmatpush.bf16.msra.mxu0 %v3442
    %5527 = vmatpush.bf16.msra.mxu0 %v3438
    %5528 = vmatmul.bf16.gmra.mxu0 %v206
    %v5529 = vpop.f32.mrf.mxu0
    %v5530 = vadd.f32 %v5517, %v5529
    %v5531 = vpop.f32.mrf.mxu0
    %5532 = vdwg.mxu0
    %5533 = vmatpush.bf16.msra.mxu0 %v3498
    %5534 = vmatpush.bf16.msra.mxu0 %v3494
    %5535 = vmatpush.bf16.msra.mxu0 %v3490
    %5536 = vmatpush.bf16.msra.mxu0 %v3486
    %5537 = vmatpush.bf16.msra.mxu0 %v3482
    %5538 = vmatpush.bf16.msra.mxu0 %v3478
    %5539 = vmatpush.bf16.msra.mxu0 %v3474
    %5540 = vmatpush.bf16.msra.mxu0 %v3470
    %5541 = vmatmul.bf16.gmra.mxu0 %v207
    %v5542 = vpop.f32.mrf.mxu0
    %v5543 = vadd.f32 %v5530, %v5542
    %v5544 = vpop.f32.mrf.mxu0
    %5545 = vdwg.mxu0
    %5546 = vmatpush.bf16.msra.mxu0 %v3530
    %5547 = vmatpush.bf16.msra.mxu0 %v3526
    %5548 = vmatpush.bf16.msra.mxu0 %v3522
    %5549 = vmatpush.bf16.msra.mxu0 %v3518
    %5550 = vmatpush.bf16.msra.mxu0 %v3514
    %5551 = vmatpush.bf16.msra.mxu0 %v3510
    %5552 = vmatpush.bf16.msra.mxu0 %v3506
    %5553 = vmatpush.bf16.msra.mxu0 %v3502
    %5554 = vmatmul.bf16.gmra.mxu0 %v208
    %v5555 = vpop.f32.mrf.mxu0
    %v5556 = vadd.f32 %v5543, %v5555
    %v5557 = vpop.f32.mrf.mxu0
    %5558 = vdwg.mxu0
    %5559 = vmatpush.bf16.msra.mxu0 %v3562
    %5560 = vmatpush.bf16.msra.mxu0 %v3558
    %5561 = vmatpush.bf16.msra.mxu0 %v3554
    %5562 = vmatpush.bf16.msra.mxu0 %v3550
    %5563 = vmatpush.bf16.msra.mxu0 %v3546
    %5564 = vmatpush.bf16.msra.mxu0 %v3542
    %5565 = vmatpush.bf16.msra.mxu0 %v3538
    %5566 = vmatpush.bf16.msra.mxu0 %v3534
    %5567 = vmatmul.bf16.gmra.mxu0 %v209
    %v5568 = vpop.f32.mrf.mxu0
    %v5569 = vadd.f32 %v5556, %v5568
    %v5570 = vpop.f32.mrf.mxu0
    %5571 = vdwg.mxu0
    %5572 = vmatpush.bf16.msra.mxu0 %v3594
    %5573 = vmatpush.bf16.msra.mxu0 %v3590
    %5574 = vmatpush.bf16.msra.mxu0 %v3586
    %5575 = vmatpush.bf16.msra.mxu0 %v3582
    %5576 = vmatpush.bf16.msra.mxu0 %v3578
    %5577 = vmatpush.bf16.msra.mxu0 %v3574
    %5578 = vmatpush.bf16.msra.mxu0 %v3570
    %5579 = vmatpush.bf16.msra.mxu0 %v3566
    %5580 = vmatmul.bf16.gmra.mxu0 %v210
    %v5581 = vpop.f32.mrf.mxu0
    %v5582 = vadd.f32 %v5569, %v5581
    %v5583 = vpop.f32.mrf.mxu0
    %5584 = vdwg.mxu0
    %5585 = vmatpush.bf16.msra.mxu0 %v3626
    %5586 = vmatpush.bf16.msra.mxu0 %v3622
    %5587 = vmatpush.bf16.msra.mxu0 %v3618
    %5588 = vmatpush.bf16.msra.mxu0 %v3614
    %5589 = vmatpush.bf16.msra.mxu0 %v3610
    %5590 = vmatpush.bf16.msra.mxu0 %v3606
    %5591 = vmatpush.bf16.msra.mxu0 %v3602
    %5592 = vmatpush.bf16.msra.mxu0 %v3598
    %5593 = vmatmul.bf16.gmra.mxu0 %v211
    %v5594 = vpop.f32.mrf.mxu0
    %v5595 = vadd.f32 %v5582, %v5594
    %v5596 = vpop.f32.mrf.mxu0
    %5597 = vdwg.mxu0
    %5598 = vmatpush.bf16.msra.mxu0 %v3658
    %5599 = vmatpush.bf16.msra.mxu0 %v3654
    %5600 = vmatpush.bf16.msra.mxu0 %v3650
    %5601 = vmatpush.bf16.msra.mxu0 %v3646
    %5602 = vmatpush.bf16.msra.mxu0 %v3642
    %5603 = vmatpush.bf16.msra.mxu0 %v3638
    %5604 = vmatpush.bf16.msra.mxu0 %v3634
    %5605 = vmatpush.bf16.msra.mxu0 %v3630
    %5606 = vmatmul.bf16.gmra.mxu0 %v212
    %v5607 = vpop.f32.mrf.mxu0
    %v5608 = vadd.f32 %v5595, %v5607
    %v5609 = vpop.f32.mrf.mxu0
    %5610 = vdwg.mxu0
    %5611 = vmatpush.bf16.msra.mxu0 %v3690
    %5612 = vmatpush.bf16.msra.mxu0 %v3686
    %5613 = vmatpush.bf16.msra.mxu0 %v3682
    %5614 = vmatpush.bf16.msra.mxu0 %v3678
    %5615 = vmatpush.bf16.msra.mxu0 %v3674
    %5616 = vmatpush.bf16.msra.mxu0 %v3670
    %5617 = vmatpush.bf16.msra.mxu0 %v3666
    %5618 = vmatpush.bf16.msra.mxu0 %v3662
    %5619 = vmatmul.bf16.gmra.mxu0 %v213
    %v5620 = vpop.f32.mrf.mxu0
    %v5621 = vadd.f32 %v5608, %v5620
    %v5622 = vpop.f32.mrf.mxu0
    %5623 = vdwg.mxu0
    %5624 = vmatpush.bf16.msra.mxu0 %v3722
    %5625 = vmatpush.bf16.msra.mxu0 %v3718
    %5626 = vmatpush.bf16.msra.mxu0 %v3714
    %5627 = vmatpush.bf16.msra.mxu0 %v3710
    %5628 = vmatpush.bf16.msra.mxu0 %v3706
    %5629 = vmatpush.bf16.msra.mxu0 %v3702
    %5630 = vmatpush.bf16.msra.mxu0 %v3698
    %5631 = vmatpush.bf16.msra.mxu0 %v3694
    %5632 = vmatmul.bf16.gmra.mxu0 %v214
    %v5633 = vpop.f32.mrf.mxu0
    %v5634 = vadd.f32 %v5621, %v5633
    %v5635 = vpop.f32.mrf.mxu0
    %5636 = vdwg.mxu0
    %5637 = vmatpush.bf16.msra.mxu0 %v3754
    %5638 = vmatpush.bf16.msra.mxu0 %v3750
    %5639 = vmatpush.bf16.msra.mxu0 %v3746
    %5640 = vmatpush.bf16.msra.mxu0 %v3742
    %5641 = vmatpush.bf16.msra.mxu0 %v3738
    %5642 = vmatpush.bf16.msra.mxu0 %v3734
    %5643 = vmatpush.bf16.msra.mxu0 %v3730
    %5644 = vmatpush.bf16.msra.mxu0 %v3726
    %5645 = vmatmul.bf16.gmra.mxu0 %v215
    %v5646 = vpop.f32.mrf.mxu0
    %v5647 = vadd.f32 %v5634, %v5646
    %v5648 = vpop.f32.mrf.mxu0
    %5649 = vdwg.mxu0
    %5650 = vmatpush.bf16.msra.mxu0 %v3786
    %5651 = vmatpush.bf16.msra.mxu0 %v3782
    %5652 = vmatpush.bf16.msra.mxu0 %v3778
    %5653 = vmatpush.bf16.msra.mxu0 %v3774
    %5654 = vmatpush.bf16.msra.mxu0 %v3770
    %5655 = vmatpush.bf16.msra.mxu0 %v3766
    %5656 = vmatpush.bf16.msra.mxu0 %v3762
    %5657 = vmatpush.bf16.msra.mxu0 %v3758
    %5658 = vmatmul.bf16.gmra.mxu0 %v216
    %v5659 = vpop.f32.mrf.mxu0
    %v5660 = vadd.f32 %v5647, %v5659
    %v5661 = vpop.f32.mrf.mxu0
    %5662 = vdwg.mxu0
    %5663 = vmatpush.bf16.msra.mxu0 %v3818
    %5664 = vmatpush.bf16.msra.mxu0 %v3814
    %5665 = vmatpush.bf16.msra.mxu0 %v3810
    %5666 = vmatpush.bf16.msra.mxu0 %v3806
    %5667 = vmatpush.bf16.msra.mxu0 %v3802
    %5668 = vmatpush.bf16.msra.mxu0 %v3798
    %5669 = vmatpush.bf16.msra.mxu0 %v3794
    %5670 = vmatpush.bf16.msra.mxu0 %v3790
    %5671 = vmatmul.bf16.gmra.mxu0 %v217
    %v5672 = vpop.f32.mrf.mxu0
    %v5673 = vadd.f32 %v5660, %v5672
    %v5674 = vpop.f32.mrf.mxu0
    %5675 = vdwg.mxu0
    %5676 = vmatpush.bf16.msra.mxu0 %v3850
    %5677 = vmatpush.bf16.msra.mxu0 %v3846
    %5678 = vmatpush.bf16.msra.mxu0 %v3842
    %5679 = vmatpush.bf16.msra.mxu0 %v3838
    %5680 = vmatpush.bf16.msra.mxu0 %v3834
    %5681 = vmatpush.bf16.msra.mxu0 %v3830
    %5682 = vmatpush.bf16.msra.mxu0 %v3826
    %5683 = vmatpush.bf16.msra.mxu0 %v3822
    %5684 = vmatmul.bf16.gmra.mxu0 %v218
    %v5685 = vpop.f32.mrf.mxu0
    %v5686 = vadd.f32 %v5673, %v5685
    %v5687 = vpop.f32.mrf.mxu0
    %5688 = vdwg.mxu0
    %5689 = vmatpush.bf16.msra.mxu0 %v3882
    %5690 = vmatpush.bf16.msra.mxu0 %v3878
    %5691 = vmatpush.bf16.msra.mxu0 %v3874
    %5692 = vmatpush.bf16.msra.mxu0 %v3870
    %5693 = vmatpush.bf16.msra.mxu0 %v3866
    %5694 = vmatpush.bf16.msra.mxu0 %v3862
    %5695 = vmatpush.bf16.msra.mxu0 %v3858
    %5696 = vmatpush.bf16.msra.mxu0 %v3854
    %5697 = vmatmul.bf16.gmra.mxu0 %v219
    %v5698 = vpop.f32.mrf.mxu0
    %v5699 = vadd.f32 %v5686, %v5698
    %v5700 = vpop.f32.mrf.mxu0
    %5701 = vdwg.mxu0
    %5702 = vmatpush.bf16.msra.mxu0 %v3914
    %5703 = vmatpush.bf16.msra.mxu0 %v3910
    %5704 = vmatpush.bf16.msra.mxu0 %v3906
    %5705 = vmatpush.bf16.msra.mxu0 %v3902
    %5706 = vmatpush.bf16.msra.mxu0 %v3898
    %5707 = vmatpush.bf16.msra.mxu0 %v3894
    %5708 = vmatpush.bf16.msra.mxu0 %v3890
    %5709 = vmatpush.bf16.msra.mxu0 %v3886
    %5710 = vmatmul.bf16.gmra.mxu0 %v220
    %v5711 = vpop.f32.mrf.mxu0
    %v5712 = vadd.f32 %v5699, %v5711
    %v5713 = vpop.f32.mrf.mxu0
    %5714 = vdwg.mxu0
    %5715 = vmatpush.bf16.msra.mxu0 %v3946
    %5716 = vmatpush.bf16.msra.mxu0 %v3942
    %5717 = vmatpush.bf16.msra.mxu0 %v3938
    %5718 = vmatpush.bf16.msra.mxu0 %v3934
    %5719 = vmatpush.bf16.msra.mxu0 %v3930
    %5720 = vmatpush.bf16.msra.mxu0 %v3926
    %5721 = vmatpush.bf16.msra.mxu0 %v3922
    %5722 = vmatpush.bf16.msra.mxu0 %v3918
    %5723 = vmatmul.bf16.gmra.mxu0 %v221
    %v5724 = vpop.f32.mrf.mxu0
    %v5725 = vadd.f32 %v5712, %v5724
    %v5726 = vpop.f32.mrf.mxu0
    %5727 = vdwg.mxu0
    %5728 = vmatpush.bf16.msra.mxu0 %v3978
    %5729 = vmatpush.bf16.msra.mxu0 %v3974
    %5730 = vmatpush.bf16.msra.mxu0 %v3970
    %5731 = vmatpush.bf16.msra.mxu0 %v3966
    %5732 = vmatpush.bf16.msra.mxu0 %v3962
    %5733 = vmatpush.bf16.msra.mxu0 %v3958
    %5734 = vmatpush.bf16.msra.mxu0 %v3954
    %5735 = vmatpush.bf16.msra.mxu0 %v3950
    %5736 = vmatmul.bf16.gmra.mxu0 %v222
    %v5737 = vpop.f32.mrf.mxu0
    %v5738 = vadd.f32 %v5725, %v5737
    %v5739 = vpop.f32.mrf.mxu0
    %5740 = vdwg.mxu0
    %5741 = vmatpush.bf16.msra.mxu0 %v4010
    %5742 = vmatpush.bf16.msra.mxu0 %v4006
    %5743 = vmatpush.bf16.msra.mxu0 %v4002
    %5744 = vmatpush.bf16.msra.mxu0 %v3998
    %5745 = vmatpush.bf16.msra.mxu0 %v3994
    %5746 = vmatpush.bf16.msra.mxu0 %v3990
    %5747 = vmatpush.bf16.msra.mxu0 %v3986
    %5748 = vmatpush.bf16.msra.mxu0 %v3982
    %5749 = vmatmul.bf16.gmra.mxu0 %v223
    %v5750 = vpop.f32.mrf.mxu0
    %v5751 = vadd.f32 %v5738, %v5750
    %v5752 = vpop.f32.mrf.mxu0
    %5753 = vdwg.mxu0
    %5754 = vmatpush.bf16.msra.mxu0 %v4042
    %5755 = vmatpush.bf16.msra.mxu0 %v4038
    %5756 = vmatpush.bf16.msra.mxu0 %v4034
    %5757 = vmatpush.bf16.msra.mxu0 %v4030
    %5758 = vmatpush.bf16.msra.mxu0 %v4026
    %5759 = vmatpush.bf16.msra.mxu0 %v4022
    %5760 = vmatpush.bf16.msra.mxu0 %v4018
    %5761 = vmatpush.bf16.msra.mxu0 %v4014
    %5762 = vmatmul.bf16.gmra.mxu0 %v224
    %v5763 = vpop.f32.mrf.mxu0
    %v5764 = vadd.f32 %v5751, %v5763
    %v5765 = vpop.f32.mrf.mxu0
    %5766 = vdwg.mxu0
    %5767 = vmatpush.bf16.msra.mxu0 %v4074
    %5768 = vmatpush.bf16.msra.mxu0 %v4070
    %5769 = vmatpush.bf16.msra.mxu0 %v4066
    %5770 = vmatpush.bf16.msra.mxu0 %v4062
    %5771 = vmatpush.bf16.msra.mxu0 %v4058
    %5772 = vmatpush.bf16.msra.mxu0 %v4054
    %5773 = vmatpush.bf16.msra.mxu0 %v4050
    %5774 = vmatpush.bf16.msra.mxu0 %v4046
    %5775 = vmatmul.bf16.gmra.mxu0 %v225
    %v5776 = vpop.f32.mrf.mxu0
    %v5777 = vadd.f32 %v5764, %v5776
    %v5778 = vpop.f32.mrf.mxu0
    %5779 = vdwg.mxu0
    %5780 = vmatpush.bf16.msra.mxu0 %v3339
    %5781 = vmatpush.bf16.msra.mxu0 %v3335
    %5782 = vmatpush.bf16.msra.mxu0 %v3331
    %5783 = vmatpush.bf16.msra.mxu0 %v3327
    %5784 = vmatpush.bf16.msra.mxu0 %v3323
    %5785 = vmatpush.bf16.msra.mxu0 %v3319
    %5786 = vmatpush.bf16.msra.mxu0 %v3315
    %5787 = vmatpush.bf16.msra.mxu0 %v3311
    %5788 = vmatmul.bf16.gmra.mxu0 %v202
    %v5789 = vpop.f32.mrf.mxu0
    %v5790 = vadd.f32 %v999, %v5789
    %v5791 = vpop.f32.mrf.mxu0
    %5792 = vdwg.mxu0
    %5793 = vmatpush.bf16.msra.mxu0 %v3371
    %5794 = vmatpush.bf16.msra.mxu0 %v3367
    %5795 = vmatpush.bf16.msra.mxu0 %v3363
    %5796 = vmatpush.bf16.msra.mxu0 %v3359
    %5797 = vmatpush.bf16.msra.mxu0 %v3355
    %5798 = vmatpush.bf16.msra.mxu0 %v3351
    %5799 = vmatpush.bf16.msra.mxu0 %v3347
    %5800 = vmatpush.bf16.msra.mxu0 %v3343
    %5801 = vmatmul.bf16.gmra.mxu0 %v203
    %v5802 = vpop.f32.mrf.mxu0
    %v5803 = vadd.f32 %v5790, %v5802
    %v5804 = vpop.f32.mrf.mxu0
    %5805 = vdwg.mxu0
    %5806 = vmatpush.bf16.msra.mxu0 %v3403
    %5807 = vmatpush.bf16.msra.mxu0 %v3399
    %5808 = vmatpush.bf16.msra.mxu0 %v3395
    %5809 = vmatpush.bf16.msra.mxu0 %v3391
    %5810 = vmatpush.bf16.msra.mxu0 %v3387
    %5811 = vmatpush.bf16.msra.mxu0 %v3383
    %5812 = vmatpush.bf16.msra.mxu0 %v3379
    %5813 = vmatpush.bf16.msra.mxu0 %v3375
    %5814 = vmatmul.bf16.gmra.mxu0 %v204
    %v5815 = vpop.f32.mrf.mxu0
    %v5816 = vadd.f32 %v5803, %v5815
    %v5817 = vpop.f32.mrf.mxu0
    %5818 = vdwg.mxu0
    %5819 = vmatpush.bf16.msra.mxu0 %v3435
    %5820 = vmatpush.bf16.msra.mxu0 %v3431
    %5821 = vmatpush.bf16.msra.mxu0 %v3427
    %5822 = vmatpush.bf16.msra.mxu0 %v3423
    %5823 = vmatpush.bf16.msra.mxu0 %v3419
    %5824 = vmatpush.bf16.msra.mxu0 %v3415
    %5825 = vmatpush.bf16.msra.mxu0 %v3411
    %5826 = vmatpush.bf16.msra.mxu0 %v3407
    %5827 = vmatmul.bf16.gmra.mxu0 %v205
    %v5828 = vpop.f32.mrf.mxu0
    %v5829 = vadd.f32 %v5816, %v5828
    %v5830 = vpop.f32.mrf.mxu0
    %5831 = vdwg.mxu0
    %5832 = vmatpush.bf16.msra.mxu0 %v3467
    %5833 = vmatpush.bf16.msra.mxu0 %v3463
    %5834 = vmatpush.bf16.msra.mxu0 %v3459
    %5835 = vmatpush.bf16.msra.mxu0 %v3455
    %5836 = vmatpush.bf16.msra.mxu0 %v3451
    %5837 = vmatpush.bf16.msra.mxu0 %v3447
    %5838 = vmatpush.bf16.msra.mxu0 %v3443
    %5839 = vmatpush.bf16.msra.mxu0 %v3439
    %5840 = vmatmul.bf16.gmra.mxu0 %v206
    %v5841 = vpop.f32.mrf.mxu0
    %v5842 = vadd.f32 %v5829, %v5841
    %v5843 = vpop.f32.mrf.mxu0
    %5844 = vdwg.mxu0
    %5845 = vmatpush.bf16.msra.mxu0 %v3499
    %5846 = vmatpush.bf16.msra.mxu0 %v3495
    %5847 = vmatpush.bf16.msra.mxu0 %v3491
    %5848 = vmatpush.bf16.msra.mxu0 %v3487
    %5849 = vmatpush.bf16.msra.mxu0 %v3483
    %5850 = vmatpush.bf16.msra.mxu0 %v3479
    %5851 = vmatpush.bf16.msra.mxu0 %v3475
    %5852 = vmatpush.bf16.msra.mxu0 %v3471
    %5853 = vmatmul.bf16.gmra.mxu0 %v207
    %v5854 = vpop.f32.mrf.mxu0
    %v5855 = vadd.f32 %v5842, %v5854
    %v5856 = vpop.f32.mrf.mxu0
    %5857 = vdwg.mxu0
    %5858 = vmatpush.bf16.msra.mxu0 %v3531
    %5859 = vmatpush.bf16.msra.mxu0 %v3527
    %5860 = vmatpush.bf16.msra.mxu0 %v3523
    %5861 = vmatpush.bf16.msra.mxu0 %v3519
    %5862 = vmatpush.bf16.msra.mxu0 %v3515
    %5863 = vmatpush.bf16.msra.mxu0 %v3511
    %5864 = vmatpush.bf16.msra.mxu0 %v3507
    %5865 = vmatpush.bf16.msra.mxu0 %v3503
    %5866 = vmatmul.bf16.gmra.mxu0 %v208
    %v5867 = vpop.f32.mrf.mxu0
    %v5868 = vadd.f32 %v5855, %v5867
    %v5869 = vpop.f32.mrf.mxu0
    %5870 = vdwg.mxu0
    %5871 = vmatpush.bf16.msra.mxu0 %v3563
    %5872 = vmatpush.bf16.msra.mxu0 %v3559
    %5873 = vmatpush.bf16.msra.mxu0 %v3555
    %5874 = vmatpush.bf16.msra.mxu0 %v3551
    %5875 = vmatpush.bf16.msra.mxu0 %v3547
    %5876 = vmatpush.bf16.msra.mxu0 %v3543
    %5877 = vmatpush.bf16.msra.mxu0 %v3539
    %5878 = vmatpush.bf16.msra.mxu0 %v3535
    %5879 = vmatmul.bf16.gmra.mxu0 %v209
    %v5880 = vpop.f32.mrf.mxu0
    %v5881 = vadd.f32 %v5868, %v5880
    %v5882 = vpop.f32.mrf.mxu0
    %5883 = vdwg.mxu0
    %5884 = vmatpush.bf16.msra.mxu0 %v3595
    %5885 = vmatpush.bf16.msra.mxu0 %v3591
    %5886 = vmatpush.bf16.msra.mxu0 %v3587
    %5887 = vmatpush.bf16.msra.mxu0 %v3583
    %5888 = vmatpush.bf16.msra.mxu0 %v3579
    %5889 = vmatpush.bf16.msra.mxu0 %v3575
    %5890 = vmatpush.bf16.msra.mxu0 %v3571
    %5891 = vmatpush.bf16.msra.mxu0 %v3567
    %5892 = vmatmul.bf16.gmra.mxu0 %v210
    %v5893 = vpop.f32.mrf.mxu0
    %v5894 = vadd.f32 %v5881, %v5893
    %v5895 = vpop.f32.mrf.mxu0
    %5896 = vdwg.mxu0
    %5897 = vmatpush.bf16.msra.mxu0 %v3627
    %5898 = vmatpush.bf16.msra.mxu0 %v3623
    %5899 = vmatpush.bf16.msra.mxu0 %v3619
    %5900 = vmatpush.bf16.msra.mxu0 %v3615
    %5901 = vmatpush.bf16.msra.mxu0 %v3611
    %5902 = vmatpush.bf16.msra.mxu0 %v3607
    %5903 = vmatpush.bf16.msra.mxu0 %v3603
    %5904 = vmatpush.bf16.msra.mxu0 %v3599
    %5905 = vmatmul.bf16.gmra.mxu0 %v211
    %v5906 = vpop.f32.mrf.mxu0
    %v5907 = vadd.f32 %v5894, %v5906
    %v5908 = vpop.f32.mrf.mxu0
    %5909 = vdwg.mxu0
    %5910 = vmatpush.bf16.msra.mxu0 %v3659
    %5911 = vmatpush.bf16.msra.mxu0 %v3655
    %5912 = vmatpush.bf16.msra.mxu0 %v3651
    %5913 = vmatpush.bf16.msra.mxu0 %v3647
    %5914 = vmatpush.bf16.msra.mxu0 %v3643
    %5915 = vmatpush.bf16.msra.mxu0 %v3639
    %5916 = vmatpush.bf16.msra.mxu0 %v3635
    %5917 = vmatpush.bf16.msra.mxu0 %v3631
    %5918 = vmatmul.bf16.gmra.mxu0 %v212
    %v5919 = vpop.f32.mrf.mxu0
    %v5920 = vadd.f32 %v5907, %v5919
    %v5921 = vpop.f32.mrf.mxu0
    %5922 = vdwg.mxu0
    %5923 = vmatpush.bf16.msra.mxu0 %v3691
    %5924 = vmatpush.bf16.msra.mxu0 %v3687
    %5925 = vmatpush.bf16.msra.mxu0 %v3683
    %5926 = vmatpush.bf16.msra.mxu0 %v3679
    %5927 = vmatpush.bf16.msra.mxu0 %v3675
    %5928 = vmatpush.bf16.msra.mxu0 %v3671
    %5929 = vmatpush.bf16.msra.mxu0 %v3667
    %5930 = vmatpush.bf16.msra.mxu0 %v3663
    %5931 = vmatmul.bf16.gmra.mxu0 %v213
    %v5932 = vpop.f32.mrf.mxu0
    %v5933 = vadd.f32 %v5920, %v5932
    %v5934 = vpop.f32.mrf.mxu0
    %5935 = vdwg.mxu0
    %5936 = vmatpush.bf16.msra.mxu0 %v3723
    %5937 = vmatpush.bf16.msra.mxu0 %v3719
    %5938 = vmatpush.bf16.msra.mxu0 %v3715
    %5939 = vmatpush.bf16.msra.mxu0 %v3711
    %5940 = vmatpush.bf16.msra.mxu0 %v3707
    %5941 = vmatpush.bf16.msra.mxu0 %v3703
    %5942 = vmatpush.bf16.msra.mxu0 %v3699
    %5943 = vmatpush.bf16.msra.mxu0 %v3695
    %5944 = vmatmul.bf16.gmra.mxu0 %v214
    %v5945 = vpop.f32.mrf.mxu0
    %v5946 = vadd.f32 %v5933, %v5945
    %v5947 = vpop.f32.mrf.mxu0
    %5948 = vdwg.mxu0
    %5949 = vmatpush.bf16.msra.mxu0 %v3755
    %5950 = vmatpush.bf16.msra.mxu0 %v3751
    %5951 = vmatpush.bf16.msra.mxu0 %v3747
    %5952 = vmatpush.bf16.msra.mxu0 %v3743
    %5953 = vmatpush.bf16.msra.mxu0 %v3739
    %5954 = vmatpush.bf16.msra.mxu0 %v3735
    %5955 = vmatpush.bf16.msra.mxu0 %v3731
    %5956 = vmatpush.bf16.msra.mxu0 %v3727
    %5957 = vmatmul.bf16.gmra.mxu0 %v215
    %v5958 = vpop.f32.mrf.mxu0
    %v5959 = vadd.f32 %v5946, %v5958
    %v5960 = vpop.f32.mrf.mxu0
    %5961 = vdwg.mxu0
    %5962 = vmatpush.bf16.msra.mxu0 %v3787
    %5963 = vmatpush.bf16.msra.mxu0 %v3783
    %5964 = vmatpush.bf16.msra.mxu0 %v3779
    %5965 = vmatpush.bf16.msra.mxu0 %v3775
    %5966 = vmatpush.bf16.msra.mxu0 %v3771
    %5967 = vmatpush.bf16.msra.mxu0 %v3767
    %5968 = vmatpush.bf16.msra.mxu0 %v3763
    %5969 = vmatpush.bf16.msra.mxu0 %v3759
    %5970 = vmatmul.bf16.gmra.mxu0 %v216
    %v5971 = vpop.f32.mrf.mxu0
    %v5972 = vadd.f32 %v5959, %v5971
    %v5973 = vpop.f32.mrf.mxu0
    %5974 = vdwg.mxu0
    %5975 = vmatpush.bf16.msra.mxu0 %v3819
    %5976 = vmatpush.bf16.msra.mxu0 %v3815
    %5977 = vmatpush.bf16.msra.mxu0 %v3811
    %5978 = vmatpush.bf16.msra.mxu0 %v3807
    %5979 = vmatpush.bf16.msra.mxu0 %v3803
    %5980 = vmatpush.bf16.msra.mxu0 %v3799
    %5981 = vmatpush.bf16.msra.mxu0 %v3795
    %5982 = vmatpush.bf16.msra.mxu0 %v3791
    %5983 = vmatmul.bf16.gmra.mxu0 %v217
    %v5984 = vpop.f32.mrf.mxu0
    %v5985 = vadd.f32 %v5972, %v5984
    %v5986 = vpop.f32.mrf.mxu0
    %5987 = vdwg.mxu0
    %5988 = vmatpush.bf16.msra.mxu0 %v3851
    %5989 = vmatpush.bf16.msra.mxu0 %v3847
    %5990 = vmatpush.bf16.msra.mxu0 %v3843
    %5991 = vmatpush.bf16.msra.mxu0 %v3839
    %5992 = vmatpush.bf16.msra.mxu0 %v3835
    %5993 = vmatpush.bf16.msra.mxu0 %v3831
    %5994 = vmatpush.bf16.msra.mxu0 %v3827
    %5995 = vmatpush.bf16.msra.mxu0 %v3823
    %5996 = vmatmul.bf16.gmra.mxu0 %v218
    %v5997 = vpop.f32.mrf.mxu0
    %v5998 = vadd.f32 %v5985, %v5997
    %v5999 = vpop.f32.mrf.mxu0
    %6000 = vdwg.mxu0
    %6001 = vmatpush.bf16.msra.mxu0 %v3883
    %6002 = vmatpush.bf16.msra.mxu0 %v3879
    %6003 = vmatpush.bf16.msra.mxu0 %v3875
    %6004 = vmatpush.bf16.msra.mxu0 %v3871
    %6005 = vmatpush.bf16.msra.mxu0 %v3867
    %6006 = vmatpush.bf16.msra.mxu0 %v3863
    %6007 = vmatpush.bf16.msra.mxu0 %v3859
    %6008 = vmatpush.bf16.msra.mxu0 %v3855
    %6009 = vmatmul.bf16.gmra.mxu0 %v219
    %v6010 = vpop.f32.mrf.mxu0
    %v6011 = vadd.f32 %v5998, %v6010
    %v6012 = vpop.f32.mrf.mxu0
    %6013 = vdwg.mxu0
    %6014 = vmatpush.bf16.msra.mxu0 %v3915
    %6015 = vmatpush.bf16.msra.mxu0 %v3911
    %6016 = vmatpush.bf16.msra.mxu0 %v3907
    %6017 = vmatpush.bf16.msra.mxu0 %v3903
    %6018 = vmatpush.bf16.msra.mxu0 %v3899
    %6019 = vmatpush.bf16.msra.mxu0 %v3895
    %6020 = vmatpush.bf16.msra.mxu0 %v3891
    %6021 = vmatpush.bf16.msra.mxu0 %v3887
    %6022 = vmatmul.bf16.gmra.mxu0 %v220
    %v6023 = vpop.f32.mrf.mxu0
    %v6024 = vadd.f32 %v6011, %v6023
    %v6025 = vpop.f32.mrf.mxu0
    %6026 = vdwg.mxu0
    %6027 = vmatpush.bf16.msra.mxu0 %v3947
    %6028 = vmatpush.bf16.msra.mxu0 %v3943
    %6029 = vmatpush.bf16.msra.mxu0 %v3939
    %6030 = vmatpush.bf16.msra.mxu0 %v3935
    %6031 = vmatpush.bf16.msra.mxu0 %v3931
    %6032 = vmatpush.bf16.msra.mxu0 %v3927
    %6033 = vmatpush.bf16.msra.mxu0 %v3923
    %6034 = vmatpush.bf16.msra.mxu0 %v3919
    %6035 = vmatmul.bf16.gmra.mxu0 %v221
    %v6036 = vpop.f32.mrf.mxu0
    %v6037 = vadd.f32 %v6024, %v6036
    %v6038 = vpop.f32.mrf.mxu0
    %6039 = vdwg.mxu0
    %6040 = vmatpush.bf16.msra.mxu0 %v3979
    %6041 = vmatpush.bf16.msra.mxu0 %v3975
    %6042 = vmatpush.bf16.msra.mxu0 %v3971
    %6043 = vmatpush.bf16.msra.mxu0 %v3967
    %6044 = vmatpush.bf16.msra.mxu0 %v3963
    %6045 = vmatpush.bf16.msra.mxu0 %v3959
    %6046 = vmatpush.bf16.msra.mxu0 %v3955
    %6047 = vmatpush.bf16.msra.mxu0 %v3951
    %6048 = vmatmul.bf16.gmra.mxu0 %v222
    %v6049 = vpop.f32.mrf.mxu0
    %v6050 = vadd.f32 %v6037, %v6049
    %v6051 = vpop.f32.mrf.mxu0
    %6052 = vdwg.mxu0
    %6053 = vmatpush.bf16.msra.mxu0 %v4011
    %6054 = vmatpush.bf16.msra.mxu0 %v4007
    %6055 = vmatpush.bf16.msra.mxu0 %v4003
    %6056 = vmatpush.bf16.msra.mxu0 %v3999
    %6057 = vmatpush.bf16.msra.mxu0 %v3995
    %6058 = vmatpush.bf16.msra.mxu0 %v3991
    %6059 = vmatpush.bf16.msra.mxu0 %v3987
    %6060 = vmatpush.bf16.msra.mxu0 %v3983
    %6061 = vmatmul.bf16.gmra.mxu0 %v223
    %v6062 = vpop.f32.mrf.mxu0
    %v6063 = vadd.f32 %v6050, %v6062
    %v6064 = vpop.f32.mrf.mxu0
    %6065 = vdwg.mxu0
    %6066 = vmatpush.bf16.msra.mxu0 %v4043
    %6067 = vmatpush.bf16.msra.mxu0 %v4039
    %6068 = vmatpush.bf16.msra.mxu0 %v4035
    %6069 = vmatpush.bf16.msra.mxu0 %v4031
    %6070 = vmatpush.bf16.msra.mxu0 %v4027
    %6071 = vmatpush.bf16.msra.mxu0 %v4023
    %6072 = vmatpush.bf16.msra.mxu0 %v4019
    %6073 = vmatpush.bf16.msra.mxu0 %v4015
    %6074 = vmatmul.bf16.gmra.mxu0 %v224
    %v6075 = vpop.f32.mrf.mxu0
    %v6076 = vadd.f32 %v6063, %v6075
    %v6077 = vpop.f32.mrf.mxu0
    %6078 = vdwg.mxu0
    %6079 = vmatpush.bf16.msra.mxu0 %v4075
    %6080 = vmatpush.bf16.msra.mxu0 %v4071
    %6081 = vmatpush.bf16.msra.mxu0 %v4067
    %6082 = vmatpush.bf16.msra.mxu0 %v4063
    %6083 = vmatpush.bf16.msra.mxu0 %v4059
    %6084 = vmatpush.bf16.msra.mxu0 %v4055
    %6085 = vmatpush.bf16.msra.mxu0 %v4051
    %6086 = vmatpush.bf16.msra.mxu0 %v4047
    %6087 = vmatmul.bf16.gmra.mxu0 %v225
    %v6088 = vpop.f32.mrf.mxu0
    %v6089 = vadd.f32 %v6076, %v6088
    %v6090 = vpop.f32.mrf.mxu0
    %6091 = vdwg.mxu0
    %v6092 = vmax.f32 %v5153, 0.0
    %v6093 = vmax.f32 %v5465, 0.0
    %v6094 = vmax.f32 %v5777, 0.0
    %v6095 = vmax.f32 %v6089, 0.0
    %v6096 = vpack.c.bf16 %v6092, %v6092
    %v6097 = vpack.c.bf16 %v6093, %v6093
    %v6098 = vpack.c.bf16 %v6094, %v6094
    %v6099 = vpack.c.bf16 %v6095, %v6095
    %v6100 = vld [vmem:[#allocation8] sm:$0xf]
    %v6101 = vld [vmem:[#allocation8 + $0x4] sm:$0xf]
    %v6102 = vld [vmem:[#allocation8 + $0x8] sm:$0xf]
    %v6103 = vld [vmem:[#allocation8 + $0xc] sm:$0xf]
    %v6104 = vld [vmem:[#allocation8 + $0x10] sm:$0xf]
    %v6105 = vld [vmem:[#allocation8 + $0x14] sm:$0xf]
    %v6106 = vld [vmem:[#allocation8 + $0x18] sm:$0xf]
    %v6107 = vld [vmem:[#allocation8 + $0x1c] sm:$0xf]
    %v6108 = vld [vmem:[#allocation8 + $0x20] sm:$0xf]
    %v6109 = vld [vmem:[#allocation8 + $0x24] sm:$0xf]
    %v6110 = vld [vmem:[#allocation8 + $0x28] sm:$0xf]
    %v6111 = vld [vmem:[#allocation8 + $0x2c] sm:$0xf]
    %v6112 = vld [vmem:[#allocation8 + $0x30] sm:$0xf]
    %v6113 = vld [vmem:[#allocation8 + $0x34] sm:$0xf]
    %v6114 = vld [vmem:[#allocation8 + $0x38] sm:$0xf]
    %v6115 = vld [vmem:[#allocation8 + $0x3c] sm:$0xf]
    %v6116 = vld [vmem:[#allocation8 + $0x40] sm:$0xf]
    %v6117 = vld [vmem:[#allocation8 + $0x44] sm:$0xf]
    %v6118 = vld [vmem:[#allocation8 + $0x48] sm:$0xf]
    %v6119 = vld [vmem:[#allocation8 + $0x4c] sm:$0xf]
    %v6120 = vld [vmem:[#allocation8 + $0x50] sm:$0xf]
    %v6121 = vld [vmem:[#allocation8 + $0x54] sm:$0xf]
    %v6122 = vld [vmem:[#allocation8 + $0x58] sm:$0xf]
    %v6123 = vld [vmem:[#allocation8 + $0x5c] sm:$0xf]
    %v6124 = vld [vmem:[#allocation8 + $0x60] sm:$0xf]
    %v6125 = vld [vmem:[#allocation8 + $0x64] sm:$0xf]
    %v6126 = vld [vmem:[#allocation8 + $0x68] sm:$0xf]
    %v6127 = vld [vmem:[#allocation8 + $0x6c] sm:$0xf]
    %v6128 = vld [vmem:[#allocation8 + $0x70] sm:$0xf]
    %v6129 = vld [vmem:[#allocation8 + $0x74] sm:$0xf]
    %v6130 = vld [vmem:[#allocation8 + $0x78] sm:$0xf]
    %v6131 = vld [vmem:[#allocation8 + $0x7c] sm:$0xf]
    %v6132 = vld [vmem:[#allocation8 + $0x80] sm:$0xf]
    %v6133 = vld [vmem:[#allocation8 + $0x84] sm:$0xf]
    %v6134 = vld [vmem:[#allocation8 + $0x88] sm:$0xf]
    %v6135 = vld [vmem:[#allocation8 + $0x8c] sm:$0xf]
    %v6136 = vld [vmem:[#allocation8 + $0x90] sm:$0xf]
    %v6137 = vld [vmem:[#allocation8 + $0x94] sm:$0xf]
    %v6138 = vld [vmem:[#allocation8 + $0x98] sm:$0xf]
    %v6139 = vld [vmem:[#allocation8 + $0x9c] sm:$0xf]
    %v6140 = vld [vmem:[#allocation8 + $0xa0] sm:$0xf]
    %v6141 = vld [vmem:[#allocation8 + $0xa4] sm:$0xf]
    %v6142 = vld [vmem:[#allocation8 + $0xa8] sm:$0xf]
    %v6143 = vld [vmem:[#allocation8 + $0xac] sm:$0xf]
    %v6144 = vld [vmem:[#allocation8 + $0xb0] sm:$0xf]
    %v6145 = vld [vmem:[#allocation8 + $0xb4] sm:$0xf]
    %v6146 = vld [vmem:[#allocation8 + $0xb8] sm:$0xf]
    %v6147 = vld [vmem:[#allocation8 + $0xbc] sm:$0xf]
    %v6148 = vld [vmem:[#allocation8 + $0xc0] sm:$0xf]
    %v6149 = vld [vmem:[#allocation8 + $0xc4] sm:$0xf]
    %v6150 = vld [vmem:[#allocation8 + $0xc8] sm:$0xf]
    %v6151 = vld [vmem:[#allocation8 + $0xcc] sm:$0xf]
    %v6152 = vld [vmem:[#allocation8 + $0xd0] sm:$0xf]
    %v6153 = vld [vmem:[#allocation8 + $0xd4] sm:$0xf]
    %v6154 = vld [vmem:[#allocation8 + $0xd8] sm:$0xf]
    %v6155 = vld [vmem:[#allocation8 + $0xdc] sm:$0xf]
    %v6156 = vld [vmem:[#allocation8 + $0xe0] sm:$0xf]
    %v6157 = vld [vmem:[#allocation8 + $0xe4] sm:$0xf]
    %v6158 = vld [vmem:[#allocation8 + $0xe8] sm:$0xf]
    %v6159 = vld [vmem:[#allocation8 + $0xec] sm:$0xf]
    %v6160 = vld [vmem:[#allocation8 + $0xf0] sm:$0xf]
    %v6161 = vld [vmem:[#allocation8 + $0xf4] sm:$0xf]
    %v6162 = vld [vmem:[#allocation8 + $0xf8] sm:$0xf]
    %v6163 = vld [vmem:[#allocation8 + $0xfc] sm:$0xf]
    %v6164 = vld [vmem:[#allocation10] sm:$0x1]
    %v6166 = vperm.slane %v6164, 0
    %v6232 = vunpack.c.l.b16 %v6100
    %v6233 = vunpack.c.l.b16 %v6101
    %v6234 = vunpack.c.l.b16 %v6102
    %v6235 = vunpack.c.l.b16 %v6103
    %v6236 = vunpack.c.l.b16 %v6104
    %v6237 = vunpack.c.l.b16 %v6105
    %v6238 = vunpack.c.l.b16 %v6106
    %v6239 = vunpack.c.l.b16 %v6107
    %v6240 = vunpack.c.l.b16 %v6108
    %v6241 = vunpack.c.l.b16 %v6109
    %v6242 = vunpack.c.l.b16 %v6110
    %v6243 = vunpack.c.l.b16 %v6111
    %v6244 = vunpack.c.l.b16 %v6112
    %v6245 = vunpack.c.l.b16 %v6113
    %v6246 = vunpack.c.l.b16 %v6114
    %v6247 = vunpack.c.l.b16 %v6115
    %v6248 = vunpack.c.l.b16 %v6116
    %v6249 = vunpack.c.l.b16 %v6117
    %v6250 = vunpack.c.l.b16 %v6118
    %v6251 = vunpack.c.l.b16 %v6119
    %v6252 = vunpack.c.l.b16 %v6120
    %v6253 = vunpack.c.l.b16 %v6121
    %v6254 = vunpack.c.l.b16 %v6122
    %v6255 = vunpack.c.l.b16 %v6123
    %v6256 = vunpack.c.l.b16 %v6124
    %v6257 = vunpack.c.l.b16 %v6125
    %v6258 = vunpack.c.l.b16 %v6126
    %v6259 = vunpack.c.l.b16 %v6127
    %v6260 = vunpack.c.l.b16 %v6128
    %v6261 = vunpack.c.l.b16 %v6129
    %v6262 = vunpack.c.l.b16 %v6130
    %v6263 = vunpack.c.l.b16 %v6131
    %v6264 = vunpack.c.l.b16 %v6132
    %v6265 = vunpack.c.l.b16 %v6133
    %v6266 = vunpack.c.l.b16 %v6134
    %v6267 = vunpack.c.l.b16 %v6135
    %v6268 = vunpack.c.l.b16 %v6136
    %v6269 = vunpack.c.l.b16 %v6137
    %v6270 = vunpack.c.l.b16 %v6138
    %v6271 = vunpack.c.l.b16 %v6139
    %v6272 = vunpack.c.l.b16 %v6140
    %v6273 = vunpack.c.l.b16 %v6141
    %v6274 = vunpack.c.l.b16 %v6142
    %v6275 = vunpack.c.l.b16 %v6143
    %v6276 = vunpack.c.l.b16 %v6144
    %v6277 = vunpack.c.l.b16 %v6145
    %v6278 = vunpack.c.l.b16 %v6146
    %v6279 = vunpack.c.l.b16 %v6147
    %v6280 = vunpack.c.l.b16 %v6148
    %v6281 = vunpack.c.l.b16 %v6149
    %v6282 = vunpack.c.l.b16 %v6150
    %v6283 = vunpack.c.l.b16 %v6151
    %v6284 = vunpack.c.l.b16 %v6152
    %v6285 = vunpack.c.l.b16 %v6153
    %v6286 = vunpack.c.l.b16 %v6154
    %v6287 = vunpack.c.l.b16 %v6155
    %v6288 = vunpack.c.l.b16 %v6156
    %v6289 = vunpack.c.l.b16 %v6157
    %v6290 = vunpack.c.l.b16 %v6158
    %v6291 = vunpack.c.l.b16 %v6159
    %v6292 = vunpack.c.l.b16 %v6160
    %v6293 = vunpack.c.l.b16 %v6161
    %v6294 = vunpack.c.l.b16 %v6162
    %v6295 = vunpack.c.l.b16 %v6163
    %v6296 = vpack.c.b16 %v6233, %v6232
    %v6297 = vpack.c.b16 %v6235, %v6234
    %v6298 = vpack.c.b16 %v6237, %v6236
    %v6299 = vpack.c.b16 %v6239, %v6238
    %v6300 = vpack.c.b16 %v6241, %v6240
    %v6301 = vpack.c.b16 %v6243, %v6242
    %v6302 = vpack.c.b16 %v6245, %v6244
    %v6303 = vpack.c.b16 %v6247, %v6246
    %v6304 = vpack.c.b16 %v6249, %v6248
    %v6305 = vpack.c.b16 %v6251, %v6250
    %v6306 = vpack.c.b16 %v6253, %v6252
    %v6307 = vpack.c.b16 %v6255, %v6254
    %v6308 = vpack.c.b16 %v6257, %v6256
    %v6309 = vpack.c.b16 %v6259, %v6258
    %v6310 = vpack.c.b16 %v6261, %v6260
    %v6311 = vpack.c.b16 %v6263, %v6262
    %v6312 = vpack.c.b16 %v6265, %v6264
    %v6313 = vpack.c.b16 %v6267, %v6266
    %v6314 = vpack.c.b16 %v6269, %v6268
    %v6315 = vpack.c.b16 %v6271, %v6270
    %v6316 = vpack.c.b16 %v6273, %v6272
    %v6317 = vpack.c.b16 %v6275, %v6274
    %v6318 = vpack.c.b16 %v6277, %v6276
    %v6319 = vpack.c.b16 %v6279, %v6278
    %v6320 = vpack.c.b16 %v6281, %v6280
    %v6321 = vpack.c.b16 %v6283, %v6282
    %v6322 = vpack.c.b16 %v6285, %v6284
    %v6323 = vpack.c.b16 %v6287, %v6286
    %v6324 = vpack.c.b16 %v6289, %v6288
    %v6325 = vpack.c.b16 %v6291, %v6290
    %v6326 = vpack.c.b16 %v6293, %v6292
    %v6327 = vpack.c.b16 %v6295, %v6294
    %6360 = vmatpush.bf16.msra.mxu0 %v6303
    %6361 = vmatpush.bf16.msra.mxu0 %v6302
    %6362 = vmatpush.bf16.msra.mxu0 %v6301
    %6363 = vmatpush.bf16.msra.mxu0 %v6300
    %6364 = vmatpush.bf16.msra.mxu0 %v6299
    %6365 = vmatpush.bf16.msra.mxu0 %v6298
    %6366 = vmatpush.bf16.msra.mxu0 %v6297
    %6367 = vmatpush.bf16.msra.mxu0 %v6296
    %6368 = vmatmul.bf16.gmra.mxu0 %v6096
    %v6369 = vpop.f32.mrf.mxu0
    %v6370 = vadd.f32 %v6166, %v6369
    %v6371 = vpop.f32.mrf.mxu0
    %6372 = vdwg.mxu0
    %6373 = vmatpush.bf16.msra.mxu0 %v6311
    %6374 = vmatpush.bf16.msra.mxu0 %v6310
    %6375 = vmatpush.bf16.msra.mxu0 %v6309
    %6376 = vmatpush.bf16.msra.mxu0 %v6308
    %6377 = vmatpush.bf16.msra.mxu0 %v6307
    %6378 = vmatpush.bf16.msra.mxu0 %v6306
    %6379 = vmatpush.bf16.msra.mxu0 %v6305
    %6380 = vmatpush.bf16.msra.mxu0 %v6304
    %6381 = vmatmul.bf16.gmra.mxu0 %v6097
    %v6382 = vpop.f32.mrf.mxu0
    %v6383 = vadd.f32 %v6370, %v6382
    %v6384 = vpop.f32.mrf.mxu0
    %6385 = vdwg.mxu0
    %6386 = vmatpush.bf16.msra.mxu0 %v6319
    %6387 = vmatpush.bf16.msra.mxu0 %v6318
    %6388 = vmatpush.bf16.msra.mxu0 %v6317
    %6389 = vmatpush.bf16.msra.mxu0 %v6316
    %6390 = vmatpush.bf16.msra.mxu0 %v6315
    %6391 = vmatpush.bf16.msra.mxu0 %v6314
    %6392 = vmatpush.bf16.msra.mxu0 %v6313
    %6393 = vmatpush.bf16.msra.mxu0 %v6312
    %6394 = vmatmul.bf16.gmra.mxu0 %v6098
    %v6395 = vpop.f32.mrf.mxu0
    %v6396 = vadd.f32 %v6383, %v6395
    %v6397 = vpop.f32.mrf.mxu0
    %6398 = vdwg.mxu0
    %6399 = vmatpush.bf16.msra.mxu0 %v6327
    %6400 = vmatpush.bf16.msra.mxu0 %v6326
    %6401 = vmatpush.bf16.msra.mxu0 %v6325
    %6402 = vmatpush.bf16.msra.mxu0 %v6324
    %6403 = vmatpush.bf16.msra.mxu0 %v6323
    %6404 = vmatpush.bf16.msra.mxu0 %v6322
    %6405 = vmatpush.bf16.msra.mxu0 %v6321
    %6406 = vmatpush.bf16.msra.mxu0 %v6320
    %6407 = vmatmul.bf16.gmra.mxu0 %v6099
    %v6408 = vpop.f32.mrf.mxu0
    %v6409 = vadd.f32 %v6396, %v6408
    %v6410 = vpop.f32.mrf.mxu0
    %6411 = vdwg.mxu0
    %vm6412 = vcmask 1041408
    %v6413 = vsel %vm6412, %v6409, -inf
    %v6414 = vrot.slane %v6413, 4
    %v6415 = vmax.f32 %v6413, %v6414
    %v6416 = vrot.slane %v6415, 2
    %v6417 = vmax.f32 %v6415, %v6416
    %v6418 = vrot.slane %v6417, 1
    %v6419 = vmax.f32 %v6417, %v6418
    %v6420 = vsub.f32 %v6409, %v6419
    %v6421 = vmul.f32 %v6420, 1.442695
    %v6422 = vpow.pop %v6421
    %v6423 = vsel %vm6412, %v6422, 0.0
    %v6424 = vrot.slane %v6423, 4
    %v6425 = vadd.f32 %v6423, %v6424
    %v6426 = vrot.slane %v6425, 2
    %v6427 = vadd.f32 %v6425, %v6426
    %v6428 = vrot.slane %v6427, 1
    %v6429 = vadd.f32 %v6427, %v6428
    %v6430 = vrcp.pop %v6429
    %v6431 = vmul.f32 %v6422, %v6430
    %6432 = vst [vmem:[#allocation13] sm:$0x3] %v6431
    %v6433 = vlaneseq
    %v6434 = vand.u32 %v6433, 127
    %vm6435 = vcmp.lt.s32.totalorder %v6434, 8
    %v6436 = vsel %vm6435, %v6431, -1e+30
    %v6437 = vsel %vm6412, %v6436, -inf
    %6438 = vmax.xlane.f32.xlu0 %v6437
    %v6439 = vpop.xlane.xlu0 %6438
    %v6440 = vsub.f32 %v6431, %v6439
    %v6441 = vmul.f32 %v6440, 1.442695
    %v6442 = vpow.pop %v6441
    %v6443 = vsel %vm6435, %v6442, 0.0
    %v6444 = vsel %vm6412, %v6443, 0.0
    %6445 = vadd.xlane.f32.xlu0 %v6444
    %v6446 = vpop.xlane.xlu0 %6445
    %v6447 = vlog2.pop %v6446
    %v6448 = vmul.f32 %v6447, 0.6931472
    %v6449 = vadd.f32 %v6448, %v6439
    %v6450 = vsub.f32 %v6431, %v6449
    %v6451 = vld [vmem:[#allocation11] sm:$0x3]
    %v6452 = vmul.f32 %v6451, %v6450
    %v6453 = vsel %vm6435, %v6452, 0.0
    %v6454 = vsel %vm6412, %v6453, 0.0
    %6455 = vadd.xlane.f32.xlu0 %v6454
    %v6456 = vpop.xlane.xlu0 %6455
    %v6457 = vsub.f32 0.0, %v6456
    %v6458 = vsel %vm6412, %v6457, 0.0
    %v6459 = vrot.slane %v6458, 4
    %v6460 = vadd.f32 %v6458, %v6459
    %v6461 = vrot.slane %v6460, 2
    %v6462 = vadd.f32 %v6460, %v6461
    %v6463 = vrot.slane %v6462, 1
    %v6464 = vadd.f32 %v6462, %v6463
    %v6465 = vmul.f32 %v6464, 0.5
    %vm6466 = vcmask 0
    %6467 = vst.msk [vmem:[#allocation14] sm:$0x1] %vm6466, %v6465
    // Predicated region
    $region54: #{tpu_custom_call.1} parent=1 // pred_check
      _
    $region55: #{tpu_custom_call.1} parent=1 // pred_check_branch
      %6469 = sbr.rel (0) target = $region57
    $region56: #{tpu_custom_call.1} parent=1 // pred_region
      %6471 = vsyncadd [#allocation4], 0
      %s6473 = sshll.u32 [#allocation13], 4
      %s6474 = int_to_ptr.vmem [resolvable:$true] %s6473
      %s6475 = sshll.u32 %s7, 4
      %s6476 = int_to_ptr.hbm [resolvable:$true] %s6475
      %6478 = dma.vmem_to_hbm [thread:$0]  %s6474, 32, %s6476, [#allocation4]
    $region57: #{tpu_custom_call.1} parent=1 // pred_fallthru
      _
    // Predicated region
    $region58: #{tpu_custom_call.1} parent=1 // pred_check
      _
    $region59: #{tpu_custom_call.1} parent=1 // pred_check_branch
      %6480 = sbr.rel (0) target = $region61
    $region60: #{tpu_custom_call.1} parent=1 // pred_region
      %6482 = vsyncadd [#allocation15], 0
      %s6484 = sshll.u32 [#allocation14], 4
      %s6485 = int_to_ptr.vmem [resolvable:$true] %s6484
      %s6486 = sshll.u32 %s8, 4
      %s6487 = int_to_ptr.hbm [resolvable:$true] %s6486
      %6489 = dma.vmem_to_hbm [thread:$0]  %s6485, 16, %s6487, [#allocation15]
    $region61: #{tpu_custom_call.1} parent=1 // pred_fallthru
      _
    // Predicated region
    $region62: #{tpu_custom_call.1} parent=1 // pred_check
      _
    $region63: #{tpu_custom_call.1} parent=1 // pred_check_branch
      %6491 = sbr.rel (0) target = $region65
    $region64: #{tpu_custom_call.1} parent=1 // pred_region
      %6493 = dma.done [#allocation4], 32
    $region65: #{tpu_custom_call.1} parent=1 // pred_fallthru
      _
    // Predicated region
    $region66: #{tpu_custom_call.1} parent=1 // pred_check
      _
    $region67: #{tpu_custom_call.1} parent=1 // pred_check_branch
      %6495 = sbr.rel (0) target = $region69
    $region68: #{tpu_custom_call.1} parent=1 // pred_region
      %6497 = dma.done [#allocation15], 16
    $region69: #{tpu_custom_call.1} parent=1 // pred_fallthru
      _
    %6498 = vsyncpa [#allocation3], 1
    %6499 = vsyncpa [#allocation6], 1
    %6500 = vsyncpa [#allocation9], 1
    %6501 = vsyncpa [#allocation12], 1
    %6502 = vsyncpa [#allocation4], 1
    %6503 = vsyncpa [#allocation15], 1

</llo_original>
